<compile_context>
chip_gen: v5e
topology: v5e:2x2
jax: 0.10.0
libtpu: 0.0.40
codegen_flags: <defaults>
</compile_context>

<pallas_src>
import numpy as np
import jax
import jax.numpy as jnp
from jax import lax
from jax.experimental import pallas as pl
from jax.experimental.pallas import tpu as pltpu


# -----------------------------------------------------------------------------
# Pallas kernel: bidirectional GRU recurrence.
#
# Inputs (all whole-array VMEM resident; shapes are tiny):
#   gx{f,b}_{r,z,n} : (S, B, H) f32   precomputed x@W_ih + b_ih (+ b_hh for r,z)
#   wh{f,b}_{r,z,n} : (H, H)   f32   hidden-state weights (stored as h @ W)
#   bh{f,b}_n       : (1, H)   f32   b_hh_n (must stay inside the r* product)
# Output:
#   out             : (S, B, 2H) f32  [..., :H]=forward, [..., H:]=backward
# -----------------------------------------------------------------------------
def bigru_kernel(gxf_r_ref, gxf_z_ref, gxf_n_ref,
                 gxb_r_ref, gxb_z_ref, gxb_n_ref,
                 whf_r_ref, whf_z_ref, whf_n_ref,
                 whb_r_ref, whb_z_ref, whb_n_ref,
                 bhf_n_ref, bhb_n_ref,
                 out_ref):
    S, B, H = gxf_r_ref.shape

    # Loop-invariant hoists (feedback #4): weights loaded once into vregs,
    # b_hh_n broadcast to (B,H) once (JAX does not CSE broadcast_in_dim).
    whf_r = whf_r_ref[...]
    whf_z = whf_z_ref[...]
    whf_n = whf_n_ref[...]
    whb_r = whb_r_ref[...]
    whb_z = whb_z_ref[...]
    whb_n = whb_n_ref[...]
    bhf_n = jnp.broadcast_to(bhf_n_ref[...], (B, H))
    bhb_n = jnp.broadcast_to(bhb_n_ref[...], (B, H))

    def cell(h, gx_r, gx_z, gx_n, w_r, w_z, w_n, b_n):
        # PyTorch GRU equations (gate order r, z, n).  Only the (B,H) x (H,H)
        # hidden projections remain inside the serial dependency chain
        # (feedback #1); gate-split weights avoid sub-128-lane gate slicing
        # (feedback #3).
        # TODO(synk): when scaling up, cast the dot operands to bfloat16 here
        # (keep preferred_element_type=f32 and the h carry in f32) per the
        # review; kept f32 at these shapes for exact parity with the fp32
        # PyTorch module.
        r = jax.nn.sigmoid(gx_r + jnp.dot(h, w_r, preferred_element_type=jnp.float32))
        z = jax.nn.sigmoid(gx_z + jnp.dot(h, w_z, preferred_element_type=jnp.float32))
        n = jnp.tanh(gx_n + r * (jnp.dot(h, w_n, preferred_element_type=jnp.float32) + b_n))
        return (1.0 - z) * n + z * h

    def body(t, carry):
        h_f, h_b = carry

        # Forward direction, time t.
        h_f = cell(h_f, gxf_r_ref[t], gxf_z_ref[t], gxf_n_ref[t],
                   whf_r, whf_z, whf_n, bhf_n)
        out_ref[t, :, 0:H] = h_f.astype(out_ref.dtype)

        # Backward direction, time S-1-t (independent chain; interleaving the
        # two directions lets their MXU/VPU/EUP ops overlap in the unrolled
        # body.  TODO(synk): on v7x the two directions could instead be split
        # across the two TensorCores via a size-2 "parallel" grid axis).
        tb = S - 1 - t
        h_b = cell(h_b, gxb_r_ref[tb], gxb_z_ref[tb], gxb_n_ref[tb],
                   whb_r, whb_z, whb_n, bhb_n)
        out_ref[tb, :, H:2 * H] = h_b.astype(out_ref.dtype)

        return (h_f, h_b)

    h0 = jnp.zeros((B, H), jnp.float32)
    # Fully unrolled straight-line recurrence (feedback #2): S is small/static.
    lax.fori_loop(0, S, body, (h0, h0), unroll=True)


# -----------------------------------------------------------------------------
# Wrappers
# -----------------------------------------------------------------------------
def _bigru_core(input_ids, params):
    """Embedding + hoisted input projections (XLA) + Pallas recurrence.

    Returns the GRU output time-major: (S, B, 2H).
    """
    x = params["embedding"][input_ids].astype(jnp.float32)     # (B, S, E)
    B, S, _ = x.shape
    H = params["w_hh_f_r"].shape[0]

    def inproj(d):
        # One batched (B*S, E) x (E, H) matmul per gate over ALL timesteps
        # (feedback #1); the einsum emits the time-major (S, B, H) layout the
        # kernel consumes, so the big (B,S,E) tensor never reaches the kernel
        # and no separate transpose pass is needed (feedback #9).
        def proj(g):
            return jnp.einsum("bse,eh->sbh", x, params[f"w_ih_{d}_{g}"])
        gx_r = proj("r") + params[f"b_ih_{d}_r"] + params[f"b_hh_{d}_r"]
        gx_z = proj("z") + params[f"b_ih_{d}_z"] + params[f"b_hh_{d}_z"]
        gx_n = proj("n") + params[f"b_ih_{d}_n"]   # b_hh_n stays in-kernel
        return gx_r, gx_z, gx_n

    gxf = inproj("f")
    gxb = inproj("b")

    vmem = pl.BlockSpec(memory_space=pltpu.MemorySpace.VMEM)
    h_sb = pl.pallas_call(
        bigru_kernel,
        out_shape=jax.ShapeDtypeStruct((S, B, 2 * H), jnp.float32),
        in_specs=[vmem] * 14,
        out_specs=vmem,
        # TODO(synk): at scaled-up (B, S) add a batch grid with BlockSpec
        # tiling (sized for v7x's 64 MiB VMEM) and raise vmem_limit_bytes via
        # pltpu.CompilerParams; at these toy shapes everything fits VMEM on
        # v5e/v6e/v7x with the default scoped limit.
    )(*gxf, *gxb,
      params["w_hh_f_r"], params["w_hh_f_z"], params["w_hh_f_n"],
      params["w_hh_b_r"], params["w_hh_b_z"], params["w_hh_b_n"],
      params["b_hh_f_n"], params["b_hh_b_n"])
    return h_sb                                                 # (S, B, 2H)


def bigru_forward(input_ids, params):
    """Equivalent of BiGRU.forward: (B, S) ids -> (B, S, 2H) GRU outputs."""
    h_sb = _bigru_core(input_ids, params)
    return jnp.transpose(h_sb, (1, 0, 2))                       # (B, S, 2H)


def bigrufc_forward(input_ids, params):
    """Equivalent of BiGRUFC.forward with haslabel=False.

    The fc consumes the kernel's time-major output directly; the batch-first
    permute is folded into the contraction instead of a standalone transpose.
    """
    h_sb = _bigru_core(input_ids, params)                       # (S, B, 2H)
    logits = jnp.einsum("sbh,hl->bsl", h_sb, params["w_fc"]) + params["b_fc"]
    # Mirror the module exactly: softmax / argmax over dim=1.
    # TODO(synk): the haslabel=True branch (cross-entropy loss) is training
    # glue requiring labels and is omitted; both nn.Dropout modules are
    # constructed but never applied in forward(), so they are omitted too.
    return {
        "raw_logits": logits,
        "logits": jax.nn.softmax(logits, axis=1),
        "prediction": jnp.argmax(logits, axis=1),
    }


# -----------------------------------------------------------------------------
# Pure-JAX reference (python loop, independent of the kernel) for correctness.
# -----------------------------------------------------------------------------
def bigru_reference(input_ids, params):
    x = params["embedding"][input_ids].astype(jnp.float32)      # (B, S, E)
    B, S, _ = x.shape
    H = params["w_hh_f_r"].shape[0]

    def run(d, reverse):
        w_ir, w_iz, w_in = (params[f"w_ih_{d}_{g}"] for g in ("r", "z", "n"))
        w_hr, w_hz, w_hn = (params[f"w_hh_{d}_{g}"] for g in ("r", "z", "n"))
        b_ir, b_iz, b_in = (params[f"b_ih_{d}_{g}"] for g in ("r", "z", "n"))
        b_hr, b_hz, b_hn = (params[f"b_hh_{d}_{g}"] for g in ("r", "z", "n"))
        h = jnp.zeros((B, H), jnp.float32)
        outs = [None] * S
        order = range(S - 1, -1, -1) if reverse else range(S)
        for t in order:
            x_t = x[:, t, :]
            r = jax.nn.sigmoid(x_t @ w_ir + b_ir + h @ w_hr + b_hr)
            z = jax.nn.sigmoid(x_t @ w_iz + b_iz + h @ w_hz + b_hz)
            n = jnp.tanh(x_t @ w_in + b_in + r * (h @ w_hn + b_hn))
            h = (1.0 - z) * n + z * h
            outs[t] = h
        return jnp.stack(outs, axis=1)                           # (B, S, H)

    hf = run("f", False)
    hb = run("b", True)
    return jnp.concatenate([hf, hb], axis=-1)                    # (B, S, 2H)


# -----------------------------------------------------------------------------
# Deterministic synthetic parameters (pickle-loaded pretrained embedding is
# replaced with random values; shapes match nn.GRU / nn.Linear weights, stored
# transposed and gate-split: gate order r, z, n).
# -----------------------------------------------------------------------------
def make_params(key, vocab, embed_size, hidden, num_labels):
    keys = iter(jax.random.split(key, 32))

    def u(shape, scale):
        return jax.random.uniform(next(keys), shape, jnp.float32, -scale, scale)

    params = {
        "embedding": jax.random.normal(next(keys), (vocab, embed_size),
                                       jnp.float32) * 0.1,
    }
    k = 1.0 / np.sqrt(hidden)
    for d in ("f", "b"):
        for g in ("r", "z", "n"):
            params[f"w_ih_{d}_{g}"] = u((embed_size, hidden), k)
            params[f"w_hh_{d}_{g}"] = u((hidden, hidden), k)
            params[f"b_ih_{d}_{g}"] = u((1, hidden), k)
            params[f"b_hh_{d}_{g}"] = u((1, hidden), k)
    kf = 1.0 / np.sqrt(2 * hidden)
    params["w_fc"] = u((2 * hidden, num_labels), kf)
    params["b_fc"] = u((num_labels,), kf)
    return params, next(keys)


if __name__ == "__main__":
    VOCAB = 50
    EMBED = 300        # module hard-codes embed_size = 300
    HIDDEN = 32        # small test hidden size (module default is 100)
    BATCH = 2
    SEQ = 8
    NUM_LABELS = 2

    key = jax.random.PRNGKey(0)
    params, key_ids = make_params(key, VOCAB, EMBED, HIDDEN, NUM_LABELS)
    input_ids = jax.random.randint(key_ids, (BATCH, SEQ), 0, VOCAB,
                                   dtype=jnp.int32)

    # GRU outputs (BiGRU.forward equivalent).
    out_h = jax.block_until_ready(jax.jit(bigru_forward)(input_ids, params))
    assert out_h.shape == (BATCH, SEQ, 2 * HIDDEN), out_h.shape

    ref_h = jax.block_until_ready(jax.jit(bigru_reference)(input_ids, params))
    np.testing.assert_allclose(np.asarray(out_h), np.asarray(ref_h),
                               rtol=2e-5, atol=2e-5)

    # Full BiGRUFC.forward (haslabel=False path).
    outs = jax.block_until_ready(jax.jit(bigrufc_forward)(input_ids, params))
    ref_logits = jnp.einsum("bsh,hl->bsl", ref_h, params["w_fc"]) + params["b_fc"]
    np.testing.assert_allclose(np.asarray(outs["raw_logits"]),
                               np.asarray(ref_logits), rtol=2e-5, atol=2e-5)
    assert outs["logits"].shape == (BATCH, SEQ, NUM_LABELS)
    assert outs["prediction"].shape == (BATCH, NUM_LABELS)   # argmax over dim=1

    print("KERNEL_OK")
</pallas_src>

<mosaic_0001>
module attributes {stable_mosaic.version = 11 : i64} {
  func.func @bigru_kernel(%arg0: memref<8x2x32xf32, #tpu.memory_space<vmem>>, %arg1: memref<8x2x32xf32, #tpu.memory_space<vmem>>, %arg2: memref<8x2x32xf32, #tpu.memory_space<vmem>>, %arg3: memref<8x2x32xf32, #tpu.memory_space<vmem>>, %arg4: memref<8x2x32xf32, #tpu.memory_space<vmem>>, %arg5: memref<8x2x32xf32, #tpu.memory_space<vmem>>, %arg6: memref<32x32xf32, #tpu.memory_space<vmem>>, %arg7: memref<32x32xf32, #tpu.memory_space<vmem>>, %arg8: memref<32x32xf32, #tpu.memory_space<vmem>>, %arg9: memref<32x32xf32, #tpu.memory_space<vmem>>, %arg10: memref<32x32xf32, #tpu.memory_space<vmem>>, %arg11: memref<32x32xf32, #tpu.memory_space<vmem>>, %arg12: memref<1x32xf32, #tpu.memory_space<vmem>>, %arg13: memref<1x32xf32, #tpu.memory_space<vmem>>, %arg14: memref<8x2x64xf32, #tpu.memory_space<vmem>>) attributes {dimension_semantics = [], scalar_prefetch = 0 : i64, scratch_operands = 0 : i64, tpu.core_type = #tpu.core_type<tc>} {
    %c0 = arith.constant 0 : index
    %c0_0 = arith.constant 0 : index
    %0 = vector.load %arg6[%c0, %c0_0] : memref<32x32xf32, #tpu.memory_space<vmem>>, vector<32x32xf32>
    %c0_1 = arith.constant 0 : index
    %c0_2 = arith.constant 0 : index
    %1 = vector.load %arg7[%c0_1, %c0_2] : memref<32x32xf32, #tpu.memory_space<vmem>>, vector<32x32xf32>
    %c0_3 = arith.constant 0 : index
    %c0_4 = arith.constant 0 : index
    %2 = vector.load %arg8[%c0_3, %c0_4] : memref<32x32xf32, #tpu.memory_space<vmem>>, vector<32x32xf32>
    %c0_5 = arith.constant 0 : index
    %c0_6 = arith.constant 0 : index
    %3 = vector.load %arg9[%c0_5, %c0_6] : memref<32x32xf32, #tpu.memory_space<vmem>>, vector<32x32xf32>
    %c0_7 = arith.constant 0 : index
    %c0_8 = arith.constant 0 : index
    %4 = vector.load %arg10[%c0_7, %c0_8] : memref<32x32xf32, #tpu.memory_space<vmem>>, vector<32x32xf32>
    %c0_9 = arith.constant 0 : index
    %c0_10 = arith.constant 0 : index
    %5 = vector.load %arg11[%c0_9, %c0_10] : memref<32x32xf32, #tpu.memory_space<vmem>>, vector<32x32xf32>
    %c0_11 = arith.constant 0 : index
    %c0_12 = arith.constant 0 : index
    %6 = vector.load %arg12[%c0_11, %c0_12] : memref<1x32xf32, #tpu.memory_space<vmem>>, vector<1x32xf32>
    %7 = vector.shape_cast %6 : vector<1x32xf32> to vector<1x32xf32>
    %8 = vector.broadcast %7 : vector<1x32xf32> to vector<2x32xf32>
    %c0_13 = arith.constant 0 : index
    %c0_14 = arith.constant 0 : index
    %9 = vector.load %arg13[%c0_13, %c0_14] : memref<1x32xf32, #tpu.memory_space<vmem>>, vector<1x32xf32>
    %10 = vector.shape_cast %9 : vector<1x32xf32> to vector<1x32xf32>
    %11 = vector.broadcast %10 : vector<1x32xf32> to vector<2x32xf32>
    %cst = arith.constant 0.000000e+00 : f32
    %12 = vector.broadcast %cst : f32 to vector<2x32xf32>
    %c0_i32 = arith.constant 0 : i32
    %13 = arith.index_cast %c0_i32 : i32 to index
    %c0_15 = arith.constant 0 : index
    %c0_16 = arith.constant 0 : index
    %14 = vector.load %arg0[%13, %c0_15, %c0_16] : memref<8x2x32xf32, #tpu.memory_space<vmem>>, vector<1x2x32xf32>
    %15 = vector.shape_cast %14 : vector<1x2x32xf32> to vector<2x32xf32>
    %16 = arith.index_cast %c0_i32 : i32 to index
    %c0_17 = arith.constant 0 : index
    %c0_18 = arith.constant 0 : index
    %17 = vector.load %arg1[%16, %c0_17, %c0_18] : memref<8x2x32xf32, #tpu.memory_space<vmem>>, vector<1x2x32xf32>
    %18 = vector.shape_cast %17 : vector<1x2x32xf32> to vector<2x32xf32>
    %19 = arith.index_cast %c0_i32 : i32 to index
    %c0_19 = arith.constant 0 : index
    %c0_20 = arith.constant 0 : index
    %20 = vector.load %arg2[%19, %c0_19, %c0_20] : memref<8x2x32xf32, #tpu.memory_space<vmem>>, vector<1x2x32xf32>
    %21 = vector.shape_cast %20 : vector<1x2x32xf32> to vector<2x32xf32>
    %cst_21 = arith.constant dense<0.000000e+00> : vector<2x32xf32>
    %22 = tpu.matmul %12, %0, %cst_21 {dimension_numbers = #tpu.dot_dimension_numbers<[1], [0], [0], [1], [0, 0, 1, 1], [], []>} : vector<2x32xf32>, vector<32x32xf32>, vector<2x32xf32> -> vector<2x32xf32>
    %23 = arith.addf %15, %22 : vector<2x32xf32>
    %24 = arith.negf %23 : vector<2x32xf32>
    %25 = math.exp %24 : vector<2x32xf32>
    %cst_22 = arith.constant 1.000000e+00 : f32
    %26 = vector.broadcast %cst_22 : f32 to vector<2x32xf32>
    %27 = arith.addf %26, %25 : vector<2x32xf32>
    %28 = arith.divf %26, %27 : vector<2x32xf32>
    %cst_23 = arith.constant dense<0.000000e+00> : vector<2x32xf32>
    %29 = tpu.matmul %12, %1, %cst_23 {dimension_numbers = #tpu.dot_dimension_numbers<[1], [0], [0], [1], [0, 0, 1, 1], [], []>} : vector<2x32xf32>, vector<32x32xf32>, vector<2x32xf32> -> vector<2x32xf32>
    %30 = arith.addf %18, %29 : vector<2x32xf32>
    %31 = arith.negf %30 : vector<2x32xf32>
    %32 = math.exp %31 : vector<2x32xf32>
    %cst_24 = arith.constant 1.000000e+00 : f32
    %33 = vector.broadcast %cst_24 : f32 to vector<2x32xf32>
    %34 = arith.addf %33, %32 : vector<2x32xf32>
    %35 = arith.divf %33, %34 : vector<2x32xf32>
    %cst_25 = arith.constant dense<0.000000e+00> : vector<2x32xf32>
    %36 = tpu.matmul %12, %2, %cst_25 {dimension_numbers = #tpu.dot_dimension_numbers<[1], [0], [0], [1], [0, 0, 1, 1], [], []>} : vector<2x32xf32>, vector<32x32xf32>, vector<2x32xf32> -> vector<2x32xf32>
    %37 = arith.addf %36, %8 : vector<2x32xf32>
    %38 = arith.mulf %28, %37 : vector<2x32xf32>
    %39 = arith.addf %21, %38 : vector<2x32xf32>
    %40 = math.tanh %39 : vector<2x32xf32>
    %cst_26 = arith.constant 1.000000e+00 : f32
    %41 = vector.broadcast %cst_26 : f32 to vector<2x32xf32>
    %42 = arith.subf %41, %35 : vector<2x32xf32>
    %43 = arith.mulf %42, %40 : vector<2x32xf32>
    %44 = arith.mulf %35, %12 : vector<2x32xf32>
    %45 = arith.addf %43, %44 : vector<2x32xf32>
    %46 = arith.index_cast %c0_i32 : i32 to index
    %c0_27 = arith.constant 0 : index
    %c0_28 = arith.constant 0 : index
    %47 = vector.load %arg14[%46, %c0_27, %c0_28] : memref<8x2x64xf32, #tpu.memory_space<vmem>>, vector<1x2x32xf32>
    %48 = vector.shape_cast %47 : vector<1x2x32xf32> to vector<2x32xf32>
    %49 = vector.shape_cast %45 : vector<2x32xf32> to vector<1x2x32xf32>
    tpu.vector_store %arg14[%46, %c0_27, %c0_28], %49 {strides = array<i32>} : memref<8x2x64xf32, #tpu.memory_space<vmem>>, vector<1x2x32xf32>,
    %c7_i32 = arith.constant 7 : i32
    %50 = arith.subi %c7_i32, %c0_i32 : i32
    %51 = arith.index_cast %50 : i32 to index
    %c0_29 = arith.constant 0 : index
    %c0_30 = arith.constant 0 : index
    %52 = vector.load %arg3[%51, %c0_29, %c0_30] : memref<8x2x32xf32, #tpu.memory_space<vmem>>, vector<1x2x32xf32>
    %53 = vector.shape_cast %52 : vector<1x2x32xf32> to vector<2x32xf32>
    %54 = arith.index_cast %50 : i32 to index
    %c0_31 = arith.constant 0 : index
    %c0_32 = arith.constant 0 : index
    %55 = vector.load %arg4[%54, %c0_31, %c0_32] : memref<8x2x32xf32, #tpu.memory_space<vmem>>, vector<1x2x32xf32>
    %56 = vector.shape_cast %55 : vector<1x2x32xf32> to vector<2x32xf32>
    %57 = arith.index_cast %50 : i32 to index
    %c0_33 = arith.constant 0 : index
    %c0_34 = arith.constant 0 : index
    %58 = vector.load %arg5[%57, %c0_33, %c0_34] : memref<8x2x32xf32, #tpu.memory_space<vmem>>, vector<1x2x32xf32>
    %59 = vector.shape_cast %58 : vector<1x2x32xf32> to vector<2x32xf32>
    %cst_35 = arith.constant dense<0.000000e+00> : vector<2x32xf32>
    %60 = tpu.matmul %12, %3, %cst_35 {dimension_numbers = #tpu.dot_dimension_numbers<[1], [0], [0], [1], [0, 0, 1, 1], [], []>} : vector<2x32xf32>, vector<32x32xf32>, vector<2x32xf32> -> vector<2x32xf32>
    %61 = arith.addf %53, %60 : vector<2x32xf32>
    %62 = arith.negf %61 : vector<2x32xf32>
    %63 = math.exp %62 : vector<2x32xf32>
    %cst_36 = arith.constant 1.000000e+00 : f32
    %64 = vector.broadcast %cst_36 : f32 to vector<2x32xf32>
    %65 = arith.addf %64, %63 : vector<2x32xf32>
    %66 = arith.divf %64, %65 : vector<2x32xf32>
    %cst_37 = arith.constant dense<0.000000e+00> : vector<2x32xf32>
    %67 = tpu.matmul %12, %4, %cst_37 {dimension_numbers = #tpu.dot_dimension_numbers<[1], [0], [0], [1], [0, 0, 1, 1], [], []>} : vector<2x32xf32>, vector<32x32xf32>, vector<2x32xf32> -> vector<2x32xf32>
    %68 = arith.addf %56, %67 : vector<2x32xf32>
    %69 = arith.negf %68 : vector<2x32xf32>
    %70 = math.exp %69 : vector<2x32xf32>
    %cst_38 = arith.constant 1.000000e+00 : f32
    %71 = vector.broadcast %cst_38 : f32 to vector<2x32xf32>
    %72 = arith.addf %71, %70 : vector<2x32xf32>
    %73 = arith.divf %71, %72 : vector<2x32xf32>
    %cst_39 = arith.constant dense<0.000000e+00> : vector<2x32xf32>
    %74 = tpu.matmul %12, %5, %cst_39 {dimension_numbers = #tpu.dot_dimension_numbers<[1], [0], [0], [1], [0, 0, 1, 1], [], []>} : vector<2x32xf32>, vector<32x32xf32>, vector<2x32xf32> -> vector<2x32xf32>
    %75 = arith.addf %74, %11 : vector<2x32xf32>
    %76 = arith.mulf %66, %75 : vector<2x32xf32>
    %77 = arith.addf %59, %76 : vector<2x32xf32>
    %78 = math.tanh %77 : vector<2x32xf32>
    %cst_40 = arith.constant 1.000000e+00 : f32
    %79 = vector.broadcast %cst_40 : f32 to vector<2x32xf32>
    %80 = arith.subf %79, %73 : vector<2x32xf32>
    %81 = arith.mulf %80, %78 : vector<2x32xf32>
    %82 = arith.mulf %73, %12 : vector<2x32xf32>
    %83 = arith.addf %81, %82 : vector<2x32xf32>
    %84 = arith.index_cast %50 : i32 to index
    %c0_41 = arith.constant 0 : index
    %c32 = arith.constant 32 : index
    %85 = vector.load %arg14[%84, %c0_41, %c32] : memref<8x2x64xf32, #tpu.memory_space<vmem>>, vector<1x2x32xf32>
    %86 = vector.shape_cast %85 : vector<1x2x32xf32> to vector<2x32xf32>
    %87 = vector.shape_cast %83 : vector<2x32xf32> to vector<1x2x32xf32>
    tpu.vector_store %arg14[%84, %c0_41, %c32], %87 {strides = array<i32>} : memref<8x2x64xf32, #tpu.memory_space<vmem>>, vector<1x2x32xf32>,
    %c1_i32 = arith.constant 1 : i32
    %88 = arith.index_cast %c1_i32 : i32 to index
    %c0_42 = arith.constant 0 : index
    %c0_43 = arith.constant 0 : index
    %89 = vector.load %arg0[%88, %c0_42, %c0_43] : memref<8x2x32xf32, #tpu.memory_space<vmem>>, vector<1x2x32xf32>
    %90 = vector.shape_cast %89 : vector<1x2x32xf32> to vector<2x32xf32>
    %91 = arith.index_cast %c1_i32 : i32 to index
    %c0_44 = arith.constant 0 : index
    %c0_45 = arith.constant 0 : index
    %92 = vector.load %arg1[%91, %c0_44, %c0_45] : memref<8x2x32xf32, #tpu.memory_space<vmem>>, vector<1x2x32xf32>
    %93 = vector.shape_cast %92 : vector<1x2x32xf32> to vector<2x32xf32>
    %94 = arith.index_cast %c1_i32 : i32 to index
    %c0_46 = arith.constant 0 : index
    %c0_47 = arith.constant 0 : index
    %95 = vector.load %arg2[%94, %c0_46, %c0_47] : memref<8x2x32xf32, #tpu.memory_space<vmem>>, vector<1x2x32xf32>
    %96 = vector.shape_cast %95 : vector<1x2x32xf32> to vector<2x32xf32>
    %cst_48 = arith.constant dense<0.000000e+00> : vector<2x32xf32>
    %97 = tpu.matmul %45, %0, %cst_48 {dimension_numbers = #tpu.dot_dimension_numbers<[1], [0], [0], [1], [0, 0, 1, 1], [], []>} : vector<2x32xf32>, vector<32x32xf32>, vector<2x32xf32> -> vector<2x32xf32>
    %98 = arith.addf %90, %97 : vector<2x32xf32>
    %99 = arith.negf %98 : vector<2x32xf32>
    %100 = math.exp %99 : vector<2x32xf32>
    %cst_49 = arith.constant 1.000000e+00 : f32
    %101 = vector.broadcast %cst_49 : f32 to vector<2x32xf32>
    %102 = arith.addf %101, %100 : vector<2x32xf32>
    %103 = arith.divf %101, %102 : vector<2x32xf32>
    %cst_50 = arith.constant dense<0.000000e+00> : vector<2x32xf32>
    %104 = tpu.matmul %45, %1, %cst_50 {dimension_numbers = #tpu.dot_dimension_numbers<[1], [0], [0], [1], [0, 0, 1, 1], [], []>} : vector<2x32xf32>, vector<32x32xf32>, vector<2x32xf32> -> vector<2x32xf32>
    %105 = arith.addf %93, %104 : vector<2x32xf32>
    %106 = arith.negf %105 : vector<2x32xf32>
    %107 = math.exp %106 : vector<2x32xf32>
    %cst_51 = arith.constant 1.000000e+00 : f32
    %108 = vector.broadcast %cst_51 : f32 to vector<2x32xf32>
    %109 = arith.addf %108, %107 : vector<2x32xf32>
    %110 = arith.divf %108, %109 : vector<2x32xf32>
    %cst_52 = arith.constant dense<0.000000e+00> : vector<2x32xf32>
    %111 = tpu.matmul %45, %2, %cst_52 {dimension_numbers = #tpu.dot_dimension_numbers<[1], [0], [0], [1], [0, 0, 1, 1], [], []>} : vector<2x32xf32>, vector<32x32xf32>, vector<2x32xf32> -> vector<2x32xf32>
    %112 = arith.addf %111, %8 : vector<2x32xf32>
    %113 = arith.mulf %103, %112 : vector<2x32xf32>
    %114 = arith.addf %96, %113 : vector<2x32xf32>
    %115 = math.tanh %114 : vector<2x32xf32>
    %cst_53 = arith.constant 1.000000e+00 : f32
    %116 = vector.broadcast %cst_53 : f32 to vector<2x32xf32>
    %117 = arith.subf %116, %110 : vector<2x32xf32>
    %118 = arith.mulf %117, %115 : vector<2x32xf32>
    %119 = arith.mulf %110, %45 : vector<2x32xf32>
    %120 = arith.addf %118, %119 : vector<2x32xf32>
    %121 = arith.index_cast %c1_i32 : i32 to index
    %c0_54 = arith.constant 0 : index
    %c0_55 = arith.constant 0 : index
    %122 = vector.load %arg14[%121, %c0_54, %c0_55] : memref<8x2x64xf32, #tpu.memory_space<vmem>>, vector<1x2x32xf32>
    %123 = vector.shape_cast %122 : vector<1x2x32xf32> to vector<2x32xf32>
    %124 = vector.shape_cast %120 : vector<2x32xf32> to vector<1x2x32xf32>
    tpu.vector_store %arg14[%121, %c0_54, %c0_55], %124 {strides = array<i32>} : memref<8x2x64xf32, #tpu.memory_space<vmem>>, vector<1x2x32xf32>,
    %c7_i32_56 = arith.constant 7 : i32
    %125 = arith.subi %c7_i32_56, %c1_i32 : i32
    %126 = arith.index_cast %125 : i32 to index
    %c0_57 = arith.constant 0 : index
    %c0_58 = arith.constant 0 : index
    %127 = vector.load %arg3[%126, %c0_57, %c0_58] : memref<8x2x32xf32, #tpu.memory_space<vmem>>, vector<1x2x32xf32>
    %128 = vector.shape_cast %127 : vector<1x2x32xf32> to vector<2x32xf32>
    %129 = arith.index_cast %125 : i32 to index
    %c0_59 = arith.constant 0 : index
    %c0_60 = arith.constant 0 : index
    %130 = vector.load %arg4[%129, %c0_59, %c0_60] : memref<8x2x32xf32, #tpu.memory_space<vmem>>, vector<1x2x32xf32>
    %131 = vector.shape_cast %130 : vector<1x2x32xf32> to vector<2x32xf32>
    %132 = arith.index_cast %125 : i32 to index
    %c0_61 = arith.constant 0 : index
    %c0_62 = arith.constant 0 : index
    %133 = vector.load %arg5[%132, %c0_61, %c0_62] : memref<8x2x32xf32, #tpu.memory_space<vmem>>, vector<1x2x32xf32>
    %134 = vector.shape_cast %133 : vector<1x2x32xf32> to vector<2x32xf32>
    %cst_63 = arith.constant dense<0.000000e+00> : vector<2x32xf32>
    %135 = tpu.matmul %83, %3, %cst_63 {dimension_numbers = #tpu.dot_dimension_numbers<[1], [0], [0], [1], [0, 0, 1, 1], [], []>} : vector<2x32xf32>, vector<32x32xf32>, vector<2x32xf32> -> vector<2x32xf32>
    %136 = arith.addf %128, %135 : vector<2x32xf32>
    %137 = arith.negf %136 : vector<2x32xf32>
    %138 = math.exp %137 : vector<2x32xf32>
    %cst_64 = arith.constant 1.000000e+00 : f32
    %139 = vector.broadcast %cst_64 : f32 to vector<2x32xf32>
    %140 = arith.addf %139, %138 : vector<2x32xf32>
    %141 = arith.divf %139, %140 : vector<2x32xf32>
    %cst_65 = arith.constant dense<0.000000e+00> : vector<2x32xf32>
    %142 = tpu.matmul %83, %4, %cst_65 {dimension_numbers = #tpu.dot_dimension_numbers<[1], [0], [0], [1], [0, 0, 1, 1], [], []>} : vector<2x32xf32>, vector<32x32xf32>, vector<2x32xf32> -> vector<2x32xf32>
    %143 = arith.addf %131, %142 : vector<2x32xf32>
    %144 = arith.negf %143 : vector<2x32xf32>
    %145 = math.exp %144 : vector<2x32xf32>
    %cst_66 = arith.constant 1.000000e+00 : f32
    %146 = vector.broadcast %cst_66 : f32 to vector<2x32xf32>
    %147 = arith.addf %146, %145 : vector<2x32xf32>
    %148 = arith.divf %146, %147 : vector<2x32xf32>
    %cst_67 = arith.constant dense<0.000000e+00> : vector<2x32xf32>
    %149 = tpu.matmul %83, %5, %cst_67 {dimension_numbers = #tpu.dot_dimension_numbers<[1], [0], [0], [1], [0, 0, 1, 1], [], []>} : vector<2x32xf32>, vector<32x32xf32>, vector<2x32xf32> -> vector<2x32xf32>
    %150 = arith.addf %149, %11 : vector<2x32xf32>
    %151 = arith.mulf %141, %150 : vector<2x32xf32>
    %152 = arith.addf %134, %151 : vector<2x32xf32>
    %153 = math.tanh %152 : vector<2x32xf32>
    %cst_68 = arith.constant 1.000000e+00 : f32
    %154 = vector.broadcast %cst_68 : f32 to vector<2x32xf32>
    %155 = arith.subf %154, %148 : vector<2x32xf32>
    %156 = arith.mulf %155, %153 : vector<2x32xf32>
    %157 = arith.mulf %148, %83 : vector<2x32xf32>
    %158 = arith.addf %156, %157 : vector<2x32xf32>
    %159 = arith.index_cast %125 : i32 to index
    %c0_69 = arith.constant 0 : index
    %c32_70 = arith.constant 32 : index
    %160 = vector.load %arg14[%159, %c0_69, %c32_70] : memref<8x2x64xf32, #tpu.memory_space<vmem>>, vector<1x2x32xf32>
    %161 = vector.shape_cast %160 : vector<1x2x32xf32> to vector<2x32xf32>
    %162 = vector.shape_cast %158 : vector<2x32xf32> to vector<1x2x32xf32>
    tpu.vector_store %arg14[%159, %c0_69, %c32_70], %162 {strides = array<i32>} : memref<8x2x64xf32, #tpu.memory_space<vmem>>, vector<1x2x32xf32>,
    %c2_i32 = arith.constant 2 : i32
    %163 = arith.index_cast %c2_i32 : i32 to index
    %c0_71 = arith.constant 0 : index
    %c0_72 = arith.constant 0 : index
    %164 = vector.load %arg0[%163, %c0_71, %c0_72] : memref<8x2x32xf32, #tpu.memory_space<vmem>>, vector<1x2x32xf32>
    %165 = vector.shape_cast %164 : vector<1x2x32xf32> to vector<2x32xf32>
    %166 = arith.index_cast %c2_i32 : i32 to index
    %c0_73 = arith.constant 0 : index
    %c0_74 = arith.constant 0 : index
    %167 = vector.load %arg1[%166, %c0_73, %c0_74] : memref<8x2x32xf32, #tpu.memory_space<vmem>>, vector<1x2x32xf32>
    %168 = vector.shape_cast %167 : vector<1x2x32xf32> to vector<2x32xf32>
    %169 = arith.index_cast %c2_i32 : i32 to index
    %c0_75 = arith.constant 0 : index
    %c0_76 = arith.constant 0 : index
    %170 = vector.load %arg2[%169, %c0_75, %c0_76] : memref<8x2x32xf32, #tpu.memory_space<vmem>>, vector<1x2x32xf32>
    %171 = vector.shape_cast %170 : vector<1x2x32xf32> to vector<2x32xf32>
    %cst_77 = arith.constant dense<0.000000e+00> : vector<2x32xf32>
    %172 = tpu.matmul %120, %0, %cst_77 {dimension_numbers = #tpu.dot_dimension_numbers<[1], [0], [0], [1], [0, 0, 1, 1], [], []>} : vector<2x32xf32>, vector<32x32xf32>, vector<2x32xf32> -> vector<2x32xf32>
    %173 = arith.addf %165, %172 : vector<2x32xf32>
    %174 = arith.negf %173 : vector<2x32xf32>
    %175 = math.exp %174 : vector<2x32xf32>
    %cst_78 = arith.constant 1.000000e+00 : f32
    %176 = vector.broadcast %cst_78 : f32 to vector<2x32xf32>
    %177 = arith.addf %176, %175 : vector<2x32xf32>
    %178 = arith.divf %176, %177 : vector<2x32xf32>
    %cst_79 = arith.constant dense<0.000000e+00> : vector<2x32xf32>
    %179 = tpu.matmul %120, %1, %cst_79 {dimension_numbers = #tpu.dot_dimension_numbers<[1], [0], [0], [1], [0, 0, 1, 1], [], []>} : vector<2x32xf32>, vector<32x32xf32>, vector<2x32xf32> -> vector<2x32xf32>
    %180 = arith.addf %168, %179 : vector<2x32xf32>
    %181 = arith.negf %180 : vector<2x32xf32>
    %182 = math.exp %181 : vector<2x32xf32>
    %cst_80 = arith.constant 1.000000e+00 : f32
    %183 = vector.broadcast %cst_80 : f32 to vector<2x32xf32>
    %184 = arith.addf %183, %182 : vector<2x32xf32>
    %185 = arith.divf %183, %184 : vector<2x32xf32>
    %cst_81 = arith.constant dense<0.000000e+00> : vector<2x32xf32>
    %186 = tpu.matmul %120, %2, %cst_81 {dimension_numbers = #tpu.dot_dimension_numbers<[1], [0], [0], [1], [0, 0, 1, 1], [], []>} : vector<2x32xf32>, vector<32x32xf32>, vector<2x32xf32> -> vector<2x32xf32>
    %187 = arith.addf %186, %8 : vector<2x32xf32>
    %188 = arith.mulf %178, %187 : vector<2x32xf32>
    %189 = arith.addf %171, %188 : vector<2x32xf32>
    %190 = math.tanh %189 : vector<2x32xf32>
    %cst_82 = arith.constant 1.000000e+00 : f32
    %191 = vector.broadcast %cst_82 : f32 to vector<2x32xf32>
    %192 = arith.subf %191, %185 : vector<2x32xf32>
    %193 = arith.mulf %192, %190 : vector<2x32xf32>
    %194 = arith.mulf %185, %120 : vector<2x32xf32>
    %195 = arith.addf %193, %194 : vector<2x32xf32>
    %196 = arith.index_cast %c2_i32 : i32 to index
    %c0_83 = arith.constant 0 : index
    %c0_84 = arith.constant 0 : index
    %197 = vector.load %arg14[%196, %c0_83, %c0_84] : memref<8x2x64xf32, #tpu.memory_space<vmem>>, vector<1x2x32xf32>
    %198 = vector.shape_cast %197 : vector<1x2x32xf32> to vector<2x32xf32>
    %199 = vector.shape_cast %195 : vector<2x32xf32> to vector<1x2x32xf32>
    tpu.vector_store %arg14[%196, %c0_83, %c0_84], %199 {strides = array<i32>} : memref<8x2x64xf32, #tpu.memory_space<vmem>>, vector<1x2x32xf32>,
    %c7_i32_85 = arith.constant 7 : i32
    %200 = arith.subi %c7_i32_85, %c2_i32 : i32
    %201 = arith.index_cast %200 : i32 to index
    %c0_86 = arith.constant 0 : index
    %c0_87 = arith.constant 0 : index
    %202 = vector.load %arg3[%201, %c0_86, %c0_87] : memref<8x2x32xf32, #tpu.memory_space<vmem>>, vector<1x2x32xf32>
    %203 = vector.shape_cast %202 : vector<1x2x32xf32> to vector<2x32xf32>
    %204 = arith.index_cast %200 : i32 to index
    %c0_88 = arith.constant 0 : index
    %c0_89 = arith.constant 0 : index
    %205 = vector.load %arg4[%204, %c0_88, %c0_89] : memref<8x2x32xf32, #tpu.memory_space<vmem>>, vector<1x2x32xf32>
    %206 = vector.shape_cast %205 : vector<1x2x32xf32> to vector<2x32xf32>
    %207 = arith.index_cast %200 : i32 to index
    %c0_90 = arith.constant 0 : index
    %c0_91 = arith.constant 0 : index
    %208 = vector.load %arg5[%207, %c0_90, %c0_91] : memref<8x2x32xf32, #tpu.memory_space<vmem>>, vector<1x2x32xf32>
    %209 = vector.shape_cast %208 : vector<1x2x32xf32> to vector<2x32xf32>
    %cst_92 = arith.constant dense<0.000000e+00> : vector<2x32xf32>
    %210 = tpu.matmul %158, %3, %cst_92 {dimension_numbers = #tpu.dot_dimension_numbers<[1], [0], [0], [1], [0, 0, 1, 1], [], []>} : vector<2x32xf32>, vector<32x32xf32>, vector<2x32xf32> -> vector<2x32xf32>
    %211 = arith.addf %203, %210 : vector<2x32xf32>
    %212 = arith.negf %211 : vector<2x32xf32>
    %213 = math.exp %212 : vector<2x32xf32>
    %cst_93 = arith.constant 1.000000e+00 : f32
    %214 = vector.broadcast %cst_93 : f32 to vector<2x32xf32>
    %215 = arith.addf %214, %213 : vector<2x32xf32>
    %216 = arith.divf %214, %215 : vector<2x32xf32>
    %cst_94 = arith.constant dense<0.000000e+00> : vector<2x32xf32>
    %217 = tpu.matmul %158, %4, %cst_94 {dimension_numbers = #tpu.dot_dimension_numbers<[1], [0], [0], [1], [0, 0, 1, 1], [], []>} : vector<2x32xf32>, vector<32x32xf32>, vector<2x32xf32> -> vector<2x32xf32>
    %218 = arith.addf %206, %217 : vector<2x32xf32>
    %219 = arith.negf %218 : vector<2x32xf32>
    %220 = math.exp %219 : vector<2x32xf32>
    %cst_95 = arith.constant 1.000000e+00 : f32
    %221 = vector.broadcast %cst_95 : f32 to vector<2x32xf32>
    %222 = arith.addf %221, %220 : vector<2x32xf32>
    %223 = arith.divf %221, %222 : vector<2x32xf32>
    %cst_96 = arith.constant dense<0.000000e+00> : vector<2x32xf32>
    %224 = tpu.matmul %158, %5, %cst_96 {dimension_numbers = #tpu.dot_dimension_numbers<[1], [0], [0], [1], [0, 0, 1, 1], [], []>} : vector<2x32xf32>, vector<32x32xf32>, vector<2x32xf32> -> vector<2x32xf32>
    %225 = arith.addf %224, %11 : vector<2x32xf32>
    %226 = arith.mulf %216, %225 : vector<2x32xf32>
    %227 = arith.addf %209, %226 : vector<2x32xf32>
    %228 = math.tanh %227 : vector<2x32xf32>
    %cst_97 = arith.constant 1.000000e+00 : f32
    %229 = vector.broadcast %cst_97 : f32 to vector<2x32xf32>
    %230 = arith.subf %229, %223 : vector<2x32xf32>
    %231 = arith.mulf %230, %228 : vector<2x32xf32>
    %232 = arith.mulf %223, %158 : vector<2x32xf32>
    %233 = arith.addf %231, %232 : vector<2x32xf32>
    %234 = arith.index_cast %200 : i32 to index
    %c0_98 = arith.constant 0 : index
    %c32_99 = arith.constant 32 : index
    %235 = vector.load %arg14[%234, %c0_98, %c32_99] : memref<8x2x64xf32, #tpu.memory_space<vmem>>, vector<1x2x32xf32>
    %236 = vector.shape_cast %235 : vector<1x2x32xf32> to vector<2x32xf32>
    %237 = vector.shape_cast %233 : vector<2x32xf32> to vector<1x2x32xf32>
    tpu.vector_store %arg14[%234, %c0_98, %c32_99], %237 {strides = array<i32>} : memref<8x2x64xf32, #tpu.memory_space<vmem>>, vector<1x2x32xf32>,
    %c3_i32 = arith.constant 3 : i32
    %238 = arith.index_cast %c3_i32 : i32 to index
    %c0_100 = arith.constant 0 : index
    %c0_101 = arith.constant 0 : index
    %239 = vector.load %arg0[%238, %c0_100, %c0_101] : memref<8x2x32xf32, #tpu.memory_space<vmem>>, vector<1x2x32xf32>
    %240 = vector.shape_cast %239 : vector<1x2x32xf32> to vector<2x32xf32>
    %241 = arith.index_cast %c3_i32 : i32 to index
    %c0_102 = arith.constant 0 : index
    %c0_103 = arith.constant 0 : index
    %242 = vector.load %arg1[%241, %c0_102, %c0_103] : memref<8x2x32xf32, #tpu.memory_space<vmem>>, vector<1x2x32xf32>
    %243 = vector.shape_cast %242 : vector<1x2x32xf32> to vector<2x32xf32>
    %244 = arith.index_cast %c3_i32 : i32 to index
    %c0_104 = arith.constant 0 : index
    %c0_105 = arith.constant 0 : index
    %245 = vector.load %arg2[%244, %c0_104, %c0_105] : memref<8x2x32xf32, #tpu.memory_space<vmem>>, vector<1x2x32xf32>
    %246 = vector.shape_cast %245 : vector<1x2x32xf32> to vector<2x32xf32>
    %cst_106 = arith.constant dense<0.000000e+00> : vector<2x32xf32>
    %247 = tpu.matmul %195, %0, %cst_106 {dimension_numbers = #tpu.dot_dimension_numbers<[1], [0], [0], [1], [0, 0, 1, 1], [], []>} : vector<2x32xf32>, vector<32x32xf32>, vector<2x32xf32> -> vector<2x32xf32>
    %248 = arith.addf %240, %247 : vector<2x32xf32>
    %249 = arith.negf %248 : vector<2x32xf32>
    %250 = math.exp %249 : vector<2x32xf32>
    %cst_107 = arith.constant 1.000000e+00 : f32
    %251 = vector.broadcast %cst_107 : f32 to vector<2x32xf32>
    %252 = arith.addf %251, %250 : vector<2x32xf32>
    %253 = arith.divf %251, %252 : vector<2x32xf32>
    %cst_108 = arith.constant dense<0.000000e+00> : vector<2x32xf32>
    %254 = tpu.matmul %195, %1, %cst_108 {dimension_numbers = #tpu.dot_dimension_numbers<[1], [0], [0], [1], [0, 0, 1, 1], [], []>} : vector<2x32xf32>, vector<32x32xf32>, vector<2x32xf32> -> vector<2x32xf32>
    %255 = arith.addf %243, %254 : vector<2x32xf32>
    %256 = arith.negf %255 : vector<2x32xf32>
    %257 = math.exp %256 : vector<2x32xf32>
    %cst_109 = arith.constant 1.000000e+00 : f32
    %258 = vector.broadcast %cst_109 : f32 to vector<2x32xf32>
    %259 = arith.addf %258, %257 : vector<2x32xf32>
    %260 = arith.divf %258, %259 : vector<2x32xf32>
    %cst_110 = arith.constant dense<0.000000e+00> : vector<2x32xf32>
    %261 = tpu.matmul %195, %2, %cst_110 {dimension_numbers = #tpu.dot_dimension_numbers<[1], [0], [0], [1], [0, 0, 1, 1], [], []>} : vector<2x32xf32>, vector<32x32xf32>, vector<2x32xf32> -> vector<2x32xf32>
    %262 = arith.addf %261, %8 : vector<2x32xf32>
    %263 = arith.mulf %253, %262 : vector<2x32xf32>
    %264 = arith.addf %246, %263 : vector<2x32xf32>
    %265 = math.tanh %264 : vector<2x32xf32>
    %cst_111 = arith.constant 1.000000e+00 : f32
    %266 = vector.broadcast %cst_111 : f32 to vector<2x32xf32>
    %267 = arith.subf %266, %260 : vector<2x32xf32>
    %268 = arith.mulf %267, %265 : vector<2x32xf32>
    %269 = arith.mulf %260, %195 : vector<2x32xf32>
    %270 = arith.addf %268, %269 : vector<2x32xf32>
    %271 = arith.index_cast %c3_i32 : i32 to index
    %c0_112 = arith.constant 0 : index
    %c0_113 = arith.constant 0 : index
    %272 = vector.load %arg14[%271, %c0_112, %c0_113] : memref<8x2x64xf32, #tpu.memory_space<vmem>>, vector<1x2x32xf32>
    %273 = vector.shape_cast %272 : vector<1x2x32xf32> to vector<2x32xf32>
    %274 = vector.shape_cast %270 : vector<2x32xf32> to vector<1x2x32xf32>
    tpu.vector_store %arg14[%271, %c0_112, %c0_113], %274 {strides = array<i32>} : memref<8x2x64xf32, #tpu.memory_space<vmem>>, vector<1x2x32xf32>,
    %c7_i32_114 = arith.constant 7 : i32
    %275 = arith.subi %c7_i32_114, %c3_i32 : i32
    %276 = arith.index_cast %275 : i32 to index
    %c0_115 = arith.constant 0 : index
    %c0_116 = arith.constant 0 : index
    %277 = vector.load %arg3[%276, %c0_115, %c0_116] : memref<8x2x32xf32, #tpu.memory_space<vmem>>, vector<1x2x32xf32>
    %278 = vector.shape_cast %277 : vector<1x2x32xf32> to vector<2x32xf32>
    %279 = arith.index_cast %275 : i32 to index
    %c0_117 = arith.constant 0 : index
    %c0_118 = arith.constant 0 : index
    %280 = vector.load %arg4[%279, %c0_117, %c0_118] : memref<8x2x32xf32, #tpu.memory_space<vmem>>, vector<1x2x32xf32>
    %281 = vector.shape_cast %280 : vector<1x2x32xf32> to vector<2x32xf32>
    %282 = arith.index_cast %275 : i32 to index
    %c0_119 = arith.constant 0 : index
    %c0_120 = arith.constant 0 : index
    %283 = vector.load %arg5[%282, %c0_119, %c0_120] : memref<8x2x32xf32, #tpu.memory_space<vmem>>, vector<1x2x32xf32>
    %284 = vector.shape_cast %283 : vector<1x2x32xf32> to vector<2x32xf32>
    %cst_121 = arith.constant dense<0.000000e+00> : vector<2x32xf32>
    %285 = tpu.matmul %233, %3, %cst_121 {dimension_numbers = #tpu.dot_dimension_numbers<[1], [0], [0], [1], [0, 0, 1, 1], [], []>} : vector<2x32xf32>, vector<32x32xf32>, vector<2x32xf32> -> vector<2x32xf32>
    %286 = arith.addf %278, %285 : vector<2x32xf32>
    %287 = arith.negf %286 : vector<2x32xf32>
    %288 = math.exp %287 : vector<2x32xf32>
    %cst_122 = arith.constant 1.000000e+00 : f32
    %289 = vector.broadcast %cst_122 : f32 to vector<2x32xf32>
    %290 = arith.addf %289, %288 : vector<2x32xf32>
    %291 = arith.divf %289, %290 : vector<2x32xf32>
    %cst_123 = arith.constant dense<0.000000e+00> : vector<2x32xf32>
    %292 = tpu.matmul %233, %4, %cst_123 {dimension_numbers = #tpu.dot_dimension_numbers<[1], [0], [0], [1], [0, 0, 1, 1], [], []>} : vector<2x32xf32>, vector<32x32xf32>, vector<2x32xf32> -> vector<2x32xf32>
    %293 = arith.addf %281, %292 : vector<2x32xf32>
    %294 = arith.negf %293 : vector<2x32xf32>
    %295 = math.exp %294 : vector<2x32xf32>
    %cst_124 = arith.constant 1.000000e+00 : f32
    %296 = vector.broadcast %cst_124 : f32 to vector<2x32xf32>
    %297 = arith.addf %296, %295 : vector<2x32xf32>
    %298 = arith.divf %296, %297 : vector<2x32xf32>
    %cst_125 = arith.constant dense<0.000000e+00> : vector<2x32xf32>
    %299 = tpu.matmul %233, %5, %cst_125 {dimension_numbers = #tpu.dot_dimension_numbers<[1], [0], [0], [1], [0, 0, 1, 1], [], []>} : vector<2x32xf32>, vector<32x32xf32>, vector<2x32xf32> -> vector<2x32xf32>
    %300 = arith.addf %299, %11 : vector<2x32xf32>
    %301 = arith.mulf %291, %300 : vector<2x32xf32>
    %302 = arith.addf %284, %301 : vector<2x32xf32>
    %303 = math.tanh %302 : vector<2x32xf32>
    %cst_126 = arith.constant 1.000000e+00 : f32
    %304 = vector.broadcast %cst_126 : f32 to vector<2x32xf32>
    %305 = arith.subf %304, %298 : vector<2x32xf32>
    %306 = arith.mulf %305, %303 : vector<2x32xf32>
    %307 = arith.mulf %298, %233 : vector<2x32xf32>
    %308 = arith.addf %306, %307 : vector<2x32xf32>
    %309 = arith.index_cast %275 : i32 to index
    %c0_127 = arith.constant 0 : index
    %c32_128 = arith.constant 32 : index
    %310 = vector.load %arg14[%309, %c0_127, %c32_128] : memref<8x2x64xf32, #tpu.memory_space<vmem>>, vector<1x2x32xf32>
    %311 = vector.shape_cast %310 : vector<1x2x32xf32> to vector<2x32xf32>
    %312 = vector.shape_cast %308 : vector<2x32xf32> to vector<1x2x32xf32>
    tpu.vector_store %arg14[%309, %c0_127, %c32_128], %312 {strides = array<i32>} : memref<8x2x64xf32, #tpu.memory_space<vmem>>, vector<1x2x32xf32>,
    %c4_i32 = arith.constant 4 : i32
    %313 = arith.index_cast %c4_i32 : i32 to index
    %c0_129 = arith.constant 0 : index
    %c0_130 = arith.constant 0 : index
    %314 = vector.load %arg0[%313, %c0_129, %c0_130] : memref<8x2x32xf32, #tpu.memory_space<vmem>>, vector<1x2x32xf32>
    %315 = vector.shape_cast %314 : vector<1x2x32xf32> to vector<2x32xf32>
    %316 = arith.index_cast %c4_i32 : i32 to index
    %c0_131 = arith.constant 0 : index
    %c0_132 = arith.constant 0 : index
    %317 = vector.load %arg1[%316, %c0_131, %c0_132] : memref<8x2x32xf32, #tpu.memory_space<vmem>>, vector<1x2x32xf32>
    %318 = vector.shape_cast %317 : vector<1x2x32xf32> to vector<2x32xf32>
    %319 = arith.index_cast %c4_i32 : i32 to index
    %c0_133 = arith.constant 0 : index
    %c0_134 = arith.constant 0 : index
    %320 = vector.load %arg2[%319, %c0_133, %c0_134] : memref<8x2x32xf32, #tpu.memory_space<vmem>>, vector<1x2x32xf32>
    %321 = vector.shape_cast %320 : vector<1x2x32xf32> to vector<2x32xf32>
    %cst_135 = arith.constant dense<0.000000e+00> : vector<2x32xf32>
    %322 = tpu.matmul %270, %0, %cst_135 {dimension_numbers = #tpu.dot_dimension_numbers<[1], [0], [0], [1], [0, 0, 1, 1], [], []>} : vector<2x32xf32>, vector<32x32xf32>, vector<2x32xf32> -> vector<2x32xf32>
    %323 = arith.addf %315, %322 : vector<2x32xf32>
    %324 = arith.negf %323 : vector<2x32xf32>
    %325 = math.exp %324 : vector<2x32xf32>
    %cst_136 = arith.constant 1.000000e+00 : f32
    %326 = vector.broadcast %cst_136 : f32 to vector<2x32xf32>
    %327 = arith.addf %326, %325 : vector<2x32xf32>
    %328 = arith.divf %326, %327 : vector<2x32xf32>
    %cst_137 = arith.constant dense<0.000000e+00> : vector<2x32xf32>
    %329 = tpu.matmul %270, %1, %cst_137 {dimension_numbers = #tpu.dot_dimension_numbers<[1], [0], [0], [1], [0, 0, 1, 1], [], []>} : vector<2x32xf32>, vector<32x32xf32>, vector<2x32xf32> -> vector<2x32xf32>
    %330 = arith.addf %318, %329 : vector<2x32xf32>
    %331 = arith.negf %330 : vector<2x32xf32>
    %332 = math.exp %331 : vector<2x32xf32>
    %cst_138 = arith.constant 1.000000e+00 : f32
    %333 = vector.broadcast %cst_138 : f32 to vector<2x32xf32>
    %334 = arith.addf %333, %332 : vector<2x32xf32>
    %335 = arith.divf %333, %334 : vector<2x32xf32>
    %cst_139 = arith.constant dense<0.000000e+00> : vector<2x32xf32>
    %336 = tpu.matmul %270, %2, %cst_139 {dimension_numbers = #tpu.dot_dimension_numbers<[1], [0], [0], [1], [0, 0, 1, 1], [], []>} : vector<2x32xf32>, vector<32x32xf32>, vector<2x32xf32> -> vector<2x32xf32>
    %337 = arith.addf %336, %8 : vector<2x32xf32>
    %338 = arith.mulf %328, %337 : vector<2x32xf32>
    %339 = arith.addf %321, %338 : vector<2x32xf32>
    %340 = math.tanh %339 : vector<2x32xf32>
    %cst_140 = arith.constant 1.000000e+00 : f32
    %341 = vector.broadcast %cst_140 : f32 to vector<2x32xf32>
    %342 = arith.subf %341, %335 : vector<2x32xf32>
    %343 = arith.mulf %342, %340 : vector<2x32xf32>
    %344 = arith.mulf %335, %270 : vector<2x32xf32>
    %345 = arith.addf %343, %344 : vector<2x32xf32>
    %346 = arith.index_cast %c4_i32 : i32 to index
    %c0_141 = arith.constant 0 : index
    %c0_142 = arith.constant 0 : index
    %347 = vector.load %arg14[%346, %c0_141, %c0_142] : memref<8x2x64xf32, #tpu.memory_space<vmem>>, vector<1x2x32xf32>
    %348 = vector.shape_cast %347 : vector<1x2x32xf32> to vector<2x32xf32>
    %349 = vector.shape_cast %345 : vector<2x32xf32> to vector<1x2x32xf32>
    tpu.vector_store %arg14[%346, %c0_141, %c0_142], %349 {strides = array<i32>} : memref<8x2x64xf32, #tpu.memory_space<vmem>>, vector<1x2x32xf32>,
    %c7_i32_143 = arith.constant 7 : i32
    %350 = arith.subi %c7_i32_143, %c4_i32 : i32
    %351 = arith.index_cast %350 : i32 to index
    %c0_144 = arith.constant 0 : index
    %c0_145 = arith.constant 0 : index
    %352 = vector.load %arg3[%351, %c0_144, %c0_145] : memref<8x2x32xf32, #tpu.memory_space<vmem>>, vector<1x2x32xf32>
    %353 = vector.shape_cast %352 : vector<1x2x32xf32> to vector<2x32xf32>
    %354 = arith.index_cast %350 : i32 to index
    %c0_146 = arith.constant 0 : index
    %c0_147 = arith.constant 0 : index
    %355 = vector.load %arg4[%354, %c0_146, %c0_147] : memref<8x2x32xf32, #tpu.memory_space<vmem>>, vector<1x2x32xf32>
    %356 = vector.shape_cast %355 : vector<1x2x32xf32> to vector<2x32xf32>
    %357 = arith.index_cast %350 : i32 to index
    %c0_148 = arith.constant 0 : index
    %c0_149 = arith.constant 0 : index
    %358 = vector.load %arg5[%357, %c0_148, %c0_149] : memref<8x2x32xf32, #tpu.memory_space<vmem>>, vector<1x2x32xf32>
    %359 = vector.shape_cast %358 : vector<1x2x32xf32> to vector<2x32xf32>
    %cst_150 = arith.constant dense<0.000000e+00> : vector<2x32xf32>
    %360 = tpu.matmul %308, %3, %cst_150 {dimension_numbers = #tpu.dot_dimension_numbers<[1], [0], [0], [1], [0, 0, 1, 1], [], []>} : vector<2x32xf32>, vector<32x32xf32>, vector<2x32xf32> -> vector<2x32xf32>
    %361 = arith.addf %353, %360 : vector<2x32xf32>
    %362 = arith.negf %361 : vector<2x32xf32>
    %363 = math.exp %362 : vector<2x32xf32>
    %cst_151 = arith.constant 1.000000e+00 : f32
    %364 = vector.broadcast %cst_151 : f32 to vector<2x32xf32>
    %365 = arith.addf %364, %363 : vector<2x32xf32>
    %366 = arith.divf %364, %365 : vector<2x32xf32>
    %cst_152 = arith.constant dense<0.000000e+00> : vector<2x32xf32>
    %367 = tpu.matmul %308, %4, %cst_152 {dimension_numbers = #tpu.dot_dimension_numbers<[1], [0], [0], [1], [0, 0, 1, 1], [], []>} : vector<2x32xf32>, vector<32x32xf32>, vector<2x32xf32> -> vector<2x32xf32>
    %368 = arith.addf %356, %367 : vector<2x32xf32>
    %369 = arith.negf %368 : vector<2x32xf32>
    %370 = math.exp %369 : vector<2x32xf32>
    %cst_153 = arith.constant 1.000000e+00 : f32
    %371 = vector.broadcast %cst_153 : f32 to vector<2x32xf32>
    %372 = arith.addf %371, %370 : vector<2x32xf32>
    %373 = arith.divf %371, %372 : vector<2x32xf32>
    %cst_154 = arith.constant dense<0.000000e+00> : vector<2x32xf32>
    %374 = tpu.matmul %308, %5, %cst_154 {dimension_numbers = #tpu.dot_dimension_numbers<[1], [0], [0], [1], [0, 0, 1, 1], [], []>} : vector<2x32xf32>, vector<32x32xf32>, vector<2x32xf32> -> vector<2x32xf32>
    %375 = arith.addf %374, %11 : vector<2x32xf32>
    %376 = arith.mulf %366, %375 : vector<2x32xf32>
    %377 = arith.addf %359, %376 : vector<2x32xf32>
    %378 = math.tanh %377 : vector<2x32xf32>
    %cst_155 = arith.constant 1.000000e+00 : f32
    %379 = vector.broadcast %cst_155 : f32 to vector<2x32xf32>
    %380 = arith.subf %379, %373 : vector<2x32xf32>
    %381 = arith.mulf %380, %378 : vector<2x32xf32>
    %382 = arith.mulf %373, %308 : vector<2x32xf32>
    %383 = arith.addf %381, %382 : vector<2x32xf32>
    %384 = arith.index_cast %350 : i32 to index
    %c0_156 = arith.constant 0 : index
    %c32_157 = arith.constant 32 : index
    %385 = vector.load %arg14[%384, %c0_156, %c32_157] : memref<8x2x64xf32, #tpu.memory_space<vmem>>, vector<1x2x32xf32>
    %386 = vector.shape_cast %385 : vector<1x2x32xf32> to vector<2x32xf32>
    %387 = vector.shape_cast %383 : vector<2x32xf32> to vector<1x2x32xf32>
    tpu.vector_store %arg14[%384, %c0_156, %c32_157], %387 {strides = array<i32>} : memref<8x2x64xf32, #tpu.memory_space<vmem>>, vector<1x2x32xf32>,
    %c5_i32 = arith.constant 5 : i32
    %388 = arith.index_cast %c5_i32 : i32 to index
    %c0_158 = arith.constant 0 : index
    %c0_159 = arith.constant 0 : index
    %389 = vector.load %arg0[%388, %c0_158, %c0_159] : memref<8x2x32xf32, #tpu.memory_space<vmem>>, vector<1x2x32xf32>
    %390 = vector.shape_cast %389 : vector<1x2x32xf32> to vector<2x32xf32>
    %391 = arith.index_cast %c5_i32 : i32 to index
    %c0_160 = arith.constant 0 : index
    %c0_161 = arith.constant 0 : index
    %392 = vector.load %arg1[%391, %c0_160, %c0_161] : memref<8x2x32xf32, #tpu.memory_space<vmem>>, vector<1x2x32xf32>
    %393 = vector.shape_cast %392 : vector<1x2x32xf32> to vector<2x32xf32>
    %394 = arith.index_cast %c5_i32 : i32 to index
    %c0_162 = arith.constant 0 : index
    %c0_163 = arith.constant 0 : index
    %395 = vector.load %arg2[%394, %c0_162, %c0_163] : memref<8x2x32xf32, #tpu.memory_space<vmem>>, vector<1x2x32xf32>
    %396 = vector.shape_cast %395 : vector<1x2x32xf32> to vector<2x32xf32>
    %cst_164 = arith.constant dense<0.000000e+00> : vector<2x32xf32>
    %397 = tpu.matmul %345, %0, %cst_164 {dimension_numbers = #tpu.dot_dimension_numbers<[1], [0], [0], [1], [0, 0, 1, 1], [], []>} : vector<2x32xf32>, vector<32x32xf32>, vector<2x32xf32> -> vector<2x32xf32>
    %398 = arith.addf %390, %397 : vector<2x32xf32>
    %399 = arith.negf %398 : vector<2x32xf32>
    %400 = math.exp %399 : vector<2x32xf32>
    %cst_165 = arith.constant 1.000000e+00 : f32
    %401 = vector.broadcast %cst_165 : f32 to vector<2x32xf32>
    %402 = arith.addf %401, %400 : vector<2x32xf32>
    %403 = arith.divf %401, %402 : vector<2x32xf32>
    %cst_166 = arith.constant dense<0.000000e+00> : vector<2x32xf32>
    %404 = tpu.matmul %345, %1, %cst_166 {dimension_numbers = #tpu.dot_dimension_numbers<[1], [0], [0], [1], [0, 0, 1, 1], [], []>} : vector<2x32xf32>, vector<32x32xf32>, vector<2x32xf32> -> vector<2x32xf32>
    %405 = arith.addf %393, %404 : vector<2x32xf32>
    %406 = arith.negf %405 : vector<2x32xf32>
    %407 = math.exp %406 : vector<2x32xf32>
    %cst_167 = arith.constant 1.000000e+00 : f32
    %408 = vector.broadcast %cst_167 : f32 to vector<2x32xf32>
    %409 = arith.addf %408, %407 : vector<2x32xf32>
    %410 = arith.divf %408, %409 : vector<2x32xf32>
    %cst_168 = arith.constant dense<0.000000e+00> : vector<2x32xf32>
    %411 = tpu.matmul %345, %2, %cst_168 {dimension_numbers = #tpu.dot_dimension_numbers<[1], [0], [0], [1], [0, 0, 1, 1], [], []>} : vector<2x32xf32>, vector<32x32xf32>, vector<2x32xf32> -> vector<2x32xf32>
    %412 = arith.addf %411, %8 : vector<2x32xf32>
    %413 = arith.mulf %403, %412 : vector<2x32xf32>
    %414 = arith.addf %396, %413 : vector<2x32xf32>
    %415 = math.tanh %414 : vector<2x32xf32>
    %cst_169 = arith.constant 1.000000e+00 : f32
    %416 = vector.broadcast %cst_169 : f32 to vector<2x32xf32>
    %417 = arith.subf %416, %410 : vector<2x32xf32>
    %418 = arith.mulf %417, %415 : vector<2x32xf32>
    %419 = arith.mulf %410, %345 : vector<2x32xf32>
    %420 = arith.addf %418, %419 : vector<2x32xf32>
    %421 = arith.index_cast %c5_i32 : i32 to index
    %c0_170 = arith.constant 0 : index
    %c0_171 = arith.constant 0 : index
    %422 = vector.load %arg14[%421, %c0_170, %c0_171] : memref<8x2x64xf32, #tpu.memory_space<vmem>>, vector<1x2x32xf32>
    %423 = vector.shape_cast %422 : vector<1x2x32xf32> to vector<2x32xf32>
    %424 = vector.shape_cast %420 : vector<2x32xf32> to vector<1x2x32xf32>
    tpu.vector_store %arg14[%421, %c0_170, %c0_171], %424 {strides = array<i32>} : memref<8x2x64xf32, #tpu.memory_space<vmem>>, vector<1x2x32xf32>,
    %c7_i32_172 = arith.constant 7 : i32
    %425 = arith.subi %c7_i32_172, %c5_i32 : i32
    %426 = arith.index_cast %425 : i32 to index
    %c0_173 = arith.constant 0 : index
    %c0_174 = arith.constant 0 : index
    %427 = vector.load %arg3[%426, %c0_173, %c0_174] : memref<8x2x32xf32, #tpu.memory_space<vmem>>, vector<1x2x32xf32>
    %428 = vector.shape_cast %427 : vector<1x2x32xf32> to vector<2x32xf32>
    %429 = arith.index_cast %425 : i32 to index
    %c0_175 = arith.constant 0 : index
    %c0_176 = arith.constant 0 : index
    %430 = vector.load %arg4[%429, %c0_175, %c0_176] : memref<8x2x32xf32, #tpu.memory_space<vmem>>, vector<1x2x32xf32>
    %431 = vector.shape_cast %430 : vector<1x2x32xf32> to vector<2x32xf32>
    %432 = arith.index_cast %425 : i32 to index
    %c0_177 = arith.constant 0 : index
    %c0_178 = arith.constant 0 : index
    %433 = vector.load %arg5[%432, %c0_177, %c0_178] : memref<8x2x32xf32, #tpu.memory_space<vmem>>, vector<1x2x32xf32>
    %434 = vector.shape_cast %433 : vector<1x2x32xf32> to vector<2x32xf32>
    %cst_179 = arith.constant dense<0.000000e+00> : vector<2x32xf32>
    %435 = tpu.matmul %383, %3, %cst_179 {dimension_numbers = #tpu.dot_dimension_numbers<[1], [0], [0], [1], [0, 0, 1, 1], [], []>} : vector<2x32xf32>, vector<32x32xf32>, vector<2x32xf32> -> vector<2x32xf32>
    %436 = arith.addf %428, %435 : vector<2x32xf32>
    %437 = arith.negf %436 : vector<2x32xf32>
    %438 = math.exp %437 : vector<2x32xf32>
    %cst_180 = arith.constant 1.000000e+00 : f32
    %439 = vector.broadcast %cst_180 : f32 to vector<2x32xf32>
    %440 = arith.addf %439, %438 : vector<2x32xf32>
    %441 = arith.divf %439, %440 : vector<2x32xf32>
    %cst_181 = arith.constant dense<0.000000e+00> : vector<2x32xf32>
    %442 = tpu.matmul %383, %4, %cst_181 {dimension_numbers = #tpu.dot_dimension_numbers<[1], [0], [0], [1], [0, 0, 1, 1], [], []>} : vector<2x32xf32>, vector<32x32xf32>, vector<2x32xf32> -> vector<2x32xf32>
    %443 = arith.addf %431, %442 : vector<2x32xf32>
    %444 = arith.negf %443 : vector<2x32xf32>
    %445 = math.exp %444 : vector<2x32xf32>
    %cst_182 = arith.constant 1.000000e+00 : f32
    %446 = vector.broadcast %cst_182 : f32 to vector<2x32xf32>
    %447 = arith.addf %446, %445 : vector<2x32xf32>
    %448 = arith.divf %446, %447 : vector<2x32xf32>
    %cst_183 = arith.constant dense<0.000000e+00> : vector<2x32xf32>
    %449 = tpu.matmul %383, %5, %cst_183 {dimension_numbers = #tpu.dot_dimension_numbers<[1], [0], [0], [1], [0, 0, 1, 1], [], []>} : vector<2x32xf32>, vector<32x32xf32>, vector<2x32xf32> -> vector<2x32xf32>
    %450 = arith.addf %449, %11 : vector<2x32xf32>
    %451 = arith.mulf %441, %450 : vector<2x32xf32>
    %452 = arith.addf %434, %451 : vector<2x32xf32>
    %453 = math.tanh %452 : vector<2x32xf32>
    %cst_184 = arith.constant 1.000000e+00 : f32
    %454 = vector.broadcast %cst_184 : f32 to vector<2x32xf32>
    %455 = arith.subf %454, %448 : vector<2x32xf32>
    %456 = arith.mulf %455, %453 : vector<2x32xf32>
    %457 = arith.mulf %448, %383 : vector<2x32xf32>
    %458 = arith.addf %456, %457 : vector<2x32xf32>
    %459 = arith.index_cast %425 : i32 to index
    %c0_185 = arith.constant 0 : index
    %c32_186 = arith.constant 32 : index
    %460 = vector.load %arg14[%459, %c0_185, %c32_186] : memref<8x2x64xf32, #tpu.memory_space<vmem>>, vector<1x2x32xf32>
    %461 = vector.shape_cast %460 : vector<1x2x32xf32> to vector<2x32xf32>
    %462 = vector.shape_cast %458 : vector<2x32xf32> to vector<1x2x32xf32>
    tpu.vector_store %arg14[%459, %c0_185, %c32_186], %462 {strides = array<i32>} : memref<8x2x64xf32, #tpu.memory_space<vmem>>, vector<1x2x32xf32>,
    %c6_i32 = arith.constant 6 : i32
    %463 = arith.index_cast %c6_i32 : i32 to index
    %c0_187 = arith.constant 0 : index
    %c0_188 = arith.constant 0 : index
    %464 = vector.load %arg0[%463, %c0_187, %c0_188] : memref<8x2x32xf32, #tpu.memory_space<vmem>>, vector<1x2x32xf32>
    %465 = vector.shape_cast %464 : vector<1x2x32xf32> to vector<2x32xf32>
    %466 = arith.index_cast %c6_i32 : i32 to index
    %c0_189 = arith.constant 0 : index
    %c0_190 = arith.constant 0 : index
    %467 = vector.load %arg1[%466, %c0_189, %c0_190] : memref<8x2x32xf32, #tpu.memory_space<vmem>>, vector<1x2x32xf32>
    %468 = vector.shape_cast %467 : vector<1x2x32xf32> to vector<2x32xf32>
    %469 = arith.index_cast %c6_i32 : i32 to index
    %c0_191 = arith.constant 0 : index
    %c0_192 = arith.constant 0 : index
    %470 = vector.load %arg2[%469, %c0_191, %c0_192] : memref<8x2x32xf32, #tpu.memory_space<vmem>>, vector<1x2x32xf32>
    %471 = vector.shape_cast %470 : vector<1x2x32xf32> to vector<2x32xf32>
    %cst_193 = arith.constant dense<0.000000e+00> : vector<2x32xf32>
    %472 = tpu.matmul %420, %0, %cst_193 {dimension_numbers = #tpu.dot_dimension_numbers<[1], [0], [0], [1], [0, 0, 1, 1], [], []>} : vector<2x32xf32>, vector<32x32xf32>, vector<2x32xf32> -> vector<2x32xf32>
    %473 = arith.addf %465, %472 : vector<2x32xf32>
    %474 = arith.negf %473 : vector<2x32xf32>
    %475 = math.exp %474 : vector<2x32xf32>
    %cst_194 = arith.constant 1.000000e+00 : f32
    %476 = vector.broadcast %cst_194 : f32 to vector<2x32xf32>
    %477 = arith.addf %476, %475 : vector<2x32xf32>
    %478 = arith.divf %476, %477 : vector<2x32xf32>
    %cst_195 = arith.constant dense<0.000000e+00> : vector<2x32xf32>
    %479 = tpu.matmul %420, %1, %cst_195 {dimension_numbers = #tpu.dot_dimension_numbers<[1], [0], [0], [1], [0, 0, 1, 1], [], []>} : vector<2x32xf32>, vector<32x32xf32>, vector<2x32xf32> -> vector<2x32xf32>
    %480 = arith.addf %468, %479 : vector<2x32xf32>
    %481 = arith.negf %480 : vector<2x32xf32>
    %482 = math.exp %481 : vector<2x32xf32>
    %cst_196 = arith.constant 1.000000e+00 : f32
    %483 = vector.broadcast %cst_196 : f32 to vector<2x32xf32>
    %484 = arith.addf %483, %482 : vector<2x32xf32>
    %485 = arith.divf %483, %484 : vector<2x32xf32>
    %cst_197 = arith.constant dense<0.000000e+00> : vector<2x32xf32>
    %486 = tpu.matmul %420, %2, %cst_197 {dimension_numbers = #tpu.dot_dimension_numbers<[1], [0], [0], [1], [0, 0, 1, 1], [], []>} : vector<2x32xf32>, vector<32x32xf32>, vector<2x32xf32> -> vector<2x32xf32>
    %487 = arith.addf %486, %8 : vector<2x32xf32>
    %488 = arith.mulf %478, %487 : vector<2x32xf32>
    %489 = arith.addf %471, %488 : vector<2x32xf32>
    %490 = math.tanh %489 : vector<2x32xf32>
    %cst_198 = arith.constant 1.000000e+00 : f32
    %491 = vector.broadcast %cst_198 : f32 to vector<2x32xf32>
    %492 = arith.subf %491, %485 : vector<2x32xf32>
    %493 = arith.mulf %492, %490 : vector<2x32xf32>
    %494 = arith.mulf %485, %420 : vector<2x32xf32>
    %495 = arith.addf %493, %494 : vector<2x32xf32>
    %496 = arith.index_cast %c6_i32 : i32 to index
    %c0_199 = arith.constant 0 : index
    %c0_200 = arith.constant 0 : index
    %497 = vector.load %arg14[%496, %c0_199, %c0_200] : memref<8x2x64xf32, #tpu.memory_space<vmem>>, vector<1x2x32xf32>
    %498 = vector.shape_cast %497 : vector<1x2x32xf32> to vector<2x32xf32>
    %499 = vector.shape_cast %495 : vector<2x32xf32> to vector<1x2x32xf32>
    tpu.vector_store %arg14[%496, %c0_199, %c0_200], %499 {strides = array<i32>} : memref<8x2x64xf32, #tpu.memory_space<vmem>>, vector<1x2x32xf32>,
    %c7_i32_201 = arith.constant 7 : i32
    %500 = arith.subi %c7_i32_201, %c6_i32 : i32
    %501 = arith.index_cast %500 : i32 to index
    %c0_202 = arith.constant 0 : index
    %c0_203 = arith.constant 0 : index
    %502 = vector.load %arg3[%501, %c0_202, %c0_203] : memref<8x2x32xf32, #tpu.memory_space<vmem>>, vector<1x2x32xf32>
    %503 = vector.shape_cast %502 : vector<1x2x32xf32> to vector<2x32xf32>
    %504 = arith.index_cast %500 : i32 to index
    %c0_204 = arith.constant 0 : index
    %c0_205 = arith.constant 0 : index
    %505 = vector.load %arg4[%504, %c0_204, %c0_205] : memref<8x2x32xf32, #tpu.memory_space<vmem>>, vector<1x2x32xf32>
    %506 = vector.shape_cast %505 : vector<1x2x32xf32> to vector<2x32xf32>
    %507 = arith.index_cast %500 : i32 to index
    %c0_206 = arith.constant 0 : index
    %c0_207 = arith.constant 0 : index
    %508 = vector.load %arg5[%507, %c0_206, %c0_207] : memref<8x2x32xf32, #tpu.memory_space<vmem>>, vector<1x2x32xf32>
    %509 = vector.shape_cast %508 : vector<1x2x32xf32> to vector<2x32xf32>
    %cst_208 = arith.constant dense<0.000000e+00> : vector<2x32xf32>
    %510 = tpu.matmul %458, %3, %cst_208 {dimension_numbers = #tpu.dot_dimension_numbers<[1], [0], [0], [1], [0, 0, 1, 1], [], []>} : vector<2x32xf32>, vector<32x32xf32>, vector<2x32xf32> -> vector<2x32xf32>
    %511 = arith.addf %503, %510 : vector<2x32xf32>
    %512 = arith.negf %511 : vector<2x32xf32>
    %513 = math.exp %512 : vector<2x32xf32>
    %cst_209 = arith.constant 1.000000e+00 : f32
    %514 = vector.broadcast %cst_209 : f32 to vector<2x32xf32>
    %515 = arith.addf %514, %513 : vector<2x32xf32>
    %516 = arith.divf %514, %515 : vector<2x32xf32>
    %cst_210 = arith.constant dense<0.000000e+00> : vector<2x32xf32>
    %517 = tpu.matmul %458, %4, %cst_210 {dimension_numbers = #tpu.dot_dimension_numbers<[1], [0], [0], [1], [0, 0, 1, 1], [], []>} : vector<2x32xf32>, vector<32x32xf32>, vector<2x32xf32> -> vector<2x32xf32>
    %518 = arith.addf %506, %517 : vector<2x32xf32>
    %519 = arith.negf %518 : vector<2x32xf32>
    %520 = math.exp %519 : vector<2x32xf32>
    %cst_211 = arith.constant 1.000000e+00 : f32
    %521 = vector.broadcast %cst_211 : f32 to vector<2x32xf32>
    %522 = arith.addf %521, %520 : vector<2x32xf32>
    %523 = arith.divf %521, %522 : vector<2x32xf32>
    %cst_212 = arith.constant dense<0.000000e+00> : vector<2x32xf32>
    %524 = tpu.matmul %458, %5, %cst_212 {dimension_numbers = #tpu.dot_dimension_numbers<[1], [0], [0], [1], [0, 0, 1, 1], [], []>} : vector<2x32xf32>, vector<32x32xf32>, vector<2x32xf32> -> vector<2x32xf32>
    %525 = arith.addf %524, %11 : vector<2x32xf32>
    %526 = arith.mulf %516, %525 : vector<2x32xf32>
    %527 = arith.addf %509, %526 : vector<2x32xf32>
    %528 = math.tanh %527 : vector<2x32xf32>
    %cst_213 = arith.constant 1.000000e+00 : f32
    %529 = vector.broadcast %cst_213 : f32 to vector<2x32xf32>
    %530 = arith.subf %529, %523 : vector<2x32xf32>
    %531 = arith.mulf %530, %528 : vector<2x32xf32>
    %532 = arith.mulf %523, %458 : vector<2x32xf32>
    %533 = arith.addf %531, %532 : vector<2x32xf32>
    %534 = arith.index_cast %500 : i32 to index
    %c0_214 = arith.constant 0 : index
    %c32_215 = arith.constant 32 : index
    %535 = vector.load %arg14[%534, %c0_214, %c32_215] : memref<8x2x64xf32, #tpu.memory_space<vmem>>, vector<1x2x32xf32>
    %536 = vector.shape_cast %535 : vector<1x2x32xf32> to vector<2x32xf32>
    %537 = vector.shape_cast %533 : vector<2x32xf32> to vector<1x2x32xf32>
    tpu.vector_store %arg14[%534, %c0_214, %c32_215], %537 {strides = array<i32>} : memref<8x2x64xf32, #tpu.memory_space<vmem>>, vector<1x2x32xf32>,
    %c7_i32_216 = arith.constant 7 : i32
    %538 = arith.index_cast %c7_i32_216 : i32 to index
    %c0_217 = arith.constant 0 : index
    %c0_218 = arith.constant 0 : index
    %539 = vector.load %arg0[%538, %c0_217, %c0_218] : memref<8x2x32xf32, #tpu.memory_space<vmem>>, vector<1x2x32xf32>
    %540 = vector.shape_cast %539 : vector<1x2x32xf32> to vector<2x32xf32>
    %541 = arith.index_cast %c7_i32_216 : i32 to index
    %c0_219 = arith.constant 0 : index
    %c0_220 = arith.constant 0 : index
    %542 = vector.load %arg1[%541, %c0_219, %c0_220] : memref<8x2x32xf32, #tpu.memory_space<vmem>>, vector<1x2x32xf32>
    %543 = vector.shape_cast %542 : vector<1x2x32xf32> to vector<2x32xf32>
    %544 = arith.index_cast %c7_i32_216 : i32 to index
    %c0_221 = arith.constant 0 : index
    %c0_222 = arith.constant 0 : index
    %545 = vector.load %arg2[%544, %c0_221, %c0_222] : memref<8x2x32xf32, #tpu.memory_space<vmem>>, vector<1x2x32xf32>
    %546 = vector.shape_cast %545 : vector<1x2x32xf32> to vector<2x32xf32>
    %cst_223 = arith.constant dense<0.000000e+00> : vector<2x32xf32>
    %547 = tpu.matmul %495, %0, %cst_223 {dimension_numbers = #tpu.dot_dimension_numbers<[1], [0], [0], [1], [0, 0, 1, 1], [], []>} : vector<2x32xf32>, vector<32x32xf32>, vector<2x32xf32> -> vector<2x32xf32>
    %548 = arith.addf %540, %547 : vector<2x32xf32>
    %549 = arith.negf %548 : vector<2x32xf32>
    %550 = math.exp %549 : vector<2x32xf32>
    %cst_224 = arith.constant 1.000000e+00 : f32
    %551 = vector.broadcast %cst_224 : f32 to vector<2x32xf32>
    %552 = arith.addf %551, %550 : vector<2x32xf32>
    %553 = arith.divf %551, %552 : vector<2x32xf32>
    %cst_225 = arith.constant dense<0.000000e+00> : vector<2x32xf32>
    %554 = tpu.matmul %495, %1, %cst_225 {dimension_numbers = #tpu.dot_dimension_numbers<[1], [0], [0], [1], [0, 0, 1, 1], [], []>} : vector<2x32xf32>, vector<32x32xf32>, vector<2x32xf32> -> vector<2x32xf32>
    %555 = arith.addf %543, %554 : vector<2x32xf32>
    %556 = arith.negf %555 : vector<2x32xf32>
    %557 = math.exp %556 : vector<2x32xf32>
    %cst_226 = arith.constant 1.000000e+00 : f32
    %558 = vector.broadcast %cst_226 : f32 to vector<2x32xf32>
    %559 = arith.addf %558, %557 : vector<2x32xf32>
    %560 = arith.divf %558, %559 : vector<2x32xf32>
    %cst_227 = arith.constant dense<0.000000e+00> : vector<2x32xf32>
    %561 = tpu.matmul %495, %2, %cst_227 {dimension_numbers = #tpu.dot_dimension_numbers<[1], [0], [0], [1], [0, 0, 1, 1], [], []>} : vector<2x32xf32>, vector<32x32xf32>, vector<2x32xf32> -> vector<2x32xf32>
    %562 = arith.addf %561, %8 : vector<2x32xf32>
    %563 = arith.mulf %553, %562 : vector<2x32xf32>
    %564 = arith.addf %546, %563 : vector<2x32xf32>
    %565 = math.tanh %564 : vector<2x32xf32>
    %cst_228 = arith.constant 1.000000e+00 : f32
    %566 = vector.broadcast %cst_228 : f32 to vector<2x32xf32>
    %567 = arith.subf %566, %560 : vector<2x32xf32>
    %568 = arith.mulf %567, %565 : vector<2x32xf32>
    %569 = arith.mulf %560, %495 : vector<2x32xf32>
    %570 = arith.addf %568, %569 : vector<2x32xf32>
    %571 = arith.index_cast %c7_i32_216 : i32 to index
    %c0_229 = arith.constant 0 : index
    %c0_230 = arith.constant 0 : index
    %572 = vector.load %arg14[%571, %c0_229, %c0_230] : memref<8x2x64xf32, #tpu.memory_space<vmem>>, vector<1x2x32xf32>
    %573 = vector.shape_cast %572 : vector<1x2x32xf32> to vector<2x32xf32>
    %574 = vector.shape_cast %570 : vector<2x32xf32> to vector<1x2x32xf32>
    tpu.vector_store %arg14[%571, %c0_229, %c0_230], %574 {strides = array<i32>} : memref<8x2x64xf32, #tpu.memory_space<vmem>>, vector<1x2x32xf32>,
    %c7_i32_231 = arith.constant 7 : i32
    %575 = arith.subi %c7_i32_231, %c7_i32_216 : i32
    %576 = arith.index_cast %575 : i32 to index
    %c0_232 = arith.constant 0 : index
    %c0_233 = arith.constant 0 : index
    %577 = vector.load %arg3[%576, %c0_232, %c0_233] : memref<8x2x32xf32, #tpu.memory_space<vmem>>, vector<1x2x32xf32>
    %578 = vector.shape_cast %577 : vector<1x2x32xf32> to vector<2x32xf32>
    %579 = arith.index_cast %575 : i32 to index
    %c0_234 = arith.constant 0 : index
    %c0_235 = arith.constant 0 : index
    %580 = vector.load %arg4[%579, %c0_234, %c0_235] : memref<8x2x32xf32, #tpu.memory_space<vmem>>, vector<1x2x32xf32>
    %581 = vector.shape_cast %580 : vector<1x2x32xf32> to vector<2x32xf32>
    %582 = arith.index_cast %575 : i32 to index
    %c0_236 = arith.constant 0 : index
    %c0_237 = arith.constant 0 : index
    %583 = vector.load %arg5[%582, %c0_236, %c0_237] : memref<8x2x32xf32, #tpu.memory_space<vmem>>, vector<1x2x32xf32>
    %584 = vector.shape_cast %583 : vector<1x2x32xf32> to vector<2x32xf32>
    %cst_238 = arith.constant dense<0.000000e+00> : vector<2x32xf32>
    %585 = tpu.matmul %533, %3, %cst_238 {dimension_numbers = #tpu.dot_dimension_numbers<[1], [0], [0], [1], [0, 0, 1, 1], [], []>} : vector<2x32xf32>, vector<32x32xf32>, vector<2x32xf32> -> vector<2x32xf32>
    %586 = arith.addf %578, %585 : vector<2x32xf32>
    %587 = arith.negf %586 : vector<2x32xf32>
    %588 = math.exp %587 : vector<2x32xf32>
    %cst_239 = arith.constant 1.000000e+00 : f32
    %589 = vector.broadcast %cst_239 : f32 to vector<2x32xf32>
    %590 = arith.addf %589, %588 : vector<2x32xf32>
    %591 = arith.divf %589, %590 : vector<2x32xf32>
    %cst_240 = arith.constant dense<0.000000e+00> : vector<2x32xf32>
    %592 = tpu.matmul %533, %4, %cst_240 {dimension_numbers = #tpu.dot_dimension_numbers<[1], [0], [0], [1], [0, 0, 1, 1], [], []>} : vector<2x32xf32>, vector<32x32xf32>, vector<2x32xf32> -> vector<2x32xf32>
    %593 = arith.addf %581, %592 : vector<2x32xf32>
    %594 = arith.negf %593 : vector<2x32xf32>
    %595 = math.exp %594 : vector<2x32xf32>
    %cst_241 = arith.constant 1.000000e+00 : f32
    %596 = vector.broadcast %cst_241 : f32 to vector<2x32xf32>
    %597 = arith.addf %596, %595 : vector<2x32xf32>
    %598 = arith.divf %596, %597 : vector<2x32xf32>
    %cst_242 = arith.constant dense<0.000000e+00> : vector<2x32xf32>
    %599 = tpu.matmul %533, %5, %cst_242 {dimension_numbers = #tpu.dot_dimension_numbers<[1], [0], [0], [1], [0, 0, 1, 1], [], []>} : vector<2x32xf32>, vector<32x32xf32>, vector<2x32xf32> -> vector<2x32xf32>
    %600 = arith.addf %599, %11 : vector<2x32xf32>
    %601 = arith.mulf %591, %600 : vector<2x32xf32>
    %602 = arith.addf %584, %601 : vector<2x32xf32>
    %603 = math.tanh %602 : vector<2x32xf32>
    %cst_243 = arith.constant 1.000000e+00 : f32
    %604 = vector.broadcast %cst_243 : f32 to vector<2x32xf32>
    %605 = arith.subf %604, %598 : vector<2x32xf32>
    %606 = arith.mulf %605, %603 : vector<2x32xf32>
    %607 = arith.mulf %598, %533 : vector<2x32xf32>
    %608 = arith.addf %606, %607 : vector<2x32xf32>
    %609 = arith.index_cast %575 : i32 to index
    %c0_244 = arith.constant 0 : index
    %c32_245 = arith.constant 32 : index
    %610 = vector.load %arg14[%609, %c0_244, %c32_245] : memref<8x2x64xf32, #tpu.memory_space<vmem>>, vector<1x2x32xf32>
    %611 = vector.shape_cast %610 : vector<1x2x32xf32> to vector<2x32xf32>
    %612 = vector.shape_cast %608 : vector<2x32xf32> to vector<1x2x32xf32>
    tpu.vector_store %arg14[%609, %c0_244, %c32_245], %612 {strides = array<i32>} : memref<8x2x64xf32, #tpu.memory_space<vmem>>, vector<1x2x32xf32>,
    %c8_i32 = arith.constant 8 : i32
    return
  }
}

</mosaic_0001>

<llo_original>
// kernel: bigru_forward.1
$region0: #{bigru_forward.1}
  #allocation0 [shape = 'u32[]', space=smem, size = 0x4, offset = 0x4, fixed_abs, tag = 'smem constant byte address 0x4 - core index']
  #allocation1 [shape = 'u32[72,128]{1,0:T(1,128)}', space=vmem, size = 0x9000, scoped, tag = 'internal scratch']
  %s0 = inlined_call_operand.vmem [shape: f32[8,2,32], index: 0, kind: input, shape index: {}]
  %s1 = inlined_call_operand.vmem [shape: f32[8,2,32], index: 1, kind: input, shape index: {}]
  %s2 = inlined_call_operand.vmem [shape: f32[8,2,32], index: 2, kind: input, shape index: {}]
  %s3 = inlined_call_operand.vmem [shape: f32[8,2,32], index: 3, kind: input, shape index: {}]
  %s4 = inlined_call_operand.vmem [shape: f32[8,2,32], index: 4, kind: input, shape index: {}]
  %s5 = inlined_call_operand.vmem [shape: f32[8,2,32], index: 5, kind: input, shape index: {}]
  %s6 = inlined_call_operand.vmem [shape: f32[32,32], index: 6, kind: input, shape index: {}]
  %s7 = inlined_call_operand.vmem [shape: f32[32,32], index: 7, kind: input, shape index: {}]
  %s8 = inlined_call_operand.vmem [shape: f32[32,32], index: 8, kind: input, shape index: {}]
  %s9 = inlined_call_operand.vmem [shape: f32[32,32], index: 9, kind: input, shape index: {}]
  %s10 = inlined_call_operand.vmem [shape: f32[32,32], index: 10, kind: input, shape index: {}]
  %s11 = inlined_call_operand.vmem [shape: f32[32,32], index: 11, kind: input, shape index: {}]
  %s12 = inlined_call_operand.vmem [shape: f32[1,32], index: 12, kind: input, shape index: {}]
  %s13 = inlined_call_operand.vmem [shape: f32[1,32], index: 13, kind: input, shape index: {}]
  %s14 = inlined_call_operand.vmem [shape: f32[8,2,64], index: 14, kind: output, shape index: {}]
  %s15 = sld [smem:[#allocation0]]
  $region66: #{bigru_forward.1} parent=0
    _
  %s17 = ssub.s32 1, %s15
  %s18 = scalar_select 0, %s17, %s15
  // Predicated region
  $region2: #{bigru_forward.1} parent=0 // pred_check
    _
  $region3: #{bigru_forward.1} parent=0 // pred_check_branch
    %20 = sbr.rel (0) target = $region5
  $region4: #{bigru_forward.1} parent=0 // pred_region
    _
  $region5: #{bigru_forward.1} parent=0 // pred_fallthru
    _
  // Predicated region
  $region6: #{bigru_forward.1} parent=0 // pred_check
    _
  $region7: #{bigru_forward.1} parent=0 // pred_check_branch
    %22 = sbr.rel (0) target = $region9
  $region8: #{bigru_forward.1} parent=0 // pred_region
    _
  $region9: #{bigru_forward.1} parent=0 // pred_fallthru
    _
  // Predicated region
  $region10: #{bigru_forward.1} parent=0 // pred_check
    _
  $region11: #{bigru_forward.1} parent=0 // pred_check_branch
    %24 = sbr.rel (0) target = $region13
  $region12: #{bigru_forward.1} parent=0 // pred_region
    _
  $region13: #{bigru_forward.1} parent=0 // pred_fallthru
    _
  // Predicated region
  $region14: #{bigru_forward.1} parent=0 // pred_check
    _
  $region15: #{bigru_forward.1} parent=0 // pred_check_branch
    %26 = sbr.rel (0) target = $region17
  $region16: #{bigru_forward.1} parent=0 // pred_region
    _
  $region17: #{bigru_forward.1} parent=0 // pred_fallthru
    _
  // Predicated region
  $region18: #{bigru_forward.1} parent=0 // pred_check
    _
  $region19: #{bigru_forward.1} parent=0 // pred_check_branch
    %28 = sbr.rel (0) target = $region21
  $region20: #{bigru_forward.1} parent=0 // pred_region
    _
  $region21: #{bigru_forward.1} parent=0 // pred_fallthru
    _
  // Predicated region
  $region22: #{bigru_forward.1} parent=0 // pred_check
    _
  $region23: #{bigru_forward.1} parent=0 // pred_check_branch
    %30 = sbr.rel (0) target = $region25
  $region24: #{bigru_forward.1} parent=0 // pred_region
    _
  $region25: #{bigru_forward.1} parent=0 // pred_fallthru
    _
  // Predicated region
  $region26: #{bigru_forward.1} parent=0 // pred_check
    _
  $region27: #{bigru_forward.1} parent=0 // pred_check_branch
    %32 = sbr.rel (0) target = $region29
  $region28: #{bigru_forward.1} parent=0 // pred_region
    _
  $region29: #{bigru_forward.1} parent=0 // pred_fallthru
    _
  // Predicated region
  $region30: #{bigru_forward.1} parent=0 // pred_check
    _
  $region31: #{bigru_forward.1} parent=0 // pred_check_branch
    %34 = sbr.rel (0) target = $region33
  $region32: #{bigru_forward.1} parent=0 // pred_region
    _
  $region33: #{bigru_forward.1} parent=0 // pred_fallthru
    _
  // Predicated region
  $region34: #{bigru_forward.1} parent=0 // pred_check
    _
  $region35: #{bigru_forward.1} parent=0 // pred_check_branch
    %36 = sbr.rel (0) target = $region37
  $region36: #{bigru_forward.1} parent=0 // pred_region
    _
  $region37: #{bigru_forward.1} parent=0 // pred_fallthru
    _
  // Predicated region
  $region38: #{bigru_forward.1} parent=0 // pred_check
    _
  $region39: #{bigru_forward.1} parent=0 // pred_check_branch
    %38 = sbr.rel (0) target = $region41
  $region40: #{bigru_forward.1} parent=0 // pred_region
    _
  $region41: #{bigru_forward.1} parent=0 // pred_fallthru
    _
  // Predicated region
  $region42: #{bigru_forward.1} parent=0 // pred_check
    _
  $region43: #{bigru_forward.1} parent=0 // pred_check_branch
    %40 = sbr.rel (0) target = $region45
  $region44: #{bigru_forward.1} parent=0 // pred_region
    _
  $region45: #{bigru_forward.1} parent=0 // pred_fallthru
    _
  // Predicated region
  $region46: #{bigru_forward.1} parent=0 // pred_check
    _
  $region47: #{bigru_forward.1} parent=0 // pred_check_branch
    %42 = sbr.rel (0) target = $region49
  $region48: #{bigru_forward.1} parent=0 // pred_region
    _
  $region49: #{bigru_forward.1} parent=0 // pred_fallthru
    _
  // Predicated region
  $region50: #{bigru_forward.1} parent=0 // pred_check
    _
  $region51: #{bigru_forward.1} parent=0 // pred_check_branch
    %44 = sbr.rel (0) target = $region53
  $region52: #{bigru_forward.1} parent=0 // pred_region
    _
  $region53: #{bigru_forward.1} parent=0 // pred_fallthru
    _
  // Predicated region
  $region54: #{bigru_forward.1} parent=0 // pred_check
    _
  $region55: #{bigru_forward.1} parent=0 // pred_check_branch
    %46 = sbr.rel (0) target = $region57
  $region56: #{bigru_forward.1} parent=0 // pred_region
    _
  $region57: #{bigru_forward.1} parent=0 // pred_fallthru
    _
  %v47 = vld [vmem:[%s6] sm:$0xff]
  %v48 = vld [vmem:[%s6 + $0x8] sm:$0xff]
  %v49 = vld [vmem:[%s6 + $0x10] sm:$0xff]
  %v50 = vld [vmem:[%s6 + $0x18] sm:$0xff]
  %v51 = vld [vmem:[%s7] sm:$0xff]
  %v52 = vld [vmem:[%s7 + $0x8] sm:$0xff]
  %v53 = vld [vmem:[%s7 + $0x10] sm:$0xff]
  %v54 = vld [vmem:[%s7 + $0x18] sm:$0xff]
  %v55 = vld [vmem:[%s8] sm:$0xff]
  %v56 = vld [vmem:[%s8 + $0x8] sm:$0xff]
  %v57 = vld [vmem:[%s8 + $0x10] sm:$0xff]
  %v58 = vld [vmem:[%s8 + $0x18] sm:$0xff]
  %v59 = vld [vmem:[%s9] sm:$0xff]
  %v60 = vld [vmem:[%s9 + $0x8] sm:$0xff]
  %v61 = vld [vmem:[%s9 + $0x10] sm:$0xff]
  %v62 = vld [vmem:[%s9 + $0x18] sm:$0xff]
  %v63 = vld [vmem:[%s10] sm:$0xff]
  %v64 = vld [vmem:[%s10 + $0x8] sm:$0xff]
  %v65 = vld [vmem:[%s10 + $0x10] sm:$0xff]
  %v66 = vld [vmem:[%s10 + $0x18] sm:$0xff]
  %v67 = vld [vmem:[%s11] sm:$0xff]
  %v68 = vld [vmem:[%s11 + $0x8] sm:$0xff]
  %v69 = vld [vmem:[%s11 + $0x10] sm:$0xff]
  %v70 = vld [vmem:[%s11 + $0x18] sm:$0xff]
  %v71 = vld [vmem:[%s12] sm:$0x1]
  %v73 = vperm.slane %v71, 0
  %v75 = vld [vmem:[%s13] sm:$0x1]
  %v77 = vperm.slane %v75, 0
  %v79 = vld [vmem:[%s0] sm:$0x3]
  %v80 = vld [vmem:[%s1] sm:$0x3]
  %v81 = vld [vmem:[%s2] sm:$0x3]
  %vm82 = vcmask 261120
  %v84 = vsel %vm82, 0.0, 0
  %86 = vmatpush.msra.mxu0 0.0
  %87 = vmatpush.msra.mxu0 0.0
  %88 = vmatpush.msra.mxu0 0.0
  %89 = vmatpush.msra.mxu0 0.0
  %90 = vmatpush.msra.mxu0 0.0
  %91 = vmatpush.msra.mxu0 0.0
  %92 = vmatpush.msra.mxu0 0.0
  %93 = vmatpush.msra.mxu0 0.0
  %94 = vmatpush.msra.mxu0 0.0
  %95 = vmatpush.msra.mxu0 0.0
  %96 = vmatpush.msra.mxu0 0.0
  %97 = vmatpush.msra.mxu0 0.0
  %98 = vmatpush.msra.mxu0 %v50
  %99 = vmatpush.msra.mxu0 %v49
  %100 = vmatpush.msra.mxu0 %v48
  %101 = vmatpush.msra.mxu0 %v47
  %102 = vmatmul.f32.gmra.mxu0 %v84
  %v103 = vpop.f32.mrf.mxu0
  %v104 = vadd.f32 0.0, %v103
  %105 = vdwg.mxu0
  %v106 = vadd.f32 %v79, %v104
  %v107 = vxor.u32 %v106, 2147483648
  %v108 = vmul.f32 %v107, 1.442695
  %v109 = vpow.pop %v108
  %v110 = vadd.f32 %v109, 1.0
  %v111 = vrcp.pop %v110
  %v112 = vmul.f32 %v110, %v111
  %v113 = vsub.f32 1.0, %v112
  %v114 = vmul.f32 %v111, %v113
  %v115 = vadd.f32 %v111, %v114
  %vm116 = vweird.f32 %v110
  %vm117 = vweird.f32 %v111
  %vm118 = vmor %vm116, %vm117
  %v119 = vsel %vm118, %v111, %v115
  %v120 = vand.u32 2147483647, %v110
  %vm121 = vcmp.eq.f32.partialorder %v120, 8.507059e+37
  %v122 = vand.u32 %v110, 2147483648
  %v123 = vor.u32 1.1754944e-38, %v122
  %v124 = vsel %vm121, %v123, %v119
  %v125 = vmul.f32 1.0, %v124
  %126 = vmatpush.msra.mxu0 0.0
  %127 = vmatpush.msra.mxu0 0.0
  %128 = vmatpush.msra.mxu0 0.0
  %129 = vmatpush.msra.mxu0 0.0
  %130 = vmatpush.msra.mxu0 0.0
  %131 = vmatpush.msra.mxu0 0.0
  %132 = vmatpush.msra.mxu0 0.0
  %133 = vmatpush.msra.mxu0 0.0
  %134 = vmatpush.msra.mxu0 0.0
  %135 = vmatpush.msra.mxu0 0.0
  %136 = vmatpush.msra.mxu0 0.0
  %137 = vmatpush.msra.mxu0 0.0
  %138 = vmatpush.msra.mxu0 %v54
  %139 = vmatpush.msra.mxu0 %v53
  %140 = vmatpush.msra.mxu0 %v52
  %141 = vmatpush.msra.mxu0 %v51
  %142 = vmatmul.f32.gmra.mxu0 %v84
  %v143 = vpop.f32.mrf.mxu0
  %v144 = vadd.f32 0.0, %v143
  %145 = vdwg.mxu0
  %v146 = vadd.f32 %v80, %v144
  %v147 = vxor.u32 %v146, 2147483648
  %v148 = vmul.f32 %v147, 1.442695
  %v149 = vpow.pop %v148
  %v150 = vadd.f32 %v149, 1.0
  %v151 = vrcp.pop %v150
  %v152 = vmul.f32 %v150, %v151
  %v153 = vsub.f32 1.0, %v152
  %v154 = vmul.f32 %v151, %v153
  %v155 = vadd.f32 %v151, %v154
  %vm156 = vweird.f32 %v150
  %vm157 = vweird.f32 %v151
  %vm158 = vmor %vm156, %vm157
  %v159 = vsel %vm158, %v151, %v155
  %v160 = vand.u32 2147483647, %v150
  %vm161 = vcmp.eq.f32.partialorder %v160, 8.507059e+37
  %v162 = vand.u32 %v150, 2147483648
  %v163 = vor.u32 1.1754944e-38, %v162
  %v164 = vsel %vm161, %v163, %v159
  %v165 = vmul.f32 1.0, %v164
  %166 = vmatpush.msra.mxu0 0.0
  %167 = vmatpush.msra.mxu0 0.0
  %168 = vmatpush.msra.mxu0 0.0
  %169 = vmatpush.msra.mxu0 0.0
  %170 = vmatpush.msra.mxu0 0.0
  %171 = vmatpush.msra.mxu0 0.0
  %172 = vmatpush.msra.mxu0 0.0
  %173 = vmatpush.msra.mxu0 0.0
  %174 = vmatpush.msra.mxu0 0.0
  %175 = vmatpush.msra.mxu0 0.0
  %176 = vmatpush.msra.mxu0 0.0
  %177 = vmatpush.msra.mxu0 0.0
  %178 = vmatpush.msra.mxu0 %v58
  %179 = vmatpush.msra.mxu0 %v57
  %180 = vmatpush.msra.mxu0 %v56
  %181 = vmatpush.msra.mxu0 %v55
  %182 = vmatmul.f32.gmra.mxu0 %v84
  %v183 = vpop.f32.mrf.mxu0
  %v184 = vadd.f32 %v73, %v183
  %185 = vdwg.mxu0
  %v186 = vmul.f32 %v125, %v184
  %v187 = vadd.f32 %v81, %v186
  %v188 = vtanh.pop %v187
  %v189 = vsub.f32 1.0, %v165
  %v190 = vmul.f32 %v189, %v188
  %v191 = vmul.f32 %v165, 0.0
  %v192 = vadd.f32 %v190, %v191
  %vm193 = vcmask 254976
  %194 = vst.msk [vmem:[%s14] sm:$0x3] %vm193, %v192
  %s195 = scalar_lea.vmem %s3, 14
  %v196 = vld [vmem:[%s195] sm:$0x3]
  %s197 = scalar_lea.vmem %s4, 14
  %v198 = vld [vmem:[%s197] sm:$0x3]
  %s199 = scalar_lea.vmem %s5, 14
  %v200 = vld [vmem:[%s199] sm:$0x3]
  %201 = vmatpush.msra.mxu0 0.0
  %202 = vmatpush.msra.mxu0 0.0
  %203 = vmatpush.msra.mxu0 0.0
  %204 = vmatpush.msra.mxu0 0.0
  %205 = vmatpush.msra.mxu0 0.0
  %206 = vmatpush.msra.mxu0 0.0
  %207 = vmatpush.msra.mxu0 0.0
  %208 = vmatpush.msra.mxu0 0.0
  %209 = vmatpush.msra.mxu0 0.0
  %210 = vmatpush.msra.mxu0 0.0
  %211 = vmatpush.msra.mxu0 0.0
  %212 = vmatpush.msra.mxu0 0.0
  %213 = vmatpush.msra.mxu0 %v62
  %214 = vmatpush.msra.mxu0 %v61
  %215 = vmatpush.msra.mxu0 %v60
  %216 = vmatpush.msra.mxu0 %v59
  %217 = vmatmul.f32.gmra.mxu0 %v84
  %v218 = vpop.f32.mrf.mxu0
  %v219 = vadd.f32 0.0, %v218
  %220 = vdwg.mxu0
  %v221 = vadd.f32 %v196, %v219
  %v222 = vxor.u32 %v221, 2147483648
  %v223 = vmul.f32 %v222, 1.442695
  %v224 = vpow.pop %v223
  %v225 = vadd.f32 %v224, 1.0
  %v226 = vrcp.pop %v225
  %v227 = vmul.f32 %v225, %v226
  %v228 = vsub.f32 1.0, %v227
  %v229 = vmul.f32 %v226, %v228
  %v230 = vadd.f32 %v226, %v229
  %vm231 = vweird.f32 %v225
  %vm232 = vweird.f32 %v226
  %vm233 = vmor %vm231, %vm232
  %v234 = vsel %vm233, %v226, %v230
  %v235 = vand.u32 2147483647, %v225
  %vm236 = vcmp.eq.f32.partialorder %v235, 8.507059e+37
  %v237 = vand.u32 %v225, 2147483648
  %v238 = vor.u32 1.1754944e-38, %v237
  %v239 = vsel %vm236, %v238, %v234
  %v240 = vmul.f32 1.0, %v239
  %241 = vmatpush.msra.mxu0 0.0
  %242 = vmatpush.msra.mxu0 0.0
  %243 = vmatpush.msra.mxu0 0.0
  %244 = vmatpush.msra.mxu0 0.0
  %245 = vmatpush.msra.mxu0 0.0
  %246 = vmatpush.msra.mxu0 0.0
  %247 = vmatpush.msra.mxu0 0.0
  %248 = vmatpush.msra.mxu0 0.0
  %249 = vmatpush.msra.mxu0 0.0
  %250 = vmatpush.msra.mxu0 0.0
  %251 = vmatpush.msra.mxu0 0.0
  %252 = vmatpush.msra.mxu0 0.0
  %253 = vmatpush.msra.mxu0 %v66
  %254 = vmatpush.msra.mxu0 %v65
  %255 = vmatpush.msra.mxu0 %v64
  %256 = vmatpush.msra.mxu0 %v63
  %257 = vmatmul.f32.gmra.mxu0 %v84
  %v258 = vpop.f32.mrf.mxu0
  %v259 = vadd.f32 0.0, %v258
  %260 = vdwg.mxu0
  %v261 = vadd.f32 %v198, %v259
  %v262 = vxor.u32 %v261, 2147483648
  %v263 = vmul.f32 %v262, 1.442695
  %v264 = vpow.pop %v263
  %v265 = vadd.f32 %v264, 1.0
  %v266 = vrcp.pop %v265
  %v267 = vmul.f32 %v265, %v266
  %v268 = vsub.f32 1.0, %v267
  %v269 = vmul.f32 %v266, %v268
  %v270 = vadd.f32 %v266, %v269
  %vm271 = vweird.f32 %v265
  %vm272 = vweird.f32 %v266
  %vm273 = vmor %vm271, %vm272
  %v274 = vsel %vm273, %v266, %v270
  %v275 = vand.u32 2147483647, %v265
  %vm276 = vcmp.eq.f32.partialorder %v275, 8.507059e+37
  %v277 = vand.u32 %v265, 2147483648
  %v278 = vor.u32 1.1754944e-38, %v277
  %v279 = vsel %vm276, %v278, %v274
  %v280 = vmul.f32 1.0, %v279
  %281 = vmatpush.msra.mxu0 0.0
  %282 = vmatpush.msra.mxu0 0.0
  %283 = vmatpush.msra.mxu0 0.0
  %284 = vmatpush.msra.mxu0 0.0
  %285 = vmatpush.msra.mxu0 0.0
  %286 = vmatpush.msra.mxu0 0.0
  %287 = vmatpush.msra.mxu0 0.0
  %288 = vmatpush.msra.mxu0 0.0
  %289 = vmatpush.msra.mxu0 0.0
  %290 = vmatpush.msra.mxu0 0.0
  %291 = vmatpush.msra.mxu0 0.0
  %292 = vmatpush.msra.mxu0 0.0
  %293 = vmatpush.msra.mxu0 %v70
  %294 = vmatpush.msra.mxu0 %v69
  %295 = vmatpush.msra.mxu0 %v68
  %296 = vmatpush.msra.mxu0 %v67
  %297 = vmatmul.f32.gmra.mxu0 %v84
  %v298 = vpop.f32.mrf.mxu0
  %v299 = vadd.f32 %v77, %v298
  %300 = vdwg.mxu0
  %v301 = vmul.f32 %v240, %v299
  %v302 = vadd.f32 %v200, %v301
  %v303 = vtanh.pop %v302
  %v304 = vsub.f32 1.0, %v280
  %v305 = vmul.f32 %v304, %v303
  %v306 = vmul.f32 %v280, 0.0
  %v307 = vadd.f32 %v305, %v306
  %309 = vrot.lane.b32.xlu0 %v307, 32
  %v310 = vpop.permute.xlu0 %309
  %s312 = scalar_lea.vmem %s14, 14
  %vm313 = vcmask 517376
  %314 = vst.msk [vmem:[%s312] sm:$0x3] %vm313, %v310
  %s315 = scalar_lea.vmem %s0, 2
  %v316 = vld [vmem:[%s315] sm:$0x3]
  %s317 = scalar_lea.vmem %s1, 2
  %v318 = vld [vmem:[%s317] sm:$0x3]
  %s319 = scalar_lea.vmem %s2, 2
  %v320 = vld [vmem:[%s319] sm:$0x3]
  %v322 = vsel %vm82, %v192, 0
  %324 = vmatpush.msra.mxu0 0.0
  %325 = vmatpush.msra.mxu0 0.0
  %326 = vmatpush.msra.mxu0 0.0
  %327 = vmatpush.msra.mxu0 0.0
  %328 = vmatpush.msra.mxu0 0.0
  %329 = vmatpush.msra.mxu0 0.0
  %330 = vmatpush.msra.mxu0 0.0
  %331 = vmatpush.msra.mxu0 0.0
  %332 = vmatpush.msra.mxu0 0.0
  %333 = vmatpush.msra.mxu0 0.0
  %334 = vmatpush.msra.mxu0 0.0
  %335 = vmatpush.msra.mxu0 0.0
  %336 = vmatpush.msra.mxu0 %v50
  %337 = vmatpush.msra.mxu0 %v49
  %338 = vmatpush.msra.mxu0 %v48
  %339 = vmatpush.msra.mxu0 %v47
  %340 = vmatmul.f32.gmra.mxu0 %v322
  %v341 = vpop.f32.mrf.mxu0
  %v342 = vadd.f32 0.0, %v341
  %343 = vdwg.mxu0
  %v344 = vadd.f32 %v316, %v342
  %v345 = vxor.u32 %v344, 2147483648
  %v346 = vmul.f32 %v345, 1.442695
  %v347 = vpow.pop %v346
  %v348 = vadd.f32 %v347, 1.0
  %v349 = vrcp.pop %v348
  %v350 = vmul.f32 %v348, %v349
  %v351 = vsub.f32 1.0, %v350
  %v352 = vmul.f32 %v349, %v351
  %v353 = vadd.f32 %v349, %v352
  %vm354 = vweird.f32 %v348
  %vm355 = vweird.f32 %v349
  %vm356 = vmor %vm354, %vm355
  %v357 = vsel %vm356, %v349, %v353
  %v358 = vand.u32 2147483647, %v348
  %vm359 = vcmp.eq.f32.partialorder %v358, 8.507059e+37
  %v360 = vand.u32 %v348, 2147483648
  %v361 = vor.u32 1.1754944e-38, %v360
  %v362 = vsel %vm359, %v361, %v357
  %v363 = vmul.f32 1.0, %v362
  %364 = vmatpush.msra.mxu0 0.0
  %365 = vmatpush.msra.mxu0 0.0
  %366 = vmatpush.msra.mxu0 0.0
  %367 = vmatpush.msra.mxu0 0.0
  %368 = vmatpush.msra.mxu0 0.0
  %369 = vmatpush.msra.mxu0 0.0
  %370 = vmatpush.msra.mxu0 0.0
  %371 = vmatpush.msra.mxu0 0.0
  %372 = vmatpush.msra.mxu0 0.0
  %373 = vmatpush.msra.mxu0 0.0
  %374 = vmatpush.msra.mxu0 0.0
  %375 = vmatpush.msra.mxu0 0.0
  %376 = vmatpush.msra.mxu0 %v54
  %377 = vmatpush.msra.mxu0 %v53
  %378 = vmatpush.msra.mxu0 %v52
  %379 = vmatpush.msra.mxu0 %v51
  %380 = vmatmul.f32.gmra.mxu0 %v322
  %v381 = vpop.f32.mrf.mxu0
  %v382 = vadd.f32 0.0, %v381
  %383 = vdwg.mxu0
  %v384 = vadd.f32 %v318, %v382
  %v385 = vxor.u32 %v384, 2147483648
  %v386 = vmul.f32 %v385, 1.442695
  %v387 = vpow.pop %v386
  %v388 = vadd.f32 %v387, 1.0
  %v389 = vrcp.pop %v388
  %v390 = vmul.f32 %v388, %v389
  %v391 = vsub.f32 1.0, %v390
  %v392 = vmul.f32 %v389, %v391
  %v393 = vadd.f32 %v389, %v392
  %vm394 = vweird.f32 %v388
  %vm395 = vweird.f32 %v389
  %vm396 = vmor %vm394, %vm395
  %v397 = vsel %vm396, %v389, %v393
  %v398 = vand.u32 2147483647, %v388
  %vm399 = vcmp.eq.f32.partialorder %v398, 8.507059e+37
  %v400 = vand.u32 %v388, 2147483648
  %v401 = vor.u32 1.1754944e-38, %v400
  %v402 = vsel %vm399, %v401, %v397
  %v403 = vmul.f32 1.0, %v402
  %404 = vmatpush.msra.mxu0 0.0
  %405 = vmatpush.msra.mxu0 0.0
  %406 = vmatpush.msra.mxu0 0.0
  %407 = vmatpush.msra.mxu0 0.0
  %408 = vmatpush.msra.mxu0 0.0
  %409 = vmatpush.msra.mxu0 0.0
  %410 = vmatpush.msra.mxu0 0.0
  %411 = vmatpush.msra.mxu0 0.0
  %412 = vmatpush.msra.mxu0 0.0
  %413 = vmatpush.msra.mxu0 0.0
  %414 = vmatpush.msra.mxu0 0.0
  %415 = vmatpush.msra.mxu0 0.0
  %416 = vmatpush.msra.mxu0 %v58
  %417 = vmatpush.msra.mxu0 %v57
  %418 = vmatpush.msra.mxu0 %v56
  %419 = vmatpush.msra.mxu0 %v55
  %420 = vmatmul.f32.gmra.mxu0 %v322
  %v421 = vpop.f32.mrf.mxu0
  %v422 = vadd.f32 %v73, %v421
  %423 = vdwg.mxu0
  %v424 = vmul.f32 %v363, %v422
  %v425 = vadd.f32 %v320, %v424
  %v426 = vtanh.pop %v425
  %v427 = vsub.f32 1.0, %v403
  %v428 = vmul.f32 %v427, %v426
  %v429 = vmul.f32 %v403, %v192
  %v430 = vadd.f32 %v428, %v429
  %s431 = scalar_lea.vmem %s14, 2
  %432 = vst.msk [vmem:[%s431] sm:$0x3] %vm193, %v430
  %s433 = scalar_lea.vmem %s3, 12
  %v434 = vld [vmem:[%s433] sm:$0x3]
  %s435 = scalar_lea.vmem %s4, 12
  %v436 = vld [vmem:[%s435] sm:$0x3]
  %s437 = scalar_lea.vmem %s5, 12
  %v438 = vld [vmem:[%s437] sm:$0x3]
  %v439 = vsel %vm82, %v307, 0
  %441 = vmatpush.msra.mxu0 0.0
  %442 = vmatpush.msra.mxu0 0.0
  %443 = vmatpush.msra.mxu0 0.0
  %444 = vmatpush.msra.mxu0 0.0
  %445 = vmatpush.msra.mxu0 0.0
  %446 = vmatpush.msra.mxu0 0.0
  %447 = vmatpush.msra.mxu0 0.0
  %448 = vmatpush.msra.mxu0 0.0
  %449 = vmatpush.msra.mxu0 0.0
  %450 = vmatpush.msra.mxu0 0.0
  %451 = vmatpush.msra.mxu0 0.0
  %452 = vmatpush.msra.mxu0 0.0
  %453 = vmatpush.msra.mxu0 %v62
  %454 = vmatpush.msra.mxu0 %v61
  %455 = vmatpush.msra.mxu0 %v60
  %456 = vmatpush.msra.mxu0 %v59
  %457 = vmatmul.f32.gmra.mxu0 %v439
  %v458 = vpop.f32.mrf.mxu0
  %v459 = vadd.f32 0.0, %v458
  %460 = vdwg.mxu0
  %v461 = vadd.f32 %v434, %v459
  %v462 = vxor.u32 %v461, 2147483648
  %v463 = vmul.f32 %v462, 1.442695
  %v464 = vpow.pop %v463
  %v465 = vadd.f32 %v464, 1.0
  %v466 = vrcp.pop %v465
  %v467 = vmul.f32 %v465, %v466
  %v468 = vsub.f32 1.0, %v467
  %v469 = vmul.f32 %v466, %v468
  %v470 = vadd.f32 %v466, %v469
  %vm471 = vweird.f32 %v465
  %vm472 = vweird.f32 %v466
  %vm473 = vmor %vm471, %vm472
  %v474 = vsel %vm473, %v466, %v470
  %v475 = vand.u32 2147483647, %v465
  %vm476 = vcmp.eq.f32.partialorder %v475, 8.507059e+37
  %v477 = vand.u32 %v465, 2147483648
  %v478 = vor.u32 1.1754944e-38, %v477
  %v479 = vsel %vm476, %v478, %v474
  %v480 = vmul.f32 1.0, %v479
  %481 = vmatpush.msra.mxu0 0.0
  %482 = vmatpush.msra.mxu0 0.0
  %483 = vmatpush.msra.mxu0 0.0
  %484 = vmatpush.msra.mxu0 0.0
  %485 = vmatpush.msra.mxu0 0.0
  %486 = vmatpush.msra.mxu0 0.0
  %487 = vmatpush.msra.mxu0 0.0
  %488 = vmatpush.msra.mxu0 0.0
  %489 = vmatpush.msra.mxu0 0.0
  %490 = vmatpush.msra.mxu0 0.0
  %491 = vmatpush.msra.mxu0 0.0
  %492 = vmatpush.msra.mxu0 0.0
  %493 = vmatpush.msra.mxu0 %v66
  %494 = vmatpush.msra.mxu0 %v65
  %495 = vmatpush.msra.mxu0 %v64
  %496 = vmatpush.msra.mxu0 %v63
  %497 = vmatmul.f32.gmra.mxu0 %v439
  %v498 = vpop.f32.mrf.mxu0
  %v499 = vadd.f32 0.0, %v498
  %500 = vdwg.mxu0
  %v501 = vadd.f32 %v436, %v499
  %v502 = vxor.u32 %v501, 2147483648
  %v503 = vmul.f32 %v502, 1.442695
  %v504 = vpow.pop %v503
  %v505 = vadd.f32 %v504, 1.0
  %v506 = vrcp.pop %v505
  %v507 = vmul.f32 %v505, %v506
  %v508 = vsub.f32 1.0, %v507
  %v509 = vmul.f32 %v506, %v508
  %v510 = vadd.f32 %v506, %v509
  %vm511 = vweird.f32 %v505
  %vm512 = vweird.f32 %v506
  %vm513 = vmor %vm511, %vm512
  %v514 = vsel %vm513, %v506, %v510
  %v515 = vand.u32 2147483647, %v505
  %vm516 = vcmp.eq.f32.partialorder %v515, 8.507059e+37
  %v517 = vand.u32 %v505, 2147483648
  %v518 = vor.u32 1.1754944e-38, %v517
  %v519 = vsel %vm516, %v518, %v514
  %v520 = vmul.f32 1.0, %v519
  %521 = vmatpush.msra.mxu0 0.0
  %522 = vmatpush.msra.mxu0 0.0
  %523 = vmatpush.msra.mxu0 0.0
  %524 = vmatpush.msra.mxu0 0.0
  %525 = vmatpush.msra.mxu0 0.0
  %526 = vmatpush.msra.mxu0 0.0
  %527 = vmatpush.msra.mxu0 0.0
  %528 = vmatpush.msra.mxu0 0.0
  %529 = vmatpush.msra.mxu0 0.0
  %530 = vmatpush.msra.mxu0 0.0
  %531 = vmatpush.msra.mxu0 0.0
  %532 = vmatpush.msra.mxu0 0.0
  %533 = vmatpush.msra.mxu0 %v70
  %534 = vmatpush.msra.mxu0 %v69
  %535 = vmatpush.msra.mxu0 %v68
  %536 = vmatpush.msra.mxu0 %v67
  %537 = vmatmul.f32.gmra.mxu0 %v439
  %v538 = vpop.f32.mrf.mxu0
  %v539 = vadd.f32 %v77, %v538
  %540 = vdwg.mxu0
  %v541 = vmul.f32 %v480, %v539
  %v542 = vadd.f32 %v438, %v541
  %v543 = vtanh.pop %v542
  %v544 = vsub.f32 1.0, %v520
  %v545 = vmul.f32 %v544, %v543
  %v546 = vmul.f32 %v520, %v307
  %v547 = vadd.f32 %v545, %v546
  %549 = vrot.lane.b32.xlu0 %v547, 32
  %v550 = vpop.permute.xlu0 %549
  %s552 = scalar_lea.vmem %s14, 12
  %553 = vst.msk [vmem:[%s552] sm:$0x3] %vm313, %v550
  %s554 = scalar_lea.vmem %s0, 4
  %v555 = vld [vmem:[%s554] sm:$0x3]
  %s556 = scalar_lea.vmem %s1, 4
  %v557 = vld [vmem:[%s556] sm:$0x3]
  %s558 = scalar_lea.vmem %s2, 4
  %v559 = vld [vmem:[%s558] sm:$0x3]
  %v561 = vsel %vm82, %v430, 0
  %563 = vmatpush.msra.mxu0 0.0
  %564 = vmatpush.msra.mxu0 0.0
  %565 = vmatpush.msra.mxu0 0.0
  %566 = vmatpush.msra.mxu0 0.0
  %567 = vmatpush.msra.mxu0 0.0
  %568 = vmatpush.msra.mxu0 0.0
  %569 = vmatpush.msra.mxu0 0.0
  %570 = vmatpush.msra.mxu0 0.0
  %571 = vmatpush.msra.mxu0 0.0
  %572 = vmatpush.msra.mxu0 0.0
  %573 = vmatpush.msra.mxu0 0.0
  %574 = vmatpush.msra.mxu0 0.0
  %575 = vmatpush.msra.mxu0 %v50
  %576 = vmatpush.msra.mxu0 %v49
  %577 = vmatpush.msra.mxu0 %v48
  %578 = vmatpush.msra.mxu0 %v47
  %579 = vmatmul.f32.gmra.mxu0 %v561
  %v580 = vpop.f32.mrf.mxu0
  %v581 = vadd.f32 0.0, %v580
  %582 = vdwg.mxu0
  %v583 = vadd.f32 %v555, %v581
  %v584 = vxor.u32 %v583, 2147483648
  %v585 = vmul.f32 %v584, 1.442695
  %v586 = vpow.pop %v585
  %v587 = vadd.f32 %v586, 1.0
  %v588 = vrcp.pop %v587
  %v589 = vmul.f32 %v587, %v588
  %v590 = vsub.f32 1.0, %v589
  %v591 = vmul.f32 %v588, %v590
  %v592 = vadd.f32 %v588, %v591
  %vm593 = vweird.f32 %v587
  %vm594 = vweird.f32 %v588
  %vm595 = vmor %vm593, %vm594
  %v596 = vsel %vm595, %v588, %v592
  %v597 = vand.u32 2147483647, %v587
  %vm598 = vcmp.eq.f32.partialorder %v597, 8.507059e+37
  %v599 = vand.u32 %v587, 2147483648
  %v600 = vor.u32 1.1754944e-38, %v599
  %v601 = vsel %vm598, %v600, %v596
  %v602 = vmul.f32 1.0, %v601
  %603 = vmatpush.msra.mxu0 0.0
  %604 = vmatpush.msra.mxu0 0.0
  %605 = vmatpush.msra.mxu0 0.0
  %606 = vmatpush.msra.mxu0 0.0
  %607 = vmatpush.msra.mxu0 0.0
  %608 = vmatpush.msra.mxu0 0.0
  %609 = vmatpush.msra.mxu0 0.0
  %610 = vmatpush.msra.mxu0 0.0
  %611 = vmatpush.msra.mxu0 0.0
  %612 = vmatpush.msra.mxu0 0.0
  %613 = vmatpush.msra.mxu0 0.0
  %614 = vmatpush.msra.mxu0 0.0
  %615 = vmatpush.msra.mxu0 %v54
  %616 = vmatpush.msra.mxu0 %v53
  %617 = vmatpush.msra.mxu0 %v52
  %618 = vmatpush.msra.mxu0 %v51
  %619 = vmatmul.f32.gmra.mxu0 %v561
  %v620 = vpop.f32.mrf.mxu0
  %v621 = vadd.f32 0.0, %v620
  %622 = vdwg.mxu0
  %v623 = vadd.f32 %v557, %v621
  %v624 = vxor.u32 %v623, 2147483648
  %v625 = vmul.f32 %v624, 1.442695
  %v626 = vpow.pop %v625
  %v627 = vadd.f32 %v626, 1.0
  %v628 = vrcp.pop %v627
  %v629 = vmul.f32 %v627, %v628
  %v630 = vsub.f32 1.0, %v629
  %v631 = vmul.f32 %v628, %v630
  %v632 = vadd.f32 %v628, %v631
  %vm633 = vweird.f32 %v627
  %vm634 = vweird.f32 %v628
  %vm635 = vmor %vm633, %vm634
  %v636 = vsel %vm635, %v628, %v632
  %v637 = vand.u32 2147483647, %v627
  %vm638 = vcmp.eq.f32.partialorder %v637, 8.507059e+37
  %v639 = vand.u32 %v627, 2147483648
  %v640 = vor.u32 1.1754944e-38, %v639
  %v641 = vsel %vm638, %v640, %v636
  %v642 = vmul.f32 1.0, %v641
  %643 = vmatpush.msra.mxu0 0.0
  %644 = vmatpush.msra.mxu0 0.0
  %645 = vmatpush.msra.mxu0 0.0
  %646 = vmatpush.msra.mxu0 0.0
  %647 = vmatpush.msra.mxu0 0.0
  %648 = vmatpush.msra.mxu0 0.0
  %649 = vmatpush.msra.mxu0 0.0
  %650 = vmatpush.msra.mxu0 0.0
  %651 = vmatpush.msra.mxu0 0.0
  %652 = vmatpush.msra.mxu0 0.0
  %653 = vmatpush.msra.mxu0 0.0
  %654 = vmatpush.msra.mxu0 0.0
  %655 = vmatpush.msra.mxu0 %v58
  %656 = vmatpush.msra.mxu0 %v57
  %657 = vmatpush.msra.mxu0 %v56
  %658 = vmatpush.msra.mxu0 %v55
  %659 = vmatmul.f32.gmra.mxu0 %v561
  %v660 = vpop.f32.mrf.mxu0
  %v661 = vadd.f32 %v73, %v660
  %662 = vdwg.mxu0
  %v663 = vmul.f32 %v602, %v661
  %v664 = vadd.f32 %v559, %v663
  %v665 = vtanh.pop %v664
  %v666 = vsub.f32 1.0, %v642
  %v667 = vmul.f32 %v666, %v665
  %v668 = vmul.f32 %v642, %v430
  %v669 = vadd.f32 %v667, %v668
  %s670 = scalar_lea.vmem %s14, 4
  %671 = vst.msk [vmem:[%s670] sm:$0x3] %vm193, %v669
  %s672 = scalar_lea.vmem %s3, 10
  %v673 = vld [vmem:[%s672] sm:$0x3]
  %s674 = scalar_lea.vmem %s4, 10
  %v675 = vld [vmem:[%s674] sm:$0x3]
  %s676 = scalar_lea.vmem %s5, 10
  %v677 = vld [vmem:[%s676] sm:$0x3]
  %v678 = vsel %vm82, %v547, 0
  %680 = vmatpush.msra.mxu0 0.0
  %681 = vmatpush.msra.mxu0 0.0
  %682 = vmatpush.msra.mxu0 0.0
  %683 = vmatpush.msra.mxu0 0.0
  %684 = vmatpush.msra.mxu0 0.0
  %685 = vmatpush.msra.mxu0 0.0
  %686 = vmatpush.msra.mxu0 0.0
  %687 = vmatpush.msra.mxu0 0.0
  %688 = vmatpush.msra.mxu0 0.0
  %689 = vmatpush.msra.mxu0 0.0
  %690 = vmatpush.msra.mxu0 0.0
  %691 = vmatpush.msra.mxu0 0.0
  %692 = vmatpush.msra.mxu0 %v62
  %693 = vmatpush.msra.mxu0 %v61
  %694 = vmatpush.msra.mxu0 %v60
  %695 = vmatpush.msra.mxu0 %v59
  %696 = vmatmul.f32.gmra.mxu0 %v678
  %v697 = vpop.f32.mrf.mxu0
  %v698 = vadd.f32 0.0, %v697
  %699 = vdwg.mxu0
  %v700 = vadd.f32 %v673, %v698
  %v701 = vxor.u32 %v700, 2147483648
  %v702 = vmul.f32 %v701, 1.442695
  %v703 = vpow.pop %v702
  %v704 = vadd.f32 %v703, 1.0
  %v705 = vrcp.pop %v704
  %v706 = vmul.f32 %v704, %v705
  %v707 = vsub.f32 1.0, %v706
  %v708 = vmul.f32 %v705, %v707
  %v709 = vadd.f32 %v705, %v708
  %vm710 = vweird.f32 %v704
  %vm711 = vweird.f32 %v705
  %vm712 = vmor %vm710, %vm711
  %v713 = vsel %vm712, %v705, %v709
  %v714 = vand.u32 2147483647, %v704
  %vm715 = vcmp.eq.f32.partialorder %v714, 8.507059e+37
  %v716 = vand.u32 %v704, 2147483648
  %v717 = vor.u32 1.1754944e-38, %v716
  %v718 = vsel %vm715, %v717, %v713
  %v719 = vmul.f32 1.0, %v718
  %720 = vmatpush.msra.mxu0 0.0
  %721 = vmatpush.msra.mxu0 0.0
  %722 = vmatpush.msra.mxu0 0.0
  %723 = vmatpush.msra.mxu0 0.0
  %724 = vmatpush.msra.mxu0 0.0
  %725 = vmatpush.msra.mxu0 0.0
  %726 = vmatpush.msra.mxu0 0.0
  %727 = vmatpush.msra.mxu0 0.0
  %728 = vmatpush.msra.mxu0 0.0
  %729 = vmatpush.msra.mxu0 0.0
  %730 = vmatpush.msra.mxu0 0.0
  %731 = vmatpush.msra.mxu0 0.0
  %732 = vmatpush.msra.mxu0 %v66
  %733 = vmatpush.msra.mxu0 %v65
  %734 = vmatpush.msra.mxu0 %v64
  %735 = vmatpush.msra.mxu0 %v63
  %736 = vmatmul.f32.gmra.mxu0 %v678
  %v737 = vpop.f32.mrf.mxu0
  %v738 = vadd.f32 0.0, %v737
  %739 = vdwg.mxu0
  %v740 = vadd.f32 %v675, %v738
  %v741 = vxor.u32 %v740, 2147483648
  %v742 = vmul.f32 %v741, 1.442695
  %v743 = vpow.pop %v742
  %v744 = vadd.f32 %v743, 1.0
  %v745 = vrcp.pop %v744
  %v746 = vmul.f32 %v744, %v745
  %v747 = vsub.f32 1.0, %v746
  %v748 = vmul.f32 %v745, %v747
  %v749 = vadd.f32 %v745, %v748
  %vm750 = vweird.f32 %v744
  %vm751 = vweird.f32 %v745
  %vm752 = vmor %vm750, %vm751
  %v753 = vsel %vm752, %v745, %v749
  %v754 = vand.u32 2147483647, %v744
  %vm755 = vcmp.eq.f32.partialorder %v754, 8.507059e+37
  %v756 = vand.u32 %v744, 2147483648
  %v757 = vor.u32 1.1754944e-38, %v756
  %v758 = vsel %vm755, %v757, %v753
  %v759 = vmul.f32 1.0, %v758
  %760 = vmatpush.msra.mxu0 0.0
  %761 = vmatpush.msra.mxu0 0.0
  %762 = vmatpush.msra.mxu0 0.0
  %763 = vmatpush.msra.mxu0 0.0
  %764 = vmatpush.msra.mxu0 0.0
  %765 = vmatpush.msra.mxu0 0.0
  %766 = vmatpush.msra.mxu0 0.0
  %767 = vmatpush.msra.mxu0 0.0
  %768 = vmatpush.msra.mxu0 0.0
  %769 = vmatpush.msra.mxu0 0.0
  %770 = vmatpush.msra.mxu0 0.0
  %771 = vmatpush.msra.mxu0 0.0
  %772 = vmatpush.msra.mxu0 %v70
  %773 = vmatpush.msra.mxu0 %v69
  %774 = vmatpush.msra.mxu0 %v68
  %775 = vmatpush.msra.mxu0 %v67
  %776 = vmatmul.f32.gmra.mxu0 %v678
  %v777 = vpop.f32.mrf.mxu0
  %v778 = vadd.f32 %v77, %v777
  %779 = vdwg.mxu0
  %v780 = vmul.f32 %v719, %v778
  %v781 = vadd.f32 %v677, %v780
  %v782 = vtanh.pop %v781
  %v783 = vsub.f32 1.0, %v759
  %v784 = vmul.f32 %v783, %v782
  %v785 = vmul.f32 %v759, %v547
  %v786 = vadd.f32 %v784, %v785
  %788 = vrot.lane.b32.xlu0 %v786, 32
  %v789 = vpop.permute.xlu0 %788
  %s791 = scalar_lea.vmem %s14, 10
  %792 = vst.msk [vmem:[%s791] sm:$0x3] %vm313, %v789
  %s793 = scalar_lea.vmem %s0, 6
  %v794 = vld [vmem:[%s793] sm:$0x3]
  %s795 = scalar_lea.vmem %s1, 6
  %v796 = vld [vmem:[%s795] sm:$0x3]
  %s797 = scalar_lea.vmem %s2, 6
  %v798 = vld [vmem:[%s797] sm:$0x3]
  %v800 = vsel %vm82, %v669, 0
  %802 = vmatpush.msra.mxu0 0.0
  %803 = vmatpush.msra.mxu0 0.0
  %804 = vmatpush.msra.mxu0 0.0
  %805 = vmatpush.msra.mxu0 0.0
  %806 = vmatpush.msra.mxu0 0.0
  %807 = vmatpush.msra.mxu0 0.0
  %808 = vmatpush.msra.mxu0 0.0
  %809 = vmatpush.msra.mxu0 0.0
  %810 = vmatpush.msra.mxu0 0.0
  %811 = vmatpush.msra.mxu0 0.0
  %812 = vmatpush.msra.mxu0 0.0
  %813 = vmatpush.msra.mxu0 0.0
  %814 = vmatpush.msra.mxu0 %v50
  %815 = vmatpush.msra.mxu0 %v49
  %816 = vmatpush.msra.mxu0 %v48
  %817 = vmatpush.msra.mxu0 %v47
  %818 = vmatmul.f32.gmra.mxu0 %v800
  %v819 = vpop.f32.mrf.mxu0
  %v820 = vadd.f32 0.0, %v819
  %821 = vdwg.mxu0
  %v822 = vadd.f32 %v794, %v820
  %v823 = vxor.u32 %v822, 2147483648
  %v824 = vmul.f32 %v823, 1.442695
  %v825 = vpow.pop %v824
  %v826 = vadd.f32 %v825, 1.0
  %v827 = vrcp.pop %v826
  %v828 = vmul.f32 %v826, %v827
  %v829 = vsub.f32 1.0, %v828
  %v830 = vmul.f32 %v827, %v829
  %v831 = vadd.f32 %v827, %v830
  %vm832 = vweird.f32 %v826
  %vm833 = vweird.f32 %v827
  %vm834 = vmor %vm832, %vm833
  %v835 = vsel %vm834, %v827, %v831
  %v836 = vand.u32 2147483647, %v826
  %vm837 = vcmp.eq.f32.partialorder %v836, 8.507059e+37
  %v838 = vand.u32 %v826, 2147483648
  %v839 = vor.u32 1.1754944e-38, %v838
  %v840 = vsel %vm837, %v839, %v835
  %v841 = vmul.f32 1.0, %v840
  %842 = vmatpush.msra.mxu0 0.0
  %843 = vmatpush.msra.mxu0 0.0
  %844 = vmatpush.msra.mxu0 0.0
  %845 = vmatpush.msra.mxu0 0.0
  %846 = vmatpush.msra.mxu0 0.0
  %847 = vmatpush.msra.mxu0 0.0
  %848 = vmatpush.msra.mxu0 0.0
  %849 = vmatpush.msra.mxu0 0.0
  %850 = vmatpush.msra.mxu0 0.0
  %851 = vmatpush.msra.mxu0 0.0
  %852 = vmatpush.msra.mxu0 0.0
  %853 = vmatpush.msra.mxu0 0.0
  %854 = vmatpush.msra.mxu0 %v54
  %855 = vmatpush.msra.mxu0 %v53
  %856 = vmatpush.msra.mxu0 %v52
  %857 = vmatpush.msra.mxu0 %v51
  %858 = vmatmul.f32.gmra.mxu0 %v800
  %v859 = vpop.f32.mrf.mxu0
  %v860 = vadd.f32 0.0, %v859
  %861 = vdwg.mxu0
  %v862 = vadd.f32 %v796, %v860
  %v863 = vxor.u32 %v862, 2147483648
  %v864 = vmul.f32 %v863, 1.442695
  %v865 = vpow.pop %v864
  %v866 = vadd.f32 %v865, 1.0
  %v867 = vrcp.pop %v866
  %v868 = vmul.f32 %v866, %v867
  %v869 = vsub.f32 1.0, %v868
  %v870 = vmul.f32 %v867, %v869
  %v871 = vadd.f32 %v867, %v870
  %vm872 = vweird.f32 %v866
  %vm873 = vweird.f32 %v867
  %vm874 = vmor %vm872, %vm873
  %v875 = vsel %vm874, %v867, %v871
  %v876 = vand.u32 2147483647, %v866
  %vm877 = vcmp.eq.f32.partialorder %v876, 8.507059e+37
  %v878 = vand.u32 %v866, 2147483648
  %v879 = vor.u32 1.1754944e-38, %v878
  %v880 = vsel %vm877, %v879, %v875
  %v881 = vmul.f32 1.0, %v880
  %882 = vmatpush.msra.mxu0 0.0
  %883 = vmatpush.msra.mxu0 0.0
  %884 = vmatpush.msra.mxu0 0.0
  %885 = vmatpush.msra.mxu0 0.0
  %886 = vmatpush.msra.mxu0 0.0
  %887 = vmatpush.msra.mxu0 0.0
  %888 = vmatpush.msra.mxu0 0.0
  %889 = vmatpush.msra.mxu0 0.0
  %890 = vmatpush.msra.mxu0 0.0
  %891 = vmatpush.msra.mxu0 0.0
  %892 = vmatpush.msra.mxu0 0.0
  %893 = vmatpush.msra.mxu0 0.0
  %894 = vmatpush.msra.mxu0 %v58
  %895 = vmatpush.msra.mxu0 %v57
  %896 = vmatpush.msra.mxu0 %v56
  %897 = vmatpush.msra.mxu0 %v55
  %898 = vmatmul.f32.gmra.mxu0 %v800
  %v899 = vpop.f32.mrf.mxu0
  %v900 = vadd.f32 %v73, %v899
  %901 = vdwg.mxu0
  %v902 = vmul.f32 %v841, %v900
  %v903 = vadd.f32 %v798, %v902
  %v904 = vtanh.pop %v903
  %v905 = vsub.f32 1.0, %v881
  %v906 = vmul.f32 %v905, %v904
  %v907 = vmul.f32 %v881, %v669
  %v908 = vadd.f32 %v906, %v907
  %s909 = scalar_lea.vmem %s14, 6
  %910 = vst.msk [vmem:[%s909] sm:$0x3] %vm193, %v908
  %s911 = scalar_lea.vmem %s3, 8
  %v912 = vld [vmem:[%s911] sm:$0x3]
  %s913 = scalar_lea.vmem %s4, 8
  %v914 = vld [vmem:[%s913] sm:$0x3]
  %s915 = scalar_lea.vmem %s5, 8
  %v916 = vld [vmem:[%s915] sm:$0x3]
  %v917 = vsel %vm82, %v786, 0
  %919 = vmatpush.msra.mxu0 0.0
  %920 = vmatpush.msra.mxu0 0.0
  %921 = vmatpush.msra.mxu0 0.0
  %922 = vmatpush.msra.mxu0 0.0
  %923 = vmatpush.msra.mxu0 0.0
  %924 = vmatpush.msra.mxu0 0.0
  %925 = vmatpush.msra.mxu0 0.0
  %926 = vmatpush.msra.mxu0 0.0
  %927 = vmatpush.msra.mxu0 0.0
  %928 = vmatpush.msra.mxu0 0.0
  %929 = vmatpush.msra.mxu0 0.0
  %930 = vmatpush.msra.mxu0 0.0
  %931 = vmatpush.msra.mxu0 %v62
  %932 = vmatpush.msra.mxu0 %v61
  %933 = vmatpush.msra.mxu0 %v60
  %934 = vmatpush.msra.mxu0 %v59
  %935 = vmatmul.f32.gmra.mxu0 %v917
  %v936 = vpop.f32.mrf.mxu0
  %v937 = vadd.f32 0.0, %v936
  %938 = vdwg.mxu0
  %v939 = vadd.f32 %v912, %v937
  %v940 = vxor.u32 %v939, 2147483648
  %v941 = vmul.f32 %v940, 1.442695
  %v942 = vpow.pop %v941
  %v943 = vadd.f32 %v942, 1.0
  %v944 = vrcp.pop %v943
  %v945 = vmul.f32 %v943, %v944
  %v946 = vsub.f32 1.0, %v945
  %v947 = vmul.f32 %v944, %v946
  %v948 = vadd.f32 %v944, %v947
  %vm949 = vweird.f32 %v943
  %vm950 = vweird.f32 %v944
  %vm951 = vmor %vm949, %vm950
  %v952 = vsel %vm951, %v944, %v948
  %v953 = vand.u32 2147483647, %v943
  %vm954 = vcmp.eq.f32.partialorder %v953, 8.507059e+37
  %v955 = vand.u32 %v943, 2147483648
  %v956 = vor.u32 1.1754944e-38, %v955
  %v957 = vsel %vm954, %v956, %v952
  %v958 = vmul.f32 1.0, %v957
  %959 = vmatpush.msra.mxu0 0.0
  %960 = vmatpush.msra.mxu0 0.0
  %961 = vmatpush.msra.mxu0 0.0
  %962 = vmatpush.msra.mxu0 0.0
  %963 = vmatpush.msra.mxu0 0.0
  %964 = vmatpush.msra.mxu0 0.0
  %965 = vmatpush.msra.mxu0 0.0
  %966 = vmatpush.msra.mxu0 0.0
  %967 = vmatpush.msra.mxu0 0.0
  %968 = vmatpush.msra.mxu0 0.0
  %969 = vmatpush.msra.mxu0 0.0
  %970 = vmatpush.msra.mxu0 0.0
  %971 = vmatpush.msra.mxu0 %v66
  %972 = vmatpush.msra.mxu0 %v65
  %973 = vmatpush.msra.mxu0 %v64
  %974 = vmatpush.msra.mxu0 %v63
  %975 = vmatmul.f32.gmra.mxu0 %v917
  %v976 = vpop.f32.mrf.mxu0
  %v977 = vadd.f32 0.0, %v976
  %978 = vdwg.mxu0
  %v979 = vadd.f32 %v914, %v977
  %v980 = vxor.u32 %v979, 2147483648
  %v981 = vmul.f32 %v980, 1.442695
  %v982 = vpow.pop %v981
  %v983 = vadd.f32 %v982, 1.0
  %v984 = vrcp.pop %v983
  %v985 = vmul.f32 %v983, %v984
  %v986 = vsub.f32 1.0, %v985
  %v987 = vmul.f32 %v984, %v986
  %v988 = vadd.f32 %v984, %v987
  %vm989 = vweird.f32 %v983
  %vm990 = vweird.f32 %v984
  %vm991 = vmor %vm989, %vm990
  %v992 = vsel %vm991, %v984, %v988
  %v993 = vand.u32 2147483647, %v983
  %vm994 = vcmp.eq.f32.partialorder %v993, 8.507059e+37
  %v995 = vand.u32 %v983, 2147483648
  %v996 = vor.u32 1.1754944e-38, %v995
  %v997 = vsel %vm994, %v996, %v992
  %v998 = vmul.f32 1.0, %v997
  %999 = vmatpush.msra.mxu0 0.0
  %1000 = vmatpush.msra.mxu0 0.0
  %1001 = vmatpush.msra.mxu0 0.0
  %1002 = vmatpush.msra.mxu0 0.0
  %1003 = vmatpush.msra.mxu0 0.0
  %1004 = vmatpush.msra.mxu0 0.0
  %1005 = vmatpush.msra.mxu0 0.0
  %1006 = vmatpush.msra.mxu0 0.0
  %1007 = vmatpush.msra.mxu0 0.0
  %1008 = vmatpush.msra.mxu0 0.0
  %1009 = vmatpush.msra.mxu0 0.0
  %1010 = vmatpush.msra.mxu0 0.0
  %1011 = vmatpush.msra.mxu0 %v70
  %1012 = vmatpush.msra.mxu0 %v69
  %1013 = vmatpush.msra.mxu0 %v68
  %1014 = vmatpush.msra.mxu0 %v67
  %1015 = vmatmul.f32.gmra.mxu0 %v917
  %v1016 = vpop.f32.mrf.mxu0
  %v1017 = vadd.f32 %v77, %v1016
  %1018 = vdwg.mxu0
  %v1019 = vmul.f32 %v958, %v1017
  %v1020 = vadd.f32 %v916, %v1019
  %v1021 = vtanh.pop %v1020
  %v1022 = vsub.f32 1.0, %v998
  %v1023 = vmul.f32 %v1022, %v1021
  %v1024 = vmul.f32 %v998, %v786
  %v1025 = vadd.f32 %v1023, %v1024
  %1027 = vrot.lane.b32.xlu0 %v1025, 32
  %v1028 = vpop.permute.xlu0 %1027
  %s1030 = scalar_lea.vmem %s14, 8
  %1031 = vst.msk [vmem:[%s1030] sm:$0x3] %vm313, %v1028
  %s1032 = scalar_lea.vmem %s0, 8
  %v1033 = vld [vmem:[%s1032] sm:$0x3]
  %s1034 = scalar_lea.vmem %s1, 8
  %v1035 = vld [vmem:[%s1034] sm:$0x3]
  %s1036 = scalar_lea.vmem %s2, 8
  %v1037 = vld [vmem:[%s1036] sm:$0x3]
  %v1039 = vsel %vm82, %v908, 0
  %1041 = vmatpush.msra.mxu0 0.0
  %1042 = vmatpush.msra.mxu0 0.0
  %1043 = vmatpush.msra.mxu0 0.0
  %1044 = vmatpush.msra.mxu0 0.0
  %1045 = vmatpush.msra.mxu0 0.0
  %1046 = vmatpush.msra.mxu0 0.0
  %1047 = vmatpush.msra.mxu0 0.0
  %1048 = vmatpush.msra.mxu0 0.0
  %1049 = vmatpush.msra.mxu0 0.0
  %1050 = vmatpush.msra.mxu0 0.0
  %1051 = vmatpush.msra.mxu0 0.0
  %1052 = vmatpush.msra.mxu0 0.0
  %1053 = vmatpush.msra.mxu0 %v50
  %1054 = vmatpush.msra.mxu0 %v49
  %1055 = vmatpush.msra.mxu0 %v48
  %1056 = vmatpush.msra.mxu0 %v47
  %1057 = vmatmul.f32.gmra.mxu0 %v1039
  %v1058 = vpop.f32.mrf.mxu0
  %v1059 = vadd.f32 0.0, %v1058
  %1060 = vdwg.mxu0
  %v1061 = vadd.f32 %v1033, %v1059
  %v1062 = vxor.u32 %v1061, 2147483648
  %v1063 = vmul.f32 %v1062, 1.442695
  %v1064 = vpow.pop %v1063
  %v1065 = vadd.f32 %v1064, 1.0
  %v1066 = vrcp.pop %v1065
  %v1067 = vmul.f32 %v1065, %v1066
  %v1068 = vsub.f32 1.0, %v1067
  %v1069 = vmul.f32 %v1066, %v1068
  %v1070 = vadd.f32 %v1066, %v1069
  %vm1071 = vweird.f32 %v1065
  %vm1072 = vweird.f32 %v1066
  %vm1073 = vmor %vm1071, %vm1072
  %v1074 = vsel %vm1073, %v1066, %v1070
  %v1075 = vand.u32 2147483647, %v1065
  %vm1076 = vcmp.eq.f32.partialorder %v1075, 8.507059e+37
  %v1077 = vand.u32 %v1065, 2147483648
  %v1078 = vor.u32 1.1754944e-38, %v1077
  %v1079 = vsel %vm1076, %v1078, %v1074
  %v1080 = vmul.f32 1.0, %v1079
  %1081 = vmatpush.msra.mxu0 0.0
  %1082 = vmatpush.msra.mxu0 0.0
  %1083 = vmatpush.msra.mxu0 0.0
  %1084 = vmatpush.msra.mxu0 0.0
  %1085 = vmatpush.msra.mxu0 0.0
  %1086 = vmatpush.msra.mxu0 0.0
  %1087 = vmatpush.msra.mxu0 0.0
  %1088 = vmatpush.msra.mxu0 0.0
  %1089 = vmatpush.msra.mxu0 0.0
  %1090 = vmatpush.msra.mxu0 0.0
  %1091 = vmatpush.msra.mxu0 0.0
  %1092 = vmatpush.msra.mxu0 0.0
  %1093 = vmatpush.msra.mxu0 %v54
  %1094 = vmatpush.msra.mxu0 %v53
  %1095 = vmatpush.msra.mxu0 %v52
  %1096 = vmatpush.msra.mxu0 %v51
  %1097 = vmatmul.f32.gmra.mxu0 %v1039
  %v1098 = vpop.f32.mrf.mxu0
  %v1099 = vadd.f32 0.0, %v1098
  %1100 = vdwg.mxu0
  %v1101 = vadd.f32 %v1035, %v1099
  %v1102 = vxor.u32 %v1101, 2147483648
  %v1103 = vmul.f32 %v1102, 1.442695
  %v1104 = vpow.pop %v1103
  %v1105 = vadd.f32 %v1104, 1.0
  %v1106 = vrcp.pop %v1105
  %v1107 = vmul.f32 %v1105, %v1106
  %v1108 = vsub.f32 1.0, %v1107
  %v1109 = vmul.f32 %v1106, %v1108
  %v1110 = vadd.f32 %v1106, %v1109
  %vm1111 = vweird.f32 %v1105
  %vm1112 = vweird.f32 %v1106
  %vm1113 = vmor %vm1111, %vm1112
  %v1114 = vsel %vm1113, %v1106, %v1110
  %v1115 = vand.u32 2147483647, %v1105
  %vm1116 = vcmp.eq.f32.partialorder %v1115, 8.507059e+37
  %v1117 = vand.u32 %v1105, 2147483648
  %v1118 = vor.u32 1.1754944e-38, %v1117
  %v1119 = vsel %vm1116, %v1118, %v1114
  %v1120 = vmul.f32 1.0, %v1119
  %1121 = vmatpush.msra.mxu0 0.0
  %1122 = vmatpush.msra.mxu0 0.0
  %1123 = vmatpush.msra.mxu0 0.0
  %1124 = vmatpush.msra.mxu0 0.0
  %1125 = vmatpush.msra.mxu0 0.0
  %1126 = vmatpush.msra.mxu0 0.0
  %1127 = vmatpush.msra.mxu0 0.0
  %1128 = vmatpush.msra.mxu0 0.0
  %1129 = vmatpush.msra.mxu0 0.0
  %1130 = vmatpush.msra.mxu0 0.0
  %1131 = vmatpush.msra.mxu0 0.0
  %1132 = vmatpush.msra.mxu0 0.0
  %1133 = vmatpush.msra.mxu0 %v58
  %1134 = vmatpush.msra.mxu0 %v57
  %1135 = vmatpush.msra.mxu0 %v56
  %1136 = vmatpush.msra.mxu0 %v55
  %1137 = vmatmul.f32.gmra.mxu0 %v1039
  %v1138 = vpop.f32.mrf.mxu0
  %v1139 = vadd.f32 %v73, %v1138
  %1140 = vdwg.mxu0
  %v1141 = vmul.f32 %v1080, %v1139
  %v1142 = vadd.f32 %v1037, %v1141
  %v1143 = vtanh.pop %v1142
  %v1144 = vsub.f32 1.0, %v1120
  %v1145 = vmul.f32 %v1144, %v1143
  %v1146 = vmul.f32 %v1120, %v908
  %v1147 = vadd.f32 %v1145, %v1146
  %1148 = vst.msk [vmem:[%s1030] sm:$0x3] %vm193, %v1147
  %s1149 = scalar_lea.vmem %s3, 6
  %v1150 = vld [vmem:[%s1149] sm:$0x3]
  %s1151 = scalar_lea.vmem %s4, 6
  %v1152 = vld [vmem:[%s1151] sm:$0x3]
  %s1153 = scalar_lea.vmem %s5, 6
  %v1154 = vld [vmem:[%s1153] sm:$0x3]
  %v1155 = vsel %vm82, %v1025, 0
  %1157 = vmatpush.msra.mxu0 0.0
  %1158 = vmatpush.msra.mxu0 0.0
  %1159 = vmatpush.msra.mxu0 0.0
  %1160 = vmatpush.msra.mxu0 0.0
  %1161 = vmatpush.msra.mxu0 0.0
  %1162 = vmatpush.msra.mxu0 0.0
  %1163 = vmatpush.msra.mxu0 0.0
  %1164 = vmatpush.msra.mxu0 0.0
  %1165 = vmatpush.msra.mxu0 0.0
  %1166 = vmatpush.msra.mxu0 0.0
  %1167 = vmatpush.msra.mxu0 0.0
  %1168 = vmatpush.msra.mxu0 0.0
  %1169 = vmatpush.msra.mxu0 %v62
  %1170 = vmatpush.msra.mxu0 %v61
  %1171 = vmatpush.msra.mxu0 %v60
  %1172 = vmatpush.msra.mxu0 %v59
  %1173 = vmatmul.f32.gmra.mxu0 %v1155
  %v1174 = vpop.f32.mrf.mxu0
  %v1175 = vadd.f32 0.0, %v1174
  %1176 = vdwg.mxu0
  %v1177 = vadd.f32 %v1150, %v1175
  %v1178 = vxor.u32 %v1177, 2147483648
  %v1179 = vmul.f32 %v1178, 1.442695
  %v1180 = vpow.pop %v1179
  %v1181 = vadd.f32 %v1180, 1.0
  %v1182 = vrcp.pop %v1181
  %v1183 = vmul.f32 %v1181, %v1182
  %v1184 = vsub.f32 1.0, %v1183
  %v1185 = vmul.f32 %v1182, %v1184
  %v1186 = vadd.f32 %v1182, %v1185
  %vm1187 = vweird.f32 %v1181
  %vm1188 = vweird.f32 %v1182
  %vm1189 = vmor %vm1187, %vm1188
  %v1190 = vsel %vm1189, %v1182, %v1186
  %v1191 = vand.u32 2147483647, %v1181
  %vm1192 = vcmp.eq.f32.partialorder %v1191, 8.507059e+37
  %v1193 = vand.u32 %v1181, 2147483648
  %v1194 = vor.u32 1.1754944e-38, %v1193
  %v1195 = vsel %vm1192, %v1194, %v1190
  %v1196 = vmul.f32 1.0, %v1195
  %1197 = vmatpush.msra.mxu0 0.0
  %1198 = vmatpush.msra.mxu0 0.0
  %1199 = vmatpush.msra.mxu0 0.0
  %1200 = vmatpush.msra.mxu0 0.0
  %1201 = vmatpush.msra.mxu0 0.0
  %1202 = vmatpush.msra.mxu0 0.0
  %1203 = vmatpush.msra.mxu0 0.0
  %1204 = vmatpush.msra.mxu0 0.0
  %1205 = vmatpush.msra.mxu0 0.0
  %1206 = vmatpush.msra.mxu0 0.0
  %1207 = vmatpush.msra.mxu0 0.0
  %1208 = vmatpush.msra.mxu0 0.0
  %1209 = vmatpush.msra.mxu0 %v66
  %1210 = vmatpush.msra.mxu0 %v65
  %1211 = vmatpush.msra.mxu0 %v64
  %1212 = vmatpush.msra.mxu0 %v63
  %1213 = vmatmul.f32.gmra.mxu0 %v1155
  %v1214 = vpop.f32.mrf.mxu0
  %v1215 = vadd.f32 0.0, %v1214
  %1216 = vdwg.mxu0
  %v1217 = vadd.f32 %v1152, %v1215
  %v1218 = vxor.u32 %v1217, 2147483648
  %v1219 = vmul.f32 %v1218, 1.442695
  %v1220 = vpow.pop %v1219
  %v1221 = vadd.f32 %v1220, 1.0
  %v1222 = vrcp.pop %v1221
  %v1223 = vmul.f32 %v1221, %v1222
  %v1224 = vsub.f32 1.0, %v1223
  %v1225 = vmul.f32 %v1222, %v1224
  %v1226 = vadd.f32 %v1222, %v1225
  %vm1227 = vweird.f32 %v1221
  %vm1228 = vweird.f32 %v1222
  %vm1229 = vmor %vm1227, %vm1228
  %v1230 = vsel %vm1229, %v1222, %v1226
  %v1231 = vand.u32 2147483647, %v1221
  %vm1232 = vcmp.eq.f32.partialorder %v1231, 8.507059e+37
  %v1233 = vand.u32 %v1221, 2147483648
  %v1234 = vor.u32 1.1754944e-38, %v1233
  %v1235 = vsel %vm1232, %v1234, %v1230
  %v1236 = vmul.f32 1.0, %v1235
  %1237 = vmatpush.msra.mxu0 0.0
  %1238 = vmatpush.msra.mxu0 0.0
  %1239 = vmatpush.msra.mxu0 0.0
  %1240 = vmatpush.msra.mxu0 0.0
  %1241 = vmatpush.msra.mxu0 0.0
  %1242 = vmatpush.msra.mxu0 0.0
  %1243 = vmatpush.msra.mxu0 0.0
  %1244 = vmatpush.msra.mxu0 0.0
  %1245 = vmatpush.msra.mxu0 0.0
  %1246 = vmatpush.msra.mxu0 0.0
  %1247 = vmatpush.msra.mxu0 0.0
  %1248 = vmatpush.msra.mxu0 0.0
  %1249 = vmatpush.msra.mxu0 %v70
  %1250 = vmatpush.msra.mxu0 %v69
  %1251 = vmatpush.msra.mxu0 %v68
  %1252 = vmatpush.msra.mxu0 %v67
  %1253 = vmatmul.f32.gmra.mxu0 %v1155
  %v1254 = vpop.f32.mrf.mxu0
  %v1255 = vadd.f32 %v77, %v1254
  %1256 = vdwg.mxu0
  %v1257 = vmul.f32 %v1196, %v1255
  %v1258 = vadd.f32 %v1154, %v1257
  %v1259 = vtanh.pop %v1258
  %v1260 = vsub.f32 1.0, %v1236
  %v1261 = vmul.f32 %v1260, %v1259
  %v1262 = vmul.f32 %v1236, %v1025
  %v1263 = vadd.f32 %v1261, %v1262
  %1265 = vrot.lane.b32.xlu0 %v1263, 32
  %v1266 = vpop.permute.xlu0 %1265
  %1268 = vst.msk [vmem:[%s909] sm:$0x3] %vm313, %v1266
  %s1269 = scalar_lea.vmem %s0, 10
  %v1270 = vld [vmem:[%s1269] sm:$0x3]
  %s1271 = scalar_lea.vmem %s1, 10
  %v1272 = vld [vmem:[%s1271] sm:$0x3]
  %s1273 = scalar_lea.vmem %s2, 10
  %v1274 = vld [vmem:[%s1273] sm:$0x3]
  %v1276 = vsel %vm82, %v1147, 0
  %1278 = vmatpush.msra.mxu0 0.0
  %1279 = vmatpush.msra.mxu0 0.0
  %1280 = vmatpush.msra.mxu0 0.0
  %1281 = vmatpush.msra.mxu0 0.0
  %1282 = vmatpush.msra.mxu0 0.0
  %1283 = vmatpush.msra.mxu0 0.0
  %1284 = vmatpush.msra.mxu0 0.0
  %1285 = vmatpush.msra.mxu0 0.0
  %1286 = vmatpush.msra.mxu0 0.0
  %1287 = vmatpush.msra.mxu0 0.0
  %1288 = vmatpush.msra.mxu0 0.0
  %1289 = vmatpush.msra.mxu0 0.0
  %1290 = vmatpush.msra.mxu0 %v50
  %1291 = vmatpush.msra.mxu0 %v49
  %1292 = vmatpush.msra.mxu0 %v48
  %1293 = vmatpush.msra.mxu0 %v47
  %1294 = vmatmul.f32.gmra.mxu0 %v1276
  %v1295 = vpop.f32.mrf.mxu0
  %v1296 = vadd.f32 0.0, %v1295
  %1297 = vdwg.mxu0
  %v1298 = vadd.f32 %v1270, %v1296
  %v1299 = vxor.u32 %v1298, 2147483648
  %v1300 = vmul.f32 %v1299, 1.442695
  %v1301 = vpow.pop %v1300
  %v1302 = vadd.f32 %v1301, 1.0
  %v1303 = vrcp.pop %v1302
  %v1304 = vmul.f32 %v1302, %v1303
  %v1305 = vsub.f32 1.0, %v1304
  %v1306 = vmul.f32 %v1303, %v1305
  %v1307 = vadd.f32 %v1303, %v1306
  %vm1308 = vweird.f32 %v1302
  %vm1309 = vweird.f32 %v1303
  %vm1310 = vmor %vm1308, %vm1309
  %v1311 = vsel %vm1310, %v1303, %v1307
  %v1312 = vand.u32 2147483647, %v1302
  %vm1313 = vcmp.eq.f32.partialorder %v1312, 8.507059e+37
  %v1314 = vand.u32 %v1302, 2147483648
  %v1315 = vor.u32 1.1754944e-38, %v1314
  %v1316 = vsel %vm1313, %v1315, %v1311
  %v1317 = vmul.f32 1.0, %v1316
  %1318 = vmatpush.msra.mxu0 0.0
  %1319 = vmatpush.msra.mxu0 0.0
  %1320 = vmatpush.msra.mxu0 0.0
  %1321 = vmatpush.msra.mxu0 0.0
  %1322 = vmatpush.msra.mxu0 0.0
  %1323 = vmatpush.msra.mxu0 0.0
  %1324 = vmatpush.msra.mxu0 0.0
  %1325 = vmatpush.msra.mxu0 0.0
  %1326 = vmatpush.msra.mxu0 0.0
  %1327 = vmatpush.msra.mxu0 0.0
  %1328 = vmatpush.msra.mxu0 0.0
  %1329 = vmatpush.msra.mxu0 0.0
  %1330 = vmatpush.msra.mxu0 %v54
  %1331 = vmatpush.msra.mxu0 %v53
  %1332 = vmatpush.msra.mxu0 %v52
  %1333 = vmatpush.msra.mxu0 %v51
  %1334 = vmatmul.f32.gmra.mxu0 %v1276
  %v1335 = vpop.f32.mrf.mxu0
  %v1336 = vadd.f32 0.0, %v1335
  %1337 = vdwg.mxu0
  %v1338 = vadd.f32 %v1272, %v1336
  %v1339 = vxor.u32 %v1338, 2147483648
  %v1340 = vmul.f32 %v1339, 1.442695
  %v1341 = vpow.pop %v1340
  %v1342 = vadd.f32 %v1341, 1.0
  %v1343 = vrcp.pop %v1342
  %v1344 = vmul.f32 %v1342, %v1343
  %v1345 = vsub.f32 1.0, %v1344
  %v1346 = vmul.f32 %v1343, %v1345
  %v1347 = vadd.f32 %v1343, %v1346
  %vm1348 = vweird.f32 %v1342
  %vm1349 = vweird.f32 %v1343
  %vm1350 = vmor %vm1348, %vm1349
  %v1351 = vsel %vm1350, %v1343, %v1347
  %v1352 = vand.u32 2147483647, %v1342
  %vm1353 = vcmp.eq.f32.partialorder %v1352, 8.507059e+37
  %v1354 = vand.u32 %v1342, 2147483648
  %v1355 = vor.u32 1.1754944e-38, %v1354
  %v1356 = vsel %vm1353, %v1355, %v1351
  %v1357 = vmul.f32 1.0, %v1356
  %1358 = vmatpush.msra.mxu0 0.0
  %1359 = vmatpush.msra.mxu0 0.0
  %1360 = vmatpush.msra.mxu0 0.0
  %1361 = vmatpush.msra.mxu0 0.0
  %1362 = vmatpush.msra.mxu0 0.0
  %1363 = vmatpush.msra.mxu0 0.0
  %1364 = vmatpush.msra.mxu0 0.0
  %1365 = vmatpush.msra.mxu0 0.0
  %1366 = vmatpush.msra.mxu0 0.0
  %1367 = vmatpush.msra.mxu0 0.0
  %1368 = vmatpush.msra.mxu0 0.0
  %1369 = vmatpush.msra.mxu0 0.0
  %1370 = vmatpush.msra.mxu0 %v58
  %1371 = vmatpush.msra.mxu0 %v57
  %1372 = vmatpush.msra.mxu0 %v56
  %1373 = vmatpush.msra.mxu0 %v55
  %1374 = vmatmul.f32.gmra.mxu0 %v1276
  %v1375 = vpop.f32.mrf.mxu0
  %v1376 = vadd.f32 %v73, %v1375
  %1377 = vdwg.mxu0
  %v1378 = vmul.f32 %v1317, %v1376
  %v1379 = vadd.f32 %v1274, %v1378
  %v1380 = vtanh.pop %v1379
  %v1381 = vsub.f32 1.0, %v1357
  %v1382 = vmul.f32 %v1381, %v1380
  %v1383 = vmul.f32 %v1357, %v1147
  %v1384 = vadd.f32 %v1382, %v1383
  %1385 = vst.msk [vmem:[%s791] sm:$0x3] %vm193, %v1384
  %s1386 = scalar_lea.vmem %s3, 4
  %v1387 = vld [vmem:[%s1386] sm:$0x3]
  %s1388 = scalar_lea.vmem %s4, 4
  %v1389 = vld [vmem:[%s1388] sm:$0x3]
  %s1390 = scalar_lea.vmem %s5, 4
  %v1391 = vld [vmem:[%s1390] sm:$0x3]
  %v1392 = vsel %vm82, %v1263, 0
  %1394 = vmatpush.msra.mxu0 0.0
  %1395 = vmatpush.msra.mxu0 0.0
  %1396 = vmatpush.msra.mxu0 0.0
  %1397 = vmatpush.msra.mxu0 0.0
  %1398 = vmatpush.msra.mxu0 0.0
  %1399 = vmatpush.msra.mxu0 0.0
  %1400 = vmatpush.msra.mxu0 0.0
  %1401 = vmatpush.msra.mxu0 0.0
  %1402 = vmatpush.msra.mxu0 0.0
  %1403 = vmatpush.msra.mxu0 0.0
  %1404 = vmatpush.msra.mxu0 0.0
  %1405 = vmatpush.msra.mxu0 0.0
  %1406 = vmatpush.msra.mxu0 %v62
  %1407 = vmatpush.msra.mxu0 %v61
  %1408 = vmatpush.msra.mxu0 %v60
  %1409 = vmatpush.msra.mxu0 %v59
  %1410 = vmatmul.f32.gmra.mxu0 %v1392
  %v1411 = vpop.f32.mrf.mxu0
  %v1412 = vadd.f32 0.0, %v1411
  %1413 = vdwg.mxu0
  %v1414 = vadd.f32 %v1387, %v1412
  %v1415 = vxor.u32 %v1414, 2147483648
  %v1416 = vmul.f32 %v1415, 1.442695
  %v1417 = vpow.pop %v1416
  %v1418 = vadd.f32 %v1417, 1.0
  %v1419 = vrcp.pop %v1418
  %v1420 = vmul.f32 %v1418, %v1419
  %v1421 = vsub.f32 1.0, %v1420
  %v1422 = vmul.f32 %v1419, %v1421
  %v1423 = vadd.f32 %v1419, %v1422
  %vm1424 = vweird.f32 %v1418
  %vm1425 = vweird.f32 %v1419
  %vm1426 = vmor %vm1424, %vm1425
  %v1427 = vsel %vm1426, %v1419, %v1423
  %v1428 = vand.u32 2147483647, %v1418
  %vm1429 = vcmp.eq.f32.partialorder %v1428, 8.507059e+37
  %v1430 = vand.u32 %v1418, 2147483648
  %v1431 = vor.u32 1.1754944e-38, %v1430
  %v1432 = vsel %vm1429, %v1431, %v1427
  %v1433 = vmul.f32 1.0, %v1432
  %1434 = vmatpush.msra.mxu0 0.0
  %1435 = vmatpush.msra.mxu0 0.0
  %1436 = vmatpush.msra.mxu0 0.0
  %1437 = vmatpush.msra.mxu0 0.0
  %1438 = vmatpush.msra.mxu0 0.0
  %1439 = vmatpush.msra.mxu0 0.0
  %1440 = vmatpush.msra.mxu0 0.0
  %1441 = vmatpush.msra.mxu0 0.0
  %1442 = vmatpush.msra.mxu0 0.0
  %1443 = vmatpush.msra.mxu0 0.0
  %1444 = vmatpush.msra.mxu0 0.0
  %1445 = vmatpush.msra.mxu0 0.0
  %1446 = vmatpush.msra.mxu0 %v66
  %1447 = vmatpush.msra.mxu0 %v65
  %1448 = vmatpush.msra.mxu0 %v64
  %1449 = vmatpush.msra.mxu0 %v63
  %1450 = vmatmul.f32.gmra.mxu0 %v1392
  %v1451 = vpop.f32.mrf.mxu0
  %v1452 = vadd.f32 0.0, %v1451
  %1453 = vdwg.mxu0
  %v1454 = vadd.f32 %v1389, %v1452
  %v1455 = vxor.u32 %v1454, 2147483648
  %v1456 = vmul.f32 %v1455, 1.442695
  %v1457 = vpow.pop %v1456
  %v1458 = vadd.f32 %v1457, 1.0
  %v1459 = vrcp.pop %v1458
  %v1460 = vmul.f32 %v1458, %v1459
  %v1461 = vsub.f32 1.0, %v1460
  %v1462 = vmul.f32 %v1459, %v1461
  %v1463 = vadd.f32 %v1459, %v1462
  %vm1464 = vweird.f32 %v1458
  %vm1465 = vweird.f32 %v1459
  %vm1466 = vmor %vm1464, %vm1465
  %v1467 = vsel %vm1466, %v1459, %v1463
  %v1468 = vand.u32 2147483647, %v1458
  %vm1469 = vcmp.eq.f32.partialorder %v1468, 8.507059e+37
  %v1470 = vand.u32 %v1458, 2147483648
  %v1471 = vor.u32 1.1754944e-38, %v1470
  %v1472 = vsel %vm1469, %v1471, %v1467
  %v1473 = vmul.f32 1.0, %v1472
  %1474 = vmatpush.msra.mxu0 0.0
  %1475 = vmatpush.msra.mxu0 0.0
  %1476 = vmatpush.msra.mxu0 0.0
  %1477 = vmatpush.msra.mxu0 0.0
  %1478 = vmatpush.msra.mxu0 0.0
  %1479 = vmatpush.msra.mxu0 0.0
  %1480 = vmatpush.msra.mxu0 0.0
  %1481 = vmatpush.msra.mxu0 0.0
  %1482 = vmatpush.msra.mxu0 0.0
  %1483 = vmatpush.msra.mxu0 0.0
  %1484 = vmatpush.msra.mxu0 0.0
  %1485 = vmatpush.msra.mxu0 0.0
  %1486 = vmatpush.msra.mxu0 %v70
  %1487 = vmatpush.msra.mxu0 %v69
  %1488 = vmatpush.msra.mxu0 %v68
  %1489 = vmatpush.msra.mxu0 %v67
  %1490 = vmatmul.f32.gmra.mxu0 %v1392
  %v1491 = vpop.f32.mrf.mxu0
  %v1492 = vadd.f32 %v77, %v1491
  %1493 = vdwg.mxu0
  %v1494 = vmul.f32 %v1433, %v1492
  %v1495 = vadd.f32 %v1391, %v1494
  %v1496 = vtanh.pop %v1495
  %v1497 = vsub.f32 1.0, %v1473
  %v1498 = vmul.f32 %v1497, %v1496
  %v1499 = vmul.f32 %v1473, %v1263
  %v1500 = vadd.f32 %v1498, %v1499
  %1502 = vrot.lane.b32.xlu0 %v1500, 32
  %v1503 = vpop.permute.xlu0 %1502
  %1505 = vst.msk [vmem:[%s670] sm:$0x3] %vm313, %v1503
  %s1506 = scalar_lea.vmem %s0, 12
  %v1507 = vld [vmem:[%s1506] sm:$0x3]
  %s1508 = scalar_lea.vmem %s1, 12
  %v1509 = vld [vmem:[%s1508] sm:$0x3]
  %s1510 = scalar_lea.vmem %s2, 12
  %v1511 = vld [vmem:[%s1510] sm:$0x3]
  %v1513 = vsel %vm82, %v1384, 0
  %1515 = vmatpush.msra.mxu0 0.0
  %1516 = vmatpush.msra.mxu0 0.0
  %1517 = vmatpush.msra.mxu0 0.0
  %1518 = vmatpush.msra.mxu0 0.0
  %1519 = vmatpush.msra.mxu0 0.0
  %1520 = vmatpush.msra.mxu0 0.0
  %1521 = vmatpush.msra.mxu0 0.0
  %1522 = vmatpush.msra.mxu0 0.0
  %1523 = vmatpush.msra.mxu0 0.0
  %1524 = vmatpush.msra.mxu0 0.0
  %1525 = vmatpush.msra.mxu0 0.0
  %1526 = vmatpush.msra.mxu0 0.0
  %1527 = vmatpush.msra.mxu0 %v50
  %1528 = vmatpush.msra.mxu0 %v49
  %1529 = vmatpush.msra.mxu0 %v48
  %1530 = vmatpush.msra.mxu0 %v47
  %1531 = vmatmul.f32.gmra.mxu0 %v1513
  %v1532 = vpop.f32.mrf.mxu0
  %v1533 = vadd.f32 0.0, %v1532
  %1534 = vdwg.mxu0
  %v1535 = vadd.f32 %v1507, %v1533
  %v1536 = vxor.u32 %v1535, 2147483648
  %v1537 = vmul.f32 %v1536, 1.442695
  %v1538 = vpow.pop %v1537
  %v1539 = vadd.f32 %v1538, 1.0
  %v1540 = vrcp.pop %v1539
  %v1541 = vmul.f32 %v1539, %v1540
  %v1542 = vsub.f32 1.0, %v1541
  %v1543 = vmul.f32 %v1540, %v1542
  %v1544 = vadd.f32 %v1540, %v1543
  %vm1545 = vweird.f32 %v1539
  %vm1546 = vweird.f32 %v1540
  %vm1547 = vmor %vm1545, %vm1546
  %v1548 = vsel %vm1547, %v1540, %v1544
  %v1549 = vand.u32 2147483647, %v1539
  %vm1550 = vcmp.eq.f32.partialorder %v1549, 8.507059e+37
  %v1551 = vand.u32 %v1539, 2147483648
  %v1552 = vor.u32 1.1754944e-38, %v1551
  %v1553 = vsel %vm1550, %v1552, %v1548
  %v1554 = vmul.f32 1.0, %v1553
  %1555 = vmatpush.msra.mxu0 0.0
  %1556 = vmatpush.msra.mxu0 0.0
  %1557 = vmatpush.msra.mxu0 0.0
  %1558 = vmatpush.msra.mxu0 0.0
  %1559 = vmatpush.msra.mxu0 0.0
  %1560 = vmatpush.msra.mxu0 0.0
  %1561 = vmatpush.msra.mxu0 0.0
  %1562 = vmatpush.msra.mxu0 0.0
  %1563 = vmatpush.msra.mxu0 0.0
  %1564 = vmatpush.msra.mxu0 0.0
  %1565 = vmatpush.msra.mxu0 0.0
  %1566 = vmatpush.msra.mxu0 0.0
  %1567 = vmatpush.msra.mxu0 %v54
  %1568 = vmatpush.msra.mxu0 %v53
  %1569 = vmatpush.msra.mxu0 %v52
  %1570 = vmatpush.msra.mxu0 %v51
  %1571 = vmatmul.f32.gmra.mxu0 %v1513
  %v1572 = vpop.f32.mrf.mxu0
  %v1573 = vadd.f32 0.0, %v1572
  %1574 = vdwg.mxu0
  %v1575 = vadd.f32 %v1509, %v1573
  %v1576 = vxor.u32 %v1575, 2147483648
  %v1577 = vmul.f32 %v1576, 1.442695
  %v1578 = vpow.pop %v1577
  %v1579 = vadd.f32 %v1578, 1.0
  %v1580 = vrcp.pop %v1579
  %v1581 = vmul.f32 %v1579, %v1580
  %v1582 = vsub.f32 1.0, %v1581
  %v1583 = vmul.f32 %v1580, %v1582
  %v1584 = vadd.f32 %v1580, %v1583
  %vm1585 = vweird.f32 %v1579
  %vm1586 = vweird.f32 %v1580
  %vm1587 = vmor %vm1585, %vm1586
  %v1588 = vsel %vm1587, %v1580, %v1584
  %v1589 = vand.u32 2147483647, %v1579
  %vm1590 = vcmp.eq.f32.partialorder %v1589, 8.507059e+37
  %v1591 = vand.u32 %v1579, 2147483648
  %v1592 = vor.u32 1.1754944e-38, %v1591
  %v1593 = vsel %vm1590, %v1592, %v1588
  %v1594 = vmul.f32 1.0, %v1593
  %1595 = vmatpush.msra.mxu0 0.0
  %1596 = vmatpush.msra.mxu0 0.0
  %1597 = vmatpush.msra.mxu0 0.0
  %1598 = vmatpush.msra.mxu0 0.0
  %1599 = vmatpush.msra.mxu0 0.0
  %1600 = vmatpush.msra.mxu0 0.0
  %1601 = vmatpush.msra.mxu0 0.0
  %1602 = vmatpush.msra.mxu0 0.0
  %1603 = vmatpush.msra.mxu0 0.0
  %1604 = vmatpush.msra.mxu0 0.0
  %1605 = vmatpush.msra.mxu0 0.0
  %1606 = vmatpush.msra.mxu0 0.0
  %1607 = vmatpush.msra.mxu0 %v58
  %1608 = vmatpush.msra.mxu0 %v57
  %1609 = vmatpush.msra.mxu0 %v56
  %1610 = vmatpush.msra.mxu0 %v55
  %1611 = vmatmul.f32.gmra.mxu0 %v1513
  %v1612 = vpop.f32.mrf.mxu0
  %v1613 = vadd.f32 %v73, %v1612
  %1614 = vdwg.mxu0
  %v1615 = vmul.f32 %v1554, %v1613
  %v1616 = vadd.f32 %v1511, %v1615
  %v1617 = vtanh.pop %v1616
  %v1618 = vsub.f32 1.0, %v1594
  %v1619 = vmul.f32 %v1618, %v1617
  %v1620 = vmul.f32 %v1594, %v1384
  %v1621 = vadd.f32 %v1619, %v1620
  %1622 = vst.msk [vmem:[%s552] sm:$0x3] %vm193, %v1621
  %s1623 = scalar_lea.vmem %s3, 2
  %v1624 = vld [vmem:[%s1623] sm:$0x3]
  %s1625 = scalar_lea.vmem %s4, 2
  %v1626 = vld [vmem:[%s1625] sm:$0x3]
  %s1627 = scalar_lea.vmem %s5, 2
  %v1628 = vld [vmem:[%s1627] sm:$0x3]
  %v1629 = vsel %vm82, %v1500, 0
  %1631 = vmatpush.msra.mxu0 0.0
  %1632 = vmatpush.msra.mxu0 0.0
  %1633 = vmatpush.msra.mxu0 0.0
  %1634 = vmatpush.msra.mxu0 0.0
  %1635 = vmatpush.msra.mxu0 0.0
  %1636 = vmatpush.msra.mxu0 0.0
  %1637 = vmatpush.msra.mxu0 0.0
  %1638 = vmatpush.msra.mxu0 0.0
  %1639 = vmatpush.msra.mxu0 0.0
  %1640 = vmatpush.msra.mxu0 0.0
  %1641 = vmatpush.msra.mxu0 0.0
  %1642 = vmatpush.msra.mxu0 0.0
  %1643 = vmatpush.msra.mxu0 %v62
  %1644 = vmatpush.msra.mxu0 %v61
  %1645 = vmatpush.msra.mxu0 %v60
  %1646 = vmatpush.msra.mxu0 %v59
  %1647 = vmatmul.f32.gmra.mxu0 %v1629
  %v1648 = vpop.f32.mrf.mxu0
  %v1649 = vadd.f32 0.0, %v1648
  %1650 = vdwg.mxu0
  %v1651 = vadd.f32 %v1624, %v1649
  %v1652 = vxor.u32 %v1651, 2147483648
  %v1653 = vmul.f32 %v1652, 1.442695
  %v1654 = vpow.pop %v1653
  %v1655 = vadd.f32 %v1654, 1.0
  %v1656 = vrcp.pop %v1655
  %v1657 = vmul.f32 %v1655, %v1656
  %v1658 = vsub.f32 1.0, %v1657
  %v1659 = vmul.f32 %v1656, %v1658
  %v1660 = vadd.f32 %v1656, %v1659
  %vm1661 = vweird.f32 %v1655
  %vm1662 = vweird.f32 %v1656
  %vm1663 = vmor %vm1661, %vm1662
  %v1664 = vsel %vm1663, %v1656, %v1660
  %v1665 = vand.u32 2147483647, %v1655
  %vm1666 = vcmp.eq.f32.partialorder %v1665, 8.507059e+37
  %v1667 = vand.u32 %v1655, 2147483648
  %v1668 = vor.u32 1.1754944e-38, %v1667
  %v1669 = vsel %vm1666, %v1668, %v1664
  %v1670 = vmul.f32 1.0, %v1669
  %1671 = vmatpush.msra.mxu0 0.0
  %1672 = vmatpush.msra.mxu0 0.0
  %1673 = vmatpush.msra.mxu0 0.0
  %1674 = vmatpush.msra.mxu0 0.0
  %1675 = vmatpush.msra.mxu0 0.0
  %1676 = vmatpush.msra.mxu0 0.0
  %1677 = vmatpush.msra.mxu0 0.0
  %1678 = vmatpush.msra.mxu0 0.0
  %1679 = vmatpush.msra.mxu0 0.0
  %1680 = vmatpush.msra.mxu0 0.0
  %1681 = vmatpush.msra.mxu0 0.0
  %1682 = vmatpush.msra.mxu0 0.0
  %1683 = vmatpush.msra.mxu0 %v66
  %1684 = vmatpush.msra.mxu0 %v65
  %1685 = vmatpush.msra.mxu0 %v64
  %1686 = vmatpush.msra.mxu0 %v63
  %1687 = vmatmul.f32.gmra.mxu0 %v1629
  %v1688 = vpop.f32.mrf.mxu0
  %v1689 = vadd.f32 0.0, %v1688
  %1690 = vdwg.mxu0
  %v1691 = vadd.f32 %v1626, %v1689
  %v1692 = vxor.u32 %v1691, 2147483648
  %v1693 = vmul.f32 %v1692, 1.442695
  %v1694 = vpow.pop %v1693
  %v1695 = vadd.f32 %v1694, 1.0
  %v1696 = vrcp.pop %v1695
  %v1697 = vmul.f32 %v1695, %v1696
  %v1698 = vsub.f32 1.0, %v1697
  %v1699 = vmul.f32 %v1696, %v1698
  %v1700 = vadd.f32 %v1696, %v1699
  %vm1701 = vweird.f32 %v1695
  %vm1702 = vweird.f32 %v1696
  %vm1703 = vmor %vm1701, %vm1702
  %v1704 = vsel %vm1703, %v1696, %v1700
  %v1705 = vand.u32 2147483647, %v1695
  %vm1706 = vcmp.eq.f32.partialorder %v1705, 8.507059e+37
  %v1707 = vand.u32 %v1695, 2147483648
  %v1708 = vor.u32 1.1754944e-38, %v1707
  %v1709 = vsel %vm1706, %v1708, %v1704
  %v1710 = vmul.f32 1.0, %v1709
  %1711 = vmatpush.msra.mxu0 0.0
  %1712 = vmatpush.msra.mxu0 0.0
  %1713 = vmatpush.msra.mxu0 0.0
  %1714 = vmatpush.msra.mxu0 0.0
  %1715 = vmatpush.msra.mxu0 0.0
  %1716 = vmatpush.msra.mxu0 0.0
  %1717 = vmatpush.msra.mxu0 0.0
  %1718 = vmatpush.msra.mxu0 0.0
  %1719 = vmatpush.msra.mxu0 0.0
  %1720 = vmatpush.msra.mxu0 0.0
  %1721 = vmatpush.msra.mxu0 0.0
  %1722 = vmatpush.msra.mxu0 0.0
  %1723 = vmatpush.msra.mxu0 %v70
  %1724 = vmatpush.msra.mxu0 %v69
  %1725 = vmatpush.msra.mxu0 %v68
  %1726 = vmatpush.msra.mxu0 %v67
  %1727 = vmatmul.f32.gmra.mxu0 %v1629
  %v1728 = vpop.f32.mrf.mxu0
  %v1729 = vadd.f32 %v77, %v1728
  %1730 = vdwg.mxu0
  %v1731 = vmul.f32 %v1670, %v1729
  %v1732 = vadd.f32 %v1628, %v1731
  %v1733 = vtanh.pop %v1732
  %v1734 = vsub.f32 1.0, %v1710
  %v1735 = vmul.f32 %v1734, %v1733
  %v1736 = vmul.f32 %v1710, %v1500
  %v1737 = vadd.f32 %v1735, %v1736
  %1739 = vrot.lane.b32.xlu0 %v1737, 32
  %v1740 = vpop.permute.xlu0 %1739
  %1742 = vst.msk [vmem:[%s431] sm:$0x3] %vm313, %v1740
  %s1743 = scalar_lea.vmem %s0, 14
  %v1744 = vld [vmem:[%s1743] sm:$0x3]
  %s1745 = scalar_lea.vmem %s1, 14
  %v1746 = vld [vmem:[%s1745] sm:$0x3]
  %s1747 = scalar_lea.vmem %s2, 14
  %v1748 = vld [vmem:[%s1747] sm:$0x3]
  %v1750 = vsel %vm82, %v1621, 0
  %1752 = vmatpush.msra.mxu0 0.0
  %1753 = vmatpush.msra.mxu0 0.0
  %1754 = vmatpush.msra.mxu0 0.0
  %1755 = vmatpush.msra.mxu0 0.0
  %1756 = vmatpush.msra.mxu0 0.0
  %1757 = vmatpush.msra.mxu0 0.0
  %1758 = vmatpush.msra.mxu0 0.0
  %1759 = vmatpush.msra.mxu0 0.0
  %1760 = vmatpush.msra.mxu0 0.0
  %1761 = vmatpush.msra.mxu0 0.0
  %1762 = vmatpush.msra.mxu0 0.0
  %1763 = vmatpush.msra.mxu0 0.0
  %1764 = vmatpush.msra.mxu0 %v50
  %1765 = vmatpush.msra.mxu0 %v49
  %1766 = vmatpush.msra.mxu0 %v48
  %1767 = vmatpush.msra.mxu0 %v47
  %1768 = vmatmul.f32.gmra.mxu0 %v1750
  %v1769 = vpop.f32.mrf.mxu0
  %v1770 = vadd.f32 0.0, %v1769
  %1771 = vdwg.mxu0
  %v1772 = vadd.f32 %v1744, %v1770
  %v1773 = vxor.u32 %v1772, 2147483648
  %v1774 = vmul.f32 %v1773, 1.442695
  %v1775 = vpow.pop %v1774
  %v1776 = vadd.f32 %v1775, 1.0
  %v1777 = vrcp.pop %v1776
  %v1778 = vmul.f32 %v1776, %v1777
  %v1779 = vsub.f32 1.0, %v1778
  %v1780 = vmul.f32 %v1777, %v1779
  %v1781 = vadd.f32 %v1777, %v1780
  %vm1782 = vweird.f32 %v1776
  %vm1783 = vweird.f32 %v1777
  %vm1784 = vmor %vm1782, %vm1783
  %v1785 = vsel %vm1784, %v1777, %v1781
  %v1786 = vand.u32 2147483647, %v1776
  %vm1787 = vcmp.eq.f32.partialorder %v1786, 8.507059e+37
  %v1788 = vand.u32 %v1776, 2147483648
  %v1789 = vor.u32 1.1754944e-38, %v1788
  %v1790 = vsel %vm1787, %v1789, %v1785
  %v1791 = vmul.f32 1.0, %v1790
  %1792 = vmatpush.msra.mxu0 0.0
  %1793 = vmatpush.msra.mxu0 0.0
  %1794 = vmatpush.msra.mxu0 0.0
  %1795 = vmatpush.msra.mxu0 0.0
  %1796 = vmatpush.msra.mxu0 0.0
  %1797 = vmatpush.msra.mxu0 0.0
  %1798 = vmatpush.msra.mxu0 0.0
  %1799 = vmatpush.msra.mxu0 0.0
  %1800 = vmatpush.msra.mxu0 0.0
  %1801 = vmatpush.msra.mxu0 0.0
  %1802 = vmatpush.msra.mxu0 0.0
  %1803 = vmatpush.msra.mxu0 0.0
  %1804 = vmatpush.msra.mxu0 %v54
  %1805 = vmatpush.msra.mxu0 %v53
  %1806 = vmatpush.msra.mxu0 %v52
  %1807 = vmatpush.msra.mxu0 %v51
  %1808 = vmatmul.f32.gmra.mxu0 %v1750
  %v1809 = vpop.f32.mrf.mxu0
  %v1810 = vadd.f32 0.0, %v1809
  %1811 = vdwg.mxu0
  %v1812 = vadd.f32 %v1746, %v1810
  %v1813 = vxor.u32 %v1812, 2147483648
  %v1814 = vmul.f32 %v1813, 1.442695
  %v1815 = vpow.pop %v1814
  %v1816 = vadd.f32 %v1815, 1.0
  %v1817 = vrcp.pop %v1816
  %v1818 = vmul.f32 %v1816, %v1817
  %v1819 = vsub.f32 1.0, %v1818
  %v1820 = vmul.f32 %v1817, %v1819
  %v1821 = vadd.f32 %v1817, %v1820
  %vm1822 = vweird.f32 %v1816
  %vm1823 = vweird.f32 %v1817
  %vm1824 = vmor %vm1822, %vm1823
  %v1825 = vsel %vm1824, %v1817, %v1821
  %v1826 = vand.u32 2147483647, %v1816
  %vm1827 = vcmp.eq.f32.partialorder %v1826, 8.507059e+37
  %v1828 = vand.u32 %v1816, 2147483648
  %v1829 = vor.u32 1.1754944e-38, %v1828
  %v1830 = vsel %vm1827, %v1829, %v1825
  %v1831 = vmul.f32 1.0, %v1830
  %1832 = vmatpush.msra.mxu0 0.0
  %1833 = vmatpush.msra.mxu0 0.0
  %1834 = vmatpush.msra.mxu0 0.0
  %1835 = vmatpush.msra.mxu0 0.0
  %1836 = vmatpush.msra.mxu0 0.0
  %1837 = vmatpush.msra.mxu0 0.0
  %1838 = vmatpush.msra.mxu0 0.0
  %1839 = vmatpush.msra.mxu0 0.0
  %1840 = vmatpush.msra.mxu0 0.0
  %1841 = vmatpush.msra.mxu0 0.0
  %1842 = vmatpush.msra.mxu0 0.0
  %1843 = vmatpush.msra.mxu0 0.0
  %1844 = vmatpush.msra.mxu0 %v58
  %1845 = vmatpush.msra.mxu0 %v57
  %1846 = vmatpush.msra.mxu0 %v56
  %1847 = vmatpush.msra.mxu0 %v55
  %1848 = vmatmul.f32.gmra.mxu0 %v1750
  %v1849 = vpop.f32.mrf.mxu0
  %v1850 = vadd.f32 %v73, %v1849
  %1851 = vdwg.mxu0
  %v1852 = vmul.f32 %v1791, %v1850
  %v1853 = vadd.f32 %v1748, %v1852
  %v1854 = vtanh.pop %v1853
  %v1855 = vsub.f32 1.0, %v1831
  %v1856 = vmul.f32 %v1855, %v1854
  %v1857 = vmul.f32 %v1831, %v1621
  %v1858 = vadd.f32 %v1856, %v1857
  %1859 = vst.msk [vmem:[%s312] sm:$0x3] %vm193, %v1858
  %v1860 = vld [vmem:[%s3] sm:$0x3]
  %v1861 = vld [vmem:[%s4] sm:$0x3]
  %v1862 = vld [vmem:[%s5] sm:$0x3]
  %v1863 = vsel %vm82, %v1737, 0
  %1865 = vmatpush.msra.mxu0 0.0
  %1866 = vmatpush.msra.mxu0 0.0
  %1867 = vmatpush.msra.mxu0 0.0
  %1868 = vmatpush.msra.mxu0 0.0
  %1869 = vmatpush.msra.mxu0 0.0
  %1870 = vmatpush.msra.mxu0 0.0
  %1871 = vmatpush.msra.mxu0 0.0
  %1872 = vmatpush.msra.mxu0 0.0
  %1873 = vmatpush.msra.mxu0 0.0
  %1874 = vmatpush.msra.mxu0 0.0
  %1875 = vmatpush.msra.mxu0 0.0
  %1876 = vmatpush.msra.mxu0 0.0
  %1877 = vmatpush.msra.mxu0 %v62
  %1878 = vmatpush.msra.mxu0 %v61
  %1879 = vmatpush.msra.mxu0 %v60
  %1880 = vmatpush.msra.mxu0 %v59
  %1881 = vmatmul.f32.gmra.mxu0 %v1863
  %v1882 = vpop.f32.mrf.mxu0
  %v1883 = vadd.f32 0.0, %v1882
  %1884 = vdwg.mxu0
  %v1885 = vadd.f32 %v1860, %v1883
  %v1886 = vxor.u32 %v1885, 2147483648
  %v1887 = vmul.f32 %v1886, 1.442695
  %v1888 = vpow.pop %v1887
  %v1889 = vadd.f32 %v1888, 1.0
  %v1890 = vrcp.pop %v1889
  %v1891 = vmul.f32 %v1889, %v1890
  %v1892 = vsub.f32 1.0, %v1891
  %v1893 = vmul.f32 %v1890, %v1892
  %v1894 = vadd.f32 %v1890, %v1893
  %vm1895 = vweird.f32 %v1889
  %vm1896 = vweird.f32 %v1890
  %vm1897 = vmor %vm1895, %vm1896
  %v1898 = vsel %vm1897, %v1890, %v1894
  %v1899 = vand.u32 2147483647, %v1889
  %vm1900 = vcmp.eq.f32.partialorder %v1899, 8.507059e+37
  %v1901 = vand.u32 %v1889, 2147483648
  %v1902 = vor.u32 1.1754944e-38, %v1901
  %v1903 = vsel %vm1900, %v1902, %v1898
  %v1904 = vmul.f32 1.0, %v1903
  %1905 = vmatpush.msra.mxu0 0.0
  %1906 = vmatpush.msra.mxu0 0.0
  %1907 = vmatpush.msra.mxu0 0.0
  %1908 = vmatpush.msra.mxu0 0.0
  %1909 = vmatpush.msra.mxu0 0.0
  %1910 = vmatpush.msra.mxu0 0.0
  %1911 = vmatpush.msra.mxu0 0.0
  %1912 = vmatpush.msra.mxu0 0.0
  %1913 = vmatpush.msra.mxu0 0.0
  %1914 = vmatpush.msra.mxu0 0.0
  %1915 = vmatpush.msra.mxu0 0.0
  %1916 = vmatpush.msra.mxu0 0.0
  %1917 = vmatpush.msra.mxu0 %v66
  %1918 = vmatpush.msra.mxu0 %v65
  %1919 = vmatpush.msra.mxu0 %v64
  %1920 = vmatpush.msra.mxu0 %v63
  %1921 = vmatmul.f32.gmra.mxu0 %v1863
  %v1922 = vpop.f32.mrf.mxu0
  %v1923 = vadd.f32 0.0, %v1922
  %1924 = vdwg.mxu0
  %v1925 = vadd.f32 %v1861, %v1923
  %v1926 = vxor.u32 %v1925, 2147483648
  %v1927 = vmul.f32 %v1926, 1.442695
  %v1928 = vpow.pop %v1927
  %v1929 = vadd.f32 %v1928, 1.0
  %v1930 = vrcp.pop %v1929
  %v1931 = vmul.f32 %v1929, %v1930
  %v1932 = vsub.f32 1.0, %v1931
  %v1933 = vmul.f32 %v1930, %v1932
  %v1934 = vadd.f32 %v1930, %v1933
  %vm1935 = vweird.f32 %v1929
  %vm1936 = vweird.f32 %v1930
  %vm1937 = vmor %vm1935, %vm1936
  %v1938 = vsel %vm1937, %v1930, %v1934
  %v1939 = vand.u32 2147483647, %v1929
  %vm1940 = vcmp.eq.f32.partialorder %v1939, 8.507059e+37
  %v1941 = vand.u32 %v1929, 2147483648
  %v1942 = vor.u32 1.1754944e-38, %v1941
  %v1943 = vsel %vm1940, %v1942, %v1938
  %v1944 = vmul.f32 1.0, %v1943
  %1945 = vmatpush.msra.mxu0 0.0
  %1946 = vmatpush.msra.mxu0 0.0
  %1947 = vmatpush.msra.mxu0 0.0
  %1948 = vmatpush.msra.mxu0 0.0
  %1949 = vmatpush.msra.mxu0 0.0
  %1950 = vmatpush.msra.mxu0 0.0
  %1951 = vmatpush.msra.mxu0 0.0
  %1952 = vmatpush.msra.mxu0 0.0
  %1953 = vmatpush.msra.mxu0 0.0
  %1954 = vmatpush.msra.mxu0 0.0
  %1955 = vmatpush.msra.mxu0 0.0
  %1956 = vmatpush.msra.mxu0 0.0
  %1957 = vmatpush.msra.mxu0 %v70
  %1958 = vmatpush.msra.mxu0 %v69
  %1959 = vmatpush.msra.mxu0 %v68
  %1960 = vmatpush.msra.mxu0 %v67
  %1961 = vmatmul.f32.gmra.mxu0 %v1863
  %v1962 = vpop.f32.mrf.mxu0
  %v1963 = vadd.f32 %v77, %v1962
  %1964 = vdwg.mxu0
  %v1965 = vmul.f32 %v1904, %v1963
  %v1966 = vadd.f32 %v1862, %v1965
  %v1967 = vtanh.pop %v1966
  %v1968 = vsub.f32 1.0, %v1944
  %v1969 = vmul.f32 %v1968, %v1967
  %v1970 = vmul.f32 %v1944, %v1737
  %v1971 = vadd.f32 %v1969, %v1970
  %1973 = vrot.lane.b32.xlu0 %v1971, 32
  %v1974 = vpop.permute.xlu0 %1973
  %1976 = vst.msk [vmem:[%s14] sm:$0x3] %vm313, %v1974
  // Predicated region
  $region58: #{bigru_forward.1} parent=0 // pred_check
    _
  $region59: #{bigru_forward.1} parent=0 // pred_check_branch
    %1978 = sbr.rel (0) target = $region61
  $region60: #{bigru_forward.1} parent=0 // pred_region
    _
  $region61: #{bigru_forward.1} parent=0 // pred_fallthru
    _
  // Predicated region
  $region62: #{bigru_forward.1} parent=0 // pred_check
    _
  $region63: #{bigru_forward.1} parent=0 // pred_check_branch
    %1980 = sbr.rel (0) target = $region65
  $region64: #{bigru_forward.1} parent=0 // pred_region
    _
  $region65: #{bigru_forward.1} parent=0 // pred_fallthru
    _

</llo_original>
